<compile_context>
chip_gen: v6e
topology: v6e:2x2x1
jax: 0.10.0
libtpu: 0.0.40
codegen_flags: <defaults>
</compile_context>

<pallas_src>
import jax
import jax.numpy as jnp
import numpy as np
from jax.experimental import pallas as pl
from jax.experimental.pallas import tpu as pltpu


def _log_sigmoid(x):
    # numerically stable log(sigmoid(x)) = min(x, 0) - log1p(exp(-|x|))
    return jnp.minimum(x, 0.0) - jnp.log1p(jnp.exp(-jnp.abs(x)))


def _round_up(x, m):
    return (x + m - 1) // m * m


def _choose_tile(batch, block_b):
    """Batch-tile size: multiple of 128 (lane axis), >=2 grid steps if possible."""
    b128 = _round_up(batch, 128)
    tb = min(_round_up(max(block_b, 128), 128), b128)
    # prefer at least 2 grid steps when the batch allows it (v7x has 2 TCs)
    if b128 >= 2 * 128 and tb > b128 // 2:
        tb = _round_up(b128 // 2, 128)
    return tb


def _vmem_limit_bytes(v_pad, e, tb, c, k):
    """Generous scoped-VMEM budget derived from the actual buffer sizes."""
    lane = lambda n: _round_up(n, 128)
    sub = lambda n: _round_up(n, 8)
    tables = (2 * sub(v_pad) * lane(e) + sub(e) * lane(v_pad)) * 4   # resident, single copy
    idx_blocks = 2 * (sub(1) + sub(c) + sub(k)) * lane(tb) * 4       # double-buffered int32 tiles
    out_blocks = 2 * sub(1) * lane(tb) * 4
    temps = (8 * sub(v_pad) + 4 * sub(e) + 4 * sub(k + 1)) * lane(tb) * 4
    need = tables + idx_blocks + out_blocks + temps
    return int(min(100 * 2 ** 20, max(16 * 2 ** 20, 2 * need)))


def _make_kernel(TB, C, K, V_pad, E):
    """Per-tile kernel: TB batch rows on the lane axis, vocab on sublanes."""
    inv_c = float(1.0 / C)

    def kernel(tgt_ref, ctx_ref, neg_ref,      # (1,1,TB) / (1,C,TB) / (1,K,TB) int32
               wt_ref, wc_ref, wct_ref,        # (V_pad,E), (V_pad,E), (E,V_pad) f32 (resident)
               loss_ref):                      # (1,1,TB) f32
        f32 = jnp.float32
        hi = jax.lax.Precision.HIGHEST

        # vocab-id iota on the sublane axis; batch rows live on the lane axis
        iota_v = jax.lax.broadcasted_iota(jnp.int32, (V_pad, TB), 0)

        tgt_row = tgt_ref[0]                   # (1, TB)
        ctx_ids = ctx_ref[0]                   # (C, TB)
        neg_ids = neg_ref[0]                   # (K, TB)

        # Multi-hot context "probabilities" (count / C): C lane-dense VPU
        # compare+adds.  Folding 1/C here means the mean falls out of the matmul.
        ctx_probs = (iota_v == ctx_ids[0:1, :]).astype(f32)
        for c in range(1, C):                  # static, small
            ctx_probs = ctx_probs + (iota_v == ctx_ids[c:c + 1, :]).astype(f32)
        ctx_probs = ctx_probs * inv_c          # (V_pad, TB)

        # --- MXU phase -------------------------------------------------------
        # mean context embedding for every batch row (transposed layout)
        ctx_mean = jnp.dot(wct_ref[...], ctx_probs,
                           preferred_element_type=f32, precision=hi)     # (E, TB)
        # score of every vocab row against each row's context mean
        scores_tgt = jnp.dot(wt_ref[...], ctx_mean,
                             preferred_element_type=f32, precision=hi)   # (V_pad, TB)
        scores_ctx = jnp.dot(wc_ref[...], ctx_mean,
                             preferred_element_type=f32, precision=hi)   # (V_pad, TB)

        # --- score extraction: one-hot select + sublane reduce ----------------
        pos = jnp.sum(scores_tgt * (iota_v == tgt_row).astype(f32),
                      axis=0, keepdims=True)                              # (1, TB)
        rows = [pos]
        for k in range(K):                     # static, small
            nk = jnp.sum(scores_ctx * (iota_v == neg_ids[k:k + 1, :]).astype(f32),
                         axis=0, keepdims=True)
            rows.append(-nk)
        z = jnp.concatenate(rows, axis=0)                                 # (K+1, TB)

        # loss_b = -logsig(pos_b) - sum_k logsig(-neg_{b,k}); one fused EUP pass,
        # written as a lane-dense (1, TB) block (unmasked stores).
        loss_ref[0] = -jnp.sum(_log_sigmoid(z), axis=0, keepdims=True)

    return kernel


def cbow_neg_loss(target, context, neg_samples, w_target, w_context, *,
                  block_b=512):
    """Pallas forward pass of CBOW_NEG.forward.  Returns the scalar mean loss."""
    f32 = jnp.float32
    V, E = w_target.shape
    B = int(target.shape[0])
    C = int(context.shape[1])
    K = int(neg_samples.shape[1])

    TB = _choose_tile(B, block_b)
    B_pad = _round_up(B, TB)
    n_tiles = B_pad // TB
    pad_b = B_pad - B
    V_pad = _round_up(V, 128)                  # MXU-aligned vocab (zero rows)

    # index tensors: batch on the last (lane) axis, tiled on the grid axis.
    # Padded rows carry id 0 (always a valid table row); their losses are
    # sliced off below, so this is only wasted work, never a wrong read.
    tgt_t = jnp.pad(target.astype(jnp.int32), (0, pad_b)).reshape(n_tiles, 1, TB)

    def _tile_ids(x2d):                        # (B, D) -> (n_tiles, D, TB)
        d = x2d.shape[1]
        xp = jnp.pad(x2d.astype(jnp.int32), ((0, pad_b), (0, 0)))
        return xp.reshape(n_tiles, TB, d).transpose(0, 2, 1)

    ctx_t = _tile_ids(context)                 # (n_tiles, C, TB)
    neg_t = _tile_ids(neg_samples)             # (n_tiles, K, TB)

    # embedding tables: zero-padded to V_pad rows; w_context also pre-transposed
    # once on the host side so every in-kernel matmul is a standard MXU shape.
    wt_p = jnp.pad(w_target.astype(f32), ((0, V_pad - V), (0, 0)))   # (V_pad, E)
    wc_p = jnp.pad(w_context.astype(f32), ((0, V_pad - V), (0, 0)))  # (V_pad, E)
    wct_p = wc_p.T                                                   # (E, V_pad)

    kernel = _make_kernel(TB, C, K, V_pad, E)

    cost = pl.CostEstimate(
        flops=int(2 * B_pad * V_pad * E * 3 + (C + K + 4) * B_pad * V_pad),
        transcendentals=int(2 * B_pad * (K + 1)),
        bytes_accessed=int(4 * (3 * V_pad * E + B_pad * (1 + C + K) + B_pad)),
    )

    loss_tiles = pl.pallas_call(
        kernel,
        out_shape=jax.ShapeDtypeStruct((n_tiles, 1, TB), f32),
        grid=(n_tiles,),
        in_specs=[
            pl.BlockSpec((1, 1, TB), lambda i: (i, 0, 0)),     # target ids
            pl.BlockSpec((1, C, TB), lambda i: (i, 0, 0)),     # context ids
            pl.BlockSpec((1, K, TB), lambda i: (i, 0, 0)),     # negative ids
            pl.BlockSpec(memory_space=pltpu.MemorySpace.VMEM),  # w_target   (resident)
            pl.BlockSpec(memory_space=pltpu.MemorySpace.VMEM),  # w_context  (resident)
            pl.BlockSpec(memory_space=pltpu.MemorySpace.VMEM),  # w_context^T(resident)
        ],
        out_specs=pl.BlockSpec((1, 1, TB), lambda i: (i, 0, 0)),
        compiler_params=pltpu.CompilerParams(
            dimension_semantics=("parallel",),
            vmem_limit_bytes=_vmem_limit_bytes(V_pad, E, TB, C, K),
        ),
        cost_estimate=cost,
    )(tgt_t, ctx_t, neg_t, wt_p, wc_p, wct_p)

    # mean over the real (unpadded) batch rows
    row_losses = loss_tiles.reshape(B_pad)[:B]
    return jnp.sum(row_losses) / B


def cbow_neg_loss_ref(target, context, neg_samples, w_target, w_context):
    """Pure-JAX reference matching the PyTorch forward exactly."""
    tgt = w_target[target]                               # (B, E)
    ctx = jnp.mean(w_context[context], axis=1)           # (B, E)
    neg = w_context[neg_samples]                         # (B, K, E)
    pos = jnp.sum(tgt * ctx, axis=1)                     # (B,)
    pos_loss = -jax.nn.log_sigmoid(pos)
    neg_s = jnp.einsum('bke,be->bk', neg, ctx, precision='highest')
    neg_loss = -jnp.sum(jax.nn.log_sigmoid(-neg_s), axis=1)
    return jnp.mean(pos_loss + neg_loss)


if __name__ == "__main__":
    # Small, deterministic synthetic problem.
    vocab_size, embedding_size = 64, 32
    ctx_window, n_neg = 4, 5

    key = jax.random.PRNGKey(0)
    k_wt, k_wc, k_data = jax.random.split(key, 3)

    # __init__weights: target table ~ U(-initrange, initrange).
    initrange = (2.0 / (vocab_size + embedding_size)) ** 0.5
    w_target = jax.random.uniform(
        k_wt, (vocab_size, embedding_size), jnp.float32, -initrange, initrange)
    # NOTE: the PyTorch module initializes the context table to zeros
    # (uniform_(-0, 0)); small random values exercise the compute path
    # non-trivially (forward semantics are identical either way).
    w_context = jax.random.uniform(
        k_wc, (vocab_size, embedding_size), jnp.float32, -initrange, initrange)

    def make_batch(k, batch):
        k_t, k_c, k_n = jax.random.split(k, 3)
        t = jax.random.randint(k_t, (batch,), 0, vocab_size, dtype=jnp.int32)
        c = jax.random.randint(k_c, (batch, ctx_window), 0, vocab_size, dtype=jnp.int32)
        n = jax.random.randint(k_n, (batch, n_neg), 0, vocab_size, dtype=jnp.int32)
        return t, c, n

    # Tolerance note: kernel scores come from f32 MXU matmuls (different
    # accumulation order than the gather/elementwise reference path).
    TOL = dict(rtol=1e-3, atol=1e-3)

    # 1) small batch -> single 128-lane tile, exercises batch padding
    t1, c1, n1 = make_batch(jax.random.fold_in(k_data, 1), 10)
    ref1 = jax.block_until_ready(cbow_neg_loss_ref(t1, c1, n1, w_target, w_context))
    out1 = jax.block_until_ready(cbow_neg_loss(t1, c1, n1, w_target, w_context))
    np.testing.assert_allclose(np.asarray(out1), np.asarray(ref1), **TOL)

    # 2) larger batch -> grid of 2 tiles (megacore-friendly split)
    t2, c2, n2 = make_batch(jax.random.fold_in(k_data, 2), 300)
    ref2 = jax.block_until_ready(cbow_neg_loss_ref(t2, c2, n2, w_target, w_context))
    out2 = jax.block_until_ready(cbow_neg_loss(t2, c2, n2, w_target, w_context))
    np.testing.assert_allclose(np.asarray(out2), np.asarray(ref2), **TOL)

    # 3) same batch with a smaller tile cap -> grid of 3 tiles
    out3 = jax.block_until_ready(
        cbow_neg_loss(t2, c2, n2, w_target, w_context, block_b=128))
    np.testing.assert_allclose(np.asarray(out3), np.asarray(ref2), **TOL)

    print("KERNEL_OK")
</pallas_src>

<mosaic_0001>
module attributes {stable_mosaic.version = 11 : i64} {
  func.func @kernel(%arg0: i32, %arg1: memref<1x1x128xi32, #tpu.memory_space<vmem>>, %arg2: memref<1x4x128xi32, #tpu.memory_space<vmem>>, %arg3: memref<1x5x128xi32, #tpu.memory_space<vmem>>, %arg4: memref<128x32xf32, #tpu.memory_space<vmem>>, %arg5: memref<128x32xf32, #tpu.memory_space<vmem>>, %arg6: memref<32x128xf32, #tpu.memory_space<vmem>>, %arg7: memref<1x1x128xf32, #tpu.memory_space<vmem>>) attributes {dimension_semantics = [#tpu.dimension_semantics<parallel>], iteration_bounds = array<i64: 1>, scalar_prefetch = 0 : i64, scratch_operands = 0 : i64, tpu.core_type = #tpu.core_type<tc>, window_params = [{transform_indices = @transform_0, window_bounds = array<i64: 1, 1, 128>}, {transform_indices = @transform_1, window_bounds = array<i64: 1, 4, 128>}, {transform_indices = @transform_2, window_bounds = array<i64: 1, 5, 128>}, {pipeline_mode = #tpu.pipeline_mode<synchronous>, transform_indices = @transform_3, window_bounds = array<i64: 128, 32>}, {pipeline_mode = #tpu.pipeline_mode<synchronous>, transform_indices = @transform_4, window_bounds = array<i64: 128, 32>}, {pipeline_mode = #tpu.pipeline_mode<synchronous>, transform_indices = @transform_5, window_bounds = array<i64: 32, 128>}, {transform_indices = @transform_6, window_bounds = array<i64: 1, 1, 128>}]} {
    %0 = tpu.iota {dimensions = array<i32: 0>} : vector<128x128xi32>
    %c0 = arith.constant 0 : index
    %c0_0 = arith.constant 0 : index
    %c0_1 = arith.constant 0 : index
    %1 = vector.load %arg1[%c0, %c0_0, %c0_1] : memref<1x1x128xi32, #tpu.memory_space<vmem>>, vector<1x1x128xi32>
    %2 = vector.shape_cast %1 : vector<1x1x128xi32> to vector<1x128xi32>
    %c0_2 = arith.constant 0 : index
    %c0_3 = arith.constant 0 : index
    %c0_4 = arith.constant 0 : index
    %3 = vector.load %arg2[%c0_2, %c0_3, %c0_4] : memref<1x4x128xi32, #tpu.memory_space<vmem>>, vector<1x4x128xi32>
    %4 = vector.shape_cast %3 : vector<1x4x128xi32> to vector<4x128xi32>
    %c0_5 = arith.constant 0 : index
    %c0_6 = arith.constant 0 : index
    %c0_7 = arith.constant 0 : index
    %5 = vector.load %arg3[%c0_5, %c0_6, %c0_7] : memref<1x5x128xi32, #tpu.memory_space<vmem>>, vector<1x5x128xi32>
    %6 = vector.shape_cast %5 : vector<1x5x128xi32> to vector<5x128xi32>
    %7 = vector.extract_strided_slice %4 {offsets = [0, 0], sizes = [1, 128], strides = [1, 1]} : vector<4x128xi32> to vector<1x128xi32>
    %8 = vector.broadcast %7 : vector<1x128xi32> to vector<128x128xi32>
    %9 = arith.cmpi eq, %0, %8 : vector<128x128xi32>
    %10 = arith.extui %9 : vector<128x128xi1> to vector<128x128xi32>
    %11 = arith.sitofp %10 : vector<128x128xi32> to vector<128x128xf32>
    %12 = vector.extract_strided_slice %4 {offsets = [1, 0], sizes = [1, 128], strides = [1, 1]} : vector<4x128xi32> to vector<1x128xi32>
    %13 = vector.broadcast %12 : vector<1x128xi32> to vector<128x128xi32>
    %14 = arith.cmpi eq, %0, %13 : vector<128x128xi32>
    %15 = arith.extui %14 : vector<128x128xi1> to vector<128x128xi32>
    %16 = arith.sitofp %15 : vector<128x128xi32> to vector<128x128xf32>
    %17 = arith.addf %11, %16 : vector<128x128xf32>
    %18 = vector.extract_strided_slice %4 {offsets = [2, 0], sizes = [1, 128], strides = [1, 1]} : vector<4x128xi32> to vector<1x128xi32>
    %19 = vector.broadcast %18 : vector<1x128xi32> to vector<128x128xi32>
    %20 = arith.cmpi eq, %0, %19 : vector<128x128xi32>
    %21 = arith.extui %20 : vector<128x128xi1> to vector<128x128xi32>
    %22 = arith.sitofp %21 : vector<128x128xi32> to vector<128x128xf32>
    %23 = arith.addf %17, %22 : vector<128x128xf32>
    %24 = vector.extract_strided_slice %4 {offsets = [3, 0], sizes = [1, 128], strides = [1, 1]} : vector<4x128xi32> to vector<1x128xi32>
    %25 = vector.broadcast %24 : vector<1x128xi32> to vector<128x128xi32>
    %26 = arith.cmpi eq, %0, %25 : vector<128x128xi32>
    %27 = arith.extui %26 : vector<128x128xi1> to vector<128x128xi32>
    %28 = arith.sitofp %27 : vector<128x128xi32> to vector<128x128xf32>
    %29 = arith.addf %23, %28 : vector<128x128xf32>
    %cst = arith.constant 2.500000e-01 : f32
    %30 = vector.broadcast %cst : f32 to vector<128x128xf32>
    %31 = arith.mulf %29, %30 : vector<128x128xf32>
    %c0_8 = arith.constant 0 : index
    %c0_9 = arith.constant 0 : index
    %32 = vector.load %arg6[%c0_8, %c0_9] : memref<32x128xf32, #tpu.memory_space<vmem>>, vector<32x128xf32>
    %cst_10 = arith.constant dense<0.000000e+00> : vector<32x128xf32>
    %33 = tpu.matmul %32, %31, %cst_10 {dimension_numbers = #tpu.dot_dimension_numbers<[1], [0], [0], [1], [0, 0, 1, 1], [], []>, precision = #tpu.contract_precision<fp32>} : vector<32x128xf32>, vector<128x128xf32>, vector<32x128xf32> -> vector<32x128xf32>
    %c0_11 = arith.constant 0 : index
    %c0_12 = arith.constant 0 : index
    %34 = vector.load %arg4[%c0_11, %c0_12] : memref<128x32xf32, #tpu.memory_space<vmem>>, vector<128x32xf32>
    %cst_13 = arith.constant dense<0.000000e+00> : vector<128x128xf32>
    %35 = tpu.matmul %34, %33, %cst_13 {dimension_numbers = #tpu.dot_dimension_numbers<[1], [0], [0], [1], [0, 0, 1, 1], [], []>, precision = #tpu.contract_precision<fp32>} : vector<128x32xf32>, vector<32x128xf32>, vector<128x128xf32> -> vector<128x128xf32>
    %c0_14 = arith.constant 0 : index
    %c0_15 = arith.constant 0 : index
    %36 = vector.load %arg5[%c0_14, %c0_15] : memref<128x32xf32, #tpu.memory_space<vmem>>, vector<128x32xf32>
    %cst_16 = arith.constant dense<0.000000e+00> : vector<128x128xf32>
    %37 = tpu.matmul %36, %33, %cst_16 {dimension_numbers = #tpu.dot_dimension_numbers<[1], [0], [0], [1], [0, 0, 1, 1], [], []>, precision = #tpu.contract_precision<fp32>} : vector<128x32xf32>, vector<32x128xf32>, vector<128x128xf32> -> vector<128x128xf32>
    %38 = vector.broadcast %2 : vector<1x128xi32> to vector<128x128xi32>
    %39 = arith.cmpi eq, %0, %38 : vector<128x128xi32>
    %40 = arith.extui %39 : vector<128x128xi1> to vector<128x128xi32>
    %41 = arith.sitofp %40 : vector<128x128xi32> to vector<128x128xf32>
    %42 = arith.mulf %35, %41 : vector<128x128xf32>
    %cst_17 = arith.constant dense<0.000000e+00> : vector<128xf32>
    %43 = vector.multi_reduction <add>, %42, %cst_17 [0] : vector<128x128xf32> to vector<128xf32>
    %44 = vector.shape_cast %43 : vector<128xf32> to vector<1x128xf32>
    %45 = vector.extract_strided_slice %6 {offsets = [0, 0], sizes = [1, 128], strides = [1, 1]} : vector<5x128xi32> to vector<1x128xi32>
    %46 = vector.broadcast %45 : vector<1x128xi32> to vector<128x128xi32>
    %47 = arith.cmpi eq, %0, %46 : vector<128x128xi32>
    %48 = arith.extui %47 : vector<128x128xi1> to vector<128x128xi32>
    %49 = arith.sitofp %48 : vector<128x128xi32> to vector<128x128xf32>
    %50 = arith.mulf %37, %49 : vector<128x128xf32>
    %cst_18 = arith.constant dense<0.000000e+00> : vector<128xf32>
    %51 = vector.multi_reduction <add>, %50, %cst_18 [0] : vector<128x128xf32> to vector<128xf32>
    %52 = vector.shape_cast %51 : vector<128xf32> to vector<1x128xf32>
    %cst_19 = arith.constant 0.000000e+00 : f32
    %53 = vector.broadcast %cst_19 : f32 to vector<1x128xf32>
    %54 = arith.subf %53, %52 : vector<1x128xf32>
    %55 = vector.extract_strided_slice %6 {offsets = [1, 0], sizes = [1, 128], strides = [1, 1]} : vector<5x128xi32> to vector<1x128xi32>
    %56 = vector.broadcast %55 : vector<1x128xi32> to vector<128x128xi32>
    %57 = arith.cmpi eq, %0, %56 : vector<128x128xi32>
    %58 = arith.extui %57 : vector<128x128xi1> to vector<128x128xi32>
    %59 = arith.sitofp %58 : vector<128x128xi32> to vector<128x128xf32>
    %60 = arith.mulf %37, %59 : vector<128x128xf32>
    %cst_20 = arith.constant dense<0.000000e+00> : vector<128xf32>
    %61 = vector.multi_reduction <add>, %60, %cst_20 [0] : vector<128x128xf32> to vector<128xf32>
    %62 = vector.shape_cast %61 : vector<128xf32> to vector<1x128xf32>
    %cst_21 = arith.constant 0.000000e+00 : f32
    %63 = vector.broadcast %cst_21 : f32 to vector<1x128xf32>
    %64 = arith.subf %63, %62 : vector<1x128xf32>
    %65 = vector.extract_strided_slice %6 {offsets = [2, 0], sizes = [1, 128], strides = [1, 1]} : vector<5x128xi32> to vector<1x128xi32>
    %66 = vector.broadcast %65 : vector<1x128xi32> to vector<128x128xi32>
    %67 = arith.cmpi eq, %0, %66 : vector<128x128xi32>
    %68 = arith.extui %67 : vector<128x128xi1> to vector<128x128xi32>
    %69 = arith.sitofp %68 : vector<128x128xi32> to vector<128x128xf32>
    %70 = arith.mulf %37, %69 : vector<128x128xf32>
    %cst_22 = arith.constant dense<0.000000e+00> : vector<128xf32>
    %71 = vector.multi_reduction <add>, %70, %cst_22 [0] : vector<128x128xf32> to vector<128xf32>
    %72 = vector.shape_cast %71 : vector<128xf32> to vector<1x128xf32>
    %cst_23 = arith.constant 0.000000e+00 : f32
    %73 = vector.broadcast %cst_23 : f32 to vector<1x128xf32>
    %74 = arith.subf %73, %72 : vector<1x128xf32>
    %75 = vector.extract_strided_slice %6 {offsets = [3, 0], sizes = [1, 128], strides = [1, 1]} : vector<5x128xi32> to vector<1x128xi32>
    %76 = vector.broadcast %75 : vector<1x128xi32> to vector<128x128xi32>
    %77 = arith.cmpi eq, %0, %76 : vector<128x128xi32>
    %78 = arith.extui %77 : vector<128x128xi1> to vector<128x128xi32>
    %79 = arith.sitofp %78 : vector<128x128xi32> to vector<128x128xf32>
    %80 = arith.mulf %37, %79 : vector<128x128xf32>
    %cst_24 = arith.constant dense<0.000000e+00> : vector<128xf32>
    %81 = vector.multi_reduction <add>, %80, %cst_24 [0] : vector<128x128xf32> to vector<128xf32>
    %82 = vector.shape_cast %81 : vector<128xf32> to vector<1x128xf32>
    %cst_25 = arith.constant 0.000000e+00 : f32
    %83 = vector.broadcast %cst_25 : f32 to vector<1x128xf32>
    %84 = arith.subf %83, %82 : vector<1x128xf32>
    %85 = vector.extract_strided_slice %6 {offsets = [4, 0], sizes = [1, 128], strides = [1, 1]} : vector<5x128xi32> to vector<1x128xi32>
    %86 = vector.broadcast %85 : vector<1x128xi32> to vector<128x128xi32>
    %87 = arith.cmpi eq, %0, %86 : vector<128x128xi32>
    %88 = arith.extui %87 : vector<128x128xi1> to vector<128x128xi32>
    %89 = arith.sitofp %88 : vector<128x128xi32> to vector<128x128xf32>
    %90 = arith.mulf %37, %89 : vector<128x128xf32>
    %cst_26 = arith.constant dense<0.000000e+00> : vector<128xf32>
    %91 = vector.multi_reduction <add>, %90, %cst_26 [0] : vector<128x128xf32> to vector<128xf32>
    %92 = vector.shape_cast %91 : vector<128xf32> to vector<1x128xf32>
    %cst_27 = arith.constant 0.000000e+00 : f32
    %93 = vector.broadcast %cst_27 : f32 to vector<1x128xf32>
    %94 = arith.subf %93, %92 : vector<1x128xf32>
    %95 = tpu.concatenate %44, %54, %64, %74, %84, %94 in 0 : vector<1x128xf32>, vector<1x128xf32>, vector<1x128xf32>, vector<1x128xf32>, vector<1x128xf32>, vector<1x128xf32> -> vector<6x128xf32>
    %cst_28 = arith.constant 0.000000e+00 : f32
    %96 = vector.broadcast %cst_28 : f32 to vector<6x128xf32>
    %97 = arith.minimumf %95, %96 : vector<6x128xf32>
    %98 = math.absf %95 : vector<6x128xf32>
    %cst_29 = arith.constant 0.000000e+00 : f32
    %99 = vector.broadcast %cst_29 : f32 to vector<6x128xf32>
    %100 = arith.subf %99, %98 : vector<6x128xf32>
    %101 = math.exp %100 : vector<6x128xf32>
    %102 = math.log1p %101 : vector<6x128xf32>
    %103 = arith.subf %97, %102 : vector<6x128xf32>
    %cst_30 = arith.constant dense<0.000000e+00> : vector<128xf32>
    %104 = vector.multi_reduction <add>, %103, %cst_30 [0] : vector<6x128xf32> to vector<128xf32>
    %105 = vector.shape_cast %104 : vector<128xf32> to vector<1x128xf32>
    %cst_31 = arith.constant 0.000000e+00 : f32
    %106 = vector.broadcast %cst_31 : f32 to vector<1x128xf32>
    %107 = arith.subf %106, %105 : vector<1x128xf32>
    %c0_32 = arith.constant 0 : index
    %c0_33 = arith.constant 0 : index
    %c0_34 = arith.constant 0 : index
    %108 = vector.load %arg7[%c0_32, %c0_33, %c0_34] : memref<1x1x128xf32, #tpu.memory_space<vmem>>, vector<1x1x128xf32>
    %109 = vector.shape_cast %108 : vector<1x1x128xf32> to vector<1x128xf32>
    %110 = vector.shape_cast %107 : vector<1x128xf32> to vector<1x1x128xf32>
    tpu.vector_store %arg7[%c0_32, %c0_33, %c0_34], %110 {strides = array<i32>} : memref<1x1x128xf32, #tpu.memory_space<vmem>>, vector<1x1x128xf32>,
    return
  }
  func.func @transform_0(%arg0: i32) -> (i32, i32, i32) {
    %c0_i32 = arith.constant 0 : i32
    %c0_i32_0 = arith.constant 0 : i32
    %c0_i32_1 = arith.constant 0 : i32
    return %arg0, %c0_i32, %c0_i32_0 : i32, i32, i32
  }
  func.func @transform_1(%arg0: i32) -> (i32, i32, i32) {
    %c0_i32 = arith.constant 0 : i32
    %c0_i32_0 = arith.constant 0 : i32
    %c0_i32_1 = arith.constant 0 : i32
    return %arg0, %c0_i32, %c0_i32_0 : i32, i32, i32
  }
  func.func @transform_2(%arg0: i32) -> (i32, i32, i32) {
    %c0_i32 = arith.constant 0 : i32
    %c0_i32_0 = arith.constant 0 : i32
    %c0_i32_1 = arith.constant 0 : i32
    return %arg0, %c0_i32, %c0_i32_0 : i32, i32, i32
  }
  func.func @transform_3(%arg0: i32) -> (i32, i32) {
    %c0_i32 = arith.constant 0 : i32
    %c0_i32_0 = arith.constant 0 : i32
    %c0_i32_1 = arith.constant 0 : i32
    return %c0_i32, %c0_i32_0 : i32, i32
  }
  func.func @transform_4(%arg0: i32) -> (i32, i32) {
    %c0_i32 = arith.constant 0 : i32
    %c0_i32_0 = arith.constant 0 : i32
    %c0_i32_1 = arith.constant 0 : i32
    return %c0_i32, %c0_i32_0 : i32, i32
  }
  func.func @transform_5(%arg0: i32) -> (i32, i32) {
    %c0_i32 = arith.constant 0 : i32
    %c0_i32_0 = arith.constant 0 : i32
    %c0_i32_1 = arith.constant 0 : i32
    return %c0_i32, %c0_i32_0 : i32, i32
  }
  func.func @transform_6(%arg0: i32) -> (i32, i32, i32) {
    %c0_i32 = arith.constant 0 : i32
    %c0_i32_0 = arith.constant 0 : i32
    %c0_i32_1 = arith.constant 0 : i32
    return %arg0, %c0_i32, %c0_i32_0 : i32, i32, i32
  }
}

</mosaic_0001>

<llo_original>
// kernel: tpu_custom_call.1
$region0: #{tpu_custom_call.1}
  #allocation0 [shape = 'u32[]', space=smem, size = 0x4, offset = 0x4, fixed_abs, tag = 'smem constant byte address 0x4 - core index']
  #allocation1 [shape = 'u32[144,128]{1,0:T(1,128)}', space=vmem, size = 0x12000, scoped, tag = 'internal scratch']
  %s0 = inlined_call_operand.vmem [shape: s32[1,1,128], index: 0, kind: input, shape index: {}]
  %s1 = inlined_call_operand.vmem [shape: s32[1,4,128], index: 1, kind: input, shape index: {}]
  %s2 = inlined_call_operand.vmem [shape: s32[1,5,128], index: 2, kind: input, shape index: {}]
  %s3 = inlined_call_operand.vmem [shape: f32[128,32], index: 3, kind: input, shape index: {}]
  %s4 = inlined_call_operand.vmem [shape: f32[128,32], index: 4, kind: input, shape index: {}]
  %s5 = inlined_call_operand.vmem [shape: f32[32,128], index: 5, kind: input, shape index: {}]
  %s6 = inlined_call_operand.hbm [shape: f32[1,1,128], index: 6, kind: output, shape index: {}]
  %s7 = sld [smem:[#allocation0]]
  $region34: #{tpu_custom_call.1} parent=0
    _
  %s9 = ssub.s32 1, %s7
  %s10 = scalar_select 0, %s9, %s7
  $region1: #{tpu_custom_call.1} parent=0
    #allocation2 [shape = 'u8[512]{0}', space=vmem, size = 0x400, scoped, tag = 'output window, operand 0, single buffered']
    #allocation3 [shape = 's32[1]{0}', space=sflag, size = 0x4, scoped, tag = 'scoped memory for tpu_custom_call.1']
    %11 = vsyncpa [#allocation3], 0
    // Predicated region
    $region2: #{tpu_custom_call.1} parent=1 // pred_check
      _
    $region3: #{tpu_custom_call.1} parent=1 // pred_check_branch
      %13 = sbr.rel (0) target = $region5
    $region4: #{tpu_custom_call.1} parent=1 // pred_region
      _
    $region5: #{tpu_custom_call.1} parent=1 // pred_fallthru
      _
    // Predicated region
    $region6: #{tpu_custom_call.1} parent=1 // pred_check
      _
    $region7: #{tpu_custom_call.1} parent=1 // pred_check_branch
      %15 = sbr.rel (0) target = $region9
    $region8: #{tpu_custom_call.1} parent=1 // pred_region
      _
    $region9: #{tpu_custom_call.1} parent=1 // pred_fallthru
      _
    // Predicated region
    $region10: #{tpu_custom_call.1} parent=1 // pred_check
      _
    $region11: #{tpu_custom_call.1} parent=1 // pred_check_branch
      %17 = sbr.rel (0) target = $region13
    $region12: #{tpu_custom_call.1} parent=1 // pred_region
      _
    $region13: #{tpu_custom_call.1} parent=1 // pred_fallthru
      _
    // Predicated region
    $region14: #{tpu_custom_call.1} parent=1 // pred_check
      _
    $region15: #{tpu_custom_call.1} parent=1 // pred_check_branch
      %19 = sbr.rel (0) target = $region17
    $region16: #{tpu_custom_call.1} parent=1 // pred_region
      _
    $region17: #{tpu_custom_call.1} parent=1 // pred_fallthru
      _
    // Predicated region
    $region18: #{tpu_custom_call.1} parent=1 // pred_check
      _
    $region19: #{tpu_custom_call.1} parent=1 // pred_check_branch
      %21 = sbr.rel (0) target = $region21
    $region20: #{tpu_custom_call.1} parent=1 // pred_region
      _
    $region21: #{tpu_custom_call.1} parent=1 // pred_fallthru
      _
    // Predicated region
    $region22: #{tpu_custom_call.1} parent=1 // pred_check
      _
    $region23: #{tpu_custom_call.1} parent=1 // pred_check_branch
      %23 = sbr.rel (0) target = $region25
    $region24: #{tpu_custom_call.1} parent=1 // pred_region
      _
    $region25: #{tpu_custom_call.1} parent=1 // pred_fallthru
      _
    %v24 = vlaneseq
    %v25 = vshrl.u32 %v24, 7
    %v26 = vadd.s32 %v25, 8
    %v27 = vadd.s32 %v25, 16
    %v28 = vadd.s32 %v25, 24
    %v29 = vadd.s32 %v25, 32
    %v30 = vadd.s32 %v25, 40
    %v31 = vadd.s32 %v25, 48
    %v32 = vadd.s32 %v25, 56
    %v33 = vadd.s32 %v25, 64
    %v34 = vadd.s32 %v25, 72
    %v35 = vadd.s32 %v25, 80
    %v36 = vadd.s32 %v25, 88
    %v37 = vadd.s32 %v25, 96
    %v38 = vadd.s32 %v25, 104
    %v39 = vadd.s32 %v25, 112
    %v40 = vadd.s32 %v25, 120
    %v41 = vld [vmem:[%s0] sm:$0x1]
    %v42 = vld [vmem:[%s1] sm:$0xf]
    %v43 = vld [vmem:[%s2] sm:$0x1f]
    %v44 = vlaneseq
    %v45 = vshrl.u32 %v44, 7
    %v46 = vsub.s32 0, %v45
    %v47 = vrot.slane %v42, %v46
    %vm48 = vcmp.eq.s32.totalorder %v25, %v47
    %vm49 = vcmp.eq.s32.totalorder %v26, %v47
    %vm50 = vcmp.eq.s32.totalorder %v27, %v47
    %vm51 = vcmp.eq.s32.totalorder %v28, %v47
    %vm52 = vcmp.eq.s32.totalorder %v29, %v47
    %vm53 = vcmp.eq.s32.totalorder %v30, %v47
    %vm54 = vcmp.eq.s32.totalorder %v31, %v47
    %vm55 = vcmp.eq.s32.totalorder %v32, %v47
    %vm56 = vcmp.eq.s32.totalorder %v33, %v47
    %vm57 = vcmp.eq.s32.totalorder %v34, %v47
    %vm58 = vcmp.eq.s32.totalorder %v35, %v47
    %vm59 = vcmp.eq.s32.totalorder %v36, %v47
    %vm60 = vcmp.eq.s32.totalorder %v37, %v47
    %vm61 = vcmp.eq.s32.totalorder %v38, %v47
    %vm62 = vcmp.eq.s32.totalorder %v39, %v47
    %vm63 = vcmp.eq.s32.totalorder %v40, %v47
    %v64 = vsel %vm48, 1, 0
    %v65 = vsel %vm49, 1, 0
    %v66 = vsel %vm50, 1, 0
    %v67 = vsel %vm51, 1, 0
    %v68 = vsel %vm52, 1, 0
    %v69 = vsel %vm53, 1, 0
    %v70 = vsel %vm54, 1, 0
    %v71 = vsel %vm55, 1, 0
    %v72 = vsel %vm56, 1, 0
    %v73 = vsel %vm57, 1, 0
    %v74 = vsel %vm58, 1, 0
    %v75 = vsel %vm59, 1, 0
    %v76 = vsel %vm60, 1, 0
    %v77 = vsel %vm61, 1, 0
    %v78 = vsel %vm62, 1, 0
    %v79 = vsel %vm63, 1, 0
    %v80 = vcvt.s32.f32 %v64
    %v81 = vcvt.s32.f32 %v65
    %v82 = vcvt.s32.f32 %v66
    %v83 = vcvt.s32.f32 %v67
    %v84 = vcvt.s32.f32 %v68
    %v85 = vcvt.s32.f32 %v69
    %v86 = vcvt.s32.f32 %v70
    %v87 = vcvt.s32.f32 %v71
    %v88 = vcvt.s32.f32 %v72
    %v89 = vcvt.s32.f32 %v73
    %v90 = vcvt.s32.f32 %v74
    %v91 = vcvt.s32.f32 %v75
    %v92 = vcvt.s32.f32 %v76
    %v93 = vcvt.s32.f32 %v77
    %v94 = vcvt.s32.f32 %v78
    %v95 = vcvt.s32.f32 %v79
    %v96 = vlaneseq
    %v97 = vshrl.u32 %v96, 7
    %v98 = vsub.s32 1, %v97
    %v99 = vrot.slane %v42, %v98
    %vm100 = vcmp.eq.s32.totalorder %v25, %v99
    %vm101 = vcmp.eq.s32.totalorder %v26, %v99
    %vm102 = vcmp.eq.s32.totalorder %v27, %v99
    %vm103 = vcmp.eq.s32.totalorder %v28, %v99
    %vm104 = vcmp.eq.s32.totalorder %v29, %v99
    %vm105 = vcmp.eq.s32.totalorder %v30, %v99
    %vm106 = vcmp.eq.s32.totalorder %v31, %v99
    %vm107 = vcmp.eq.s32.totalorder %v32, %v99
    %vm108 = vcmp.eq.s32.totalorder %v33, %v99
    %vm109 = vcmp.eq.s32.totalorder %v34, %v99
    %vm110 = vcmp.eq.s32.totalorder %v35, %v99
    %vm111 = vcmp.eq.s32.totalorder %v36, %v99
    %vm112 = vcmp.eq.s32.totalorder %v37, %v99
    %vm113 = vcmp.eq.s32.totalorder %v38, %v99
    %vm114 = vcmp.eq.s32.totalorder %v39, %v99
    %vm115 = vcmp.eq.s32.totalorder %v40, %v99
    %v116 = vsel %vm100, 1, 0
    %v117 = vsel %vm101, 1, 0
    %v118 = vsel %vm102, 1, 0
    %v119 = vsel %vm103, 1, 0
    %v120 = vsel %vm104, 1, 0
    %v121 = vsel %vm105, 1, 0
    %v122 = vsel %vm106, 1, 0
    %v123 = vsel %vm107, 1, 0
    %v124 = vsel %vm108, 1, 0
    %v125 = vsel %vm109, 1, 0
    %v126 = vsel %vm110, 1, 0
    %v127 = vsel %vm111, 1, 0
    %v128 = vsel %vm112, 1, 0
    %v129 = vsel %vm113, 1, 0
    %v130 = vsel %vm114, 1, 0
    %v131 = vsel %vm115, 1, 0
    %v132 = vcvt.s32.f32 %v116
    %v133 = vcvt.s32.f32 %v117
    %v134 = vcvt.s32.f32 %v118
    %v135 = vcvt.s32.f32 %v119
    %v136 = vcvt.s32.f32 %v120
    %v137 = vcvt.s32.f32 %v121
    %v138 = vcvt.s32.f32 %v122
    %v139 = vcvt.s32.f32 %v123
    %v140 = vcvt.s32.f32 %v124
    %v141 = vcvt.s32.f32 %v125
    %v142 = vcvt.s32.f32 %v126
    %v143 = vcvt.s32.f32 %v127
    %v144 = vcvt.s32.f32 %v128
    %v145 = vcvt.s32.f32 %v129
    %v146 = vcvt.s32.f32 %v130
    %v147 = vcvt.s32.f32 %v131
    %v148 = vadd.f32 %v80, %v132
    %v149 = vadd.f32 %v81, %v133
    %v150 = vadd.f32 %v82, %v134
    %v151 = vadd.f32 %v83, %v135
    %v152 = vadd.f32 %v84, %v136
    %v153 = vadd.f32 %v85, %v137
    %v154 = vadd.f32 %v86, %v138
    %v155 = vadd.f32 %v87, %v139
    %v156 = vadd.f32 %v88, %v140
    %v157 = vadd.f32 %v89, %v141
    %v158 = vadd.f32 %v90, %v142
    %v159 = vadd.f32 %v91, %v143
    %v160 = vadd.f32 %v92, %v144
    %v161 = vadd.f32 %v93, %v145
    %v162 = vadd.f32 %v94, %v146
    %v163 = vadd.f32 %v95, %v147
    %v164 = vlaneseq
    %v165 = vshrl.u32 %v164, 7
    %v166 = vsub.s32 2, %v165
    %v167 = vrot.slane %v42, %v166
    %vm168 = vcmp.eq.s32.totalorder %v25, %v167
    %vm169 = vcmp.eq.s32.totalorder %v26, %v167
    %vm170 = vcmp.eq.s32.totalorder %v27, %v167
    %vm171 = vcmp.eq.s32.totalorder %v28, %v167
    %vm172 = vcmp.eq.s32.totalorder %v29, %v167
    %vm173 = vcmp.eq.s32.totalorder %v30, %v167
    %vm174 = vcmp.eq.s32.totalorder %v31, %v167
    %vm175 = vcmp.eq.s32.totalorder %v32, %v167
    %vm176 = vcmp.eq.s32.totalorder %v33, %v167
    %vm177 = vcmp.eq.s32.totalorder %v34, %v167
    %vm178 = vcmp.eq.s32.totalorder %v35, %v167
    %vm179 = vcmp.eq.s32.totalorder %v36, %v167
    %vm180 = vcmp.eq.s32.totalorder %v37, %v167
    %vm181 = vcmp.eq.s32.totalorder %v38, %v167
    %vm182 = vcmp.eq.s32.totalorder %v39, %v167
    %vm183 = vcmp.eq.s32.totalorder %v40, %v167
    %v184 = vsel %vm168, 1, 0
    %v185 = vsel %vm169, 1, 0
    %v186 = vsel %vm170, 1, 0
    %v187 = vsel %vm171, 1, 0
    %v188 = vsel %vm172, 1, 0
    %v189 = vsel %vm173, 1, 0
    %v190 = vsel %vm174, 1, 0
    %v191 = vsel %vm175, 1, 0
    %v192 = vsel %vm176, 1, 0
    %v193 = vsel %vm177, 1, 0
    %v194 = vsel %vm178, 1, 0
    %v195 = vsel %vm179, 1, 0
    %v196 = vsel %vm180, 1, 0
    %v197 = vsel %vm181, 1, 0
    %v198 = vsel %vm182, 1, 0
    %v199 = vsel %vm183, 1, 0
    %v200 = vcvt.s32.f32 %v184
    %v201 = vcvt.s32.f32 %v185
    %v202 = vcvt.s32.f32 %v186
    %v203 = vcvt.s32.f32 %v187
    %v204 = vcvt.s32.f32 %v188
    %v205 = vcvt.s32.f32 %v189
    %v206 = vcvt.s32.f32 %v190
    %v207 = vcvt.s32.f32 %v191
    %v208 = vcvt.s32.f32 %v192
    %v209 = vcvt.s32.f32 %v193
    %v210 = vcvt.s32.f32 %v194
    %v211 = vcvt.s32.f32 %v195
    %v212 = vcvt.s32.f32 %v196
    %v213 = vcvt.s32.f32 %v197
    %v214 = vcvt.s32.f32 %v198
    %v215 = vcvt.s32.f32 %v199
    %v216 = vadd.f32 %v148, %v200
    %v217 = vadd.f32 %v149, %v201
    %v218 = vadd.f32 %v150, %v202
    %v219 = vadd.f32 %v151, %v203
    %v220 = vadd.f32 %v152, %v204
    %v221 = vadd.f32 %v153, %v205
    %v222 = vadd.f32 %v154, %v206
    %v223 = vadd.f32 %v155, %v207
    %v224 = vadd.f32 %v156, %v208
    %v225 = vadd.f32 %v157, %v209
    %v226 = vadd.f32 %v158, %v210
    %v227 = vadd.f32 %v159, %v211
    %v228 = vadd.f32 %v160, %v212
    %v229 = vadd.f32 %v161, %v213
    %v230 = vadd.f32 %v162, %v214
    %v231 = vadd.f32 %v163, %v215
    %v232 = vlaneseq
    %v233 = vshrl.u32 %v232, 7
    %v234 = vsub.s32 3, %v233
    %v235 = vrot.slane %v42, %v234
    %vm236 = vcmp.eq.s32.totalorder %v25, %v235
    %vm237 = vcmp.eq.s32.totalorder %v26, %v235
    %vm238 = vcmp.eq.s32.totalorder %v27, %v235
    %vm239 = vcmp.eq.s32.totalorder %v28, %v235
    %vm240 = vcmp.eq.s32.totalorder %v29, %v235
    %vm241 = vcmp.eq.s32.totalorder %v30, %v235
    %vm242 = vcmp.eq.s32.totalorder %v31, %v235
    %vm243 = vcmp.eq.s32.totalorder %v32, %v235
    %vm244 = vcmp.eq.s32.totalorder %v33, %v235
    %vm245 = vcmp.eq.s32.totalorder %v34, %v235
    %vm246 = vcmp.eq.s32.totalorder %v35, %v235
    %vm247 = vcmp.eq.s32.totalorder %v36, %v235
    %vm248 = vcmp.eq.s32.totalorder %v37, %v235
    %vm249 = vcmp.eq.s32.totalorder %v38, %v235
    %vm250 = vcmp.eq.s32.totalorder %v39, %v235
    %vm251 = vcmp.eq.s32.totalorder %v40, %v235
    %v252 = vsel %vm236, 1, 0
    %v253 = vsel %vm237, 1, 0
    %v254 = vsel %vm238, 1, 0
    %v255 = vsel %vm239, 1, 0
    %v256 = vsel %vm240, 1, 0
    %v257 = vsel %vm241, 1, 0
    %v258 = vsel %vm242, 1, 0
    %v259 = vsel %vm243, 1, 0
    %v260 = vsel %vm244, 1, 0
    %v261 = vsel %vm245, 1, 0
    %v262 = vsel %vm246, 1, 0
    %v263 = vsel %vm247, 1, 0
    %v264 = vsel %vm248, 1, 0
    %v265 = vsel %vm249, 1, 0
    %v266 = vsel %vm250, 1, 0
    %v267 = vsel %vm251, 1, 0
    %v268 = vcvt.s32.f32 %v252
    %v269 = vcvt.s32.f32 %v253
    %v270 = vcvt.s32.f32 %v254
    %v271 = vcvt.s32.f32 %v255
    %v272 = vcvt.s32.f32 %v256
    %v273 = vcvt.s32.f32 %v257
    %v274 = vcvt.s32.f32 %v258
    %v275 = vcvt.s32.f32 %v259
    %v276 = vcvt.s32.f32 %v260
    %v277 = vcvt.s32.f32 %v261
    %v278 = vcvt.s32.f32 %v262
    %v279 = vcvt.s32.f32 %v263
    %v280 = vcvt.s32.f32 %v264
    %v281 = vcvt.s32.f32 %v265
    %v282 = vcvt.s32.f32 %v266
    %v283 = vcvt.s32.f32 %v267
    %v284 = vadd.f32 %v216, %v268
    %v285 = vadd.f32 %v217, %v269
    %v286 = vadd.f32 %v218, %v270
    %v287 = vadd.f32 %v219, %v271
    %v288 = vadd.f32 %v220, %v272
    %v289 = vadd.f32 %v221, %v273
    %v290 = vadd.f32 %v222, %v274
    %v291 = vadd.f32 %v223, %v275
    %v292 = vadd.f32 %v224, %v276
    %v293 = vadd.f32 %v225, %v277
    %v294 = vadd.f32 %v226, %v278
    %v295 = vadd.f32 %v227, %v279
    %v296 = vadd.f32 %v228, %v280
    %v297 = vadd.f32 %v229, %v281
    %v298 = vadd.f32 %v230, %v282
    %v299 = vadd.f32 %v231, %v283
    %v300 = vmul.f32 %v284, 0.25
    %v301 = vmul.f32 %v285, 0.25
    %v302 = vmul.f32 %v286, 0.25
    %v303 = vmul.f32 %v287, 0.25
    %v304 = vmul.f32 %v288, 0.25
    %v305 = vmul.f32 %v289, 0.25
    %v306 = vmul.f32 %v290, 0.25
    %v307 = vmul.f32 %v291, 0.25
    %v308 = vmul.f32 %v292, 0.25
    %v309 = vmul.f32 %v293, 0.25
    %v310 = vmul.f32 %v294, 0.25
    %v311 = vmul.f32 %v295, 0.25
    %v312 = vmul.f32 %v296, 0.25
    %v313 = vmul.f32 %v297, 0.25
    %v314 = vmul.f32 %v298, 0.25
    %v315 = vmul.f32 %v299, 0.25
    %v316 = vld [vmem:[%s5] sm:$0xff]
    %v317 = vld [vmem:[%s5 + $0x8] sm:$0xff]
    %v318 = vld [vmem:[%s5 + $0x10] sm:$0xff]
    %v319 = vld [vmem:[%s5 + $0x18] sm:$0xff]
    %320 = vmatprep.subr.mxu0 0.0
    %v321 = vand.u32 %v315, 4294901760
    %322 = vmatpush1.msra.mxu0 %v321
    %323 = vmatprep.subr.mxu0 0.0
    %v324 = vand.u32 %v314, 4294901760
    %325 = vmatpush1.msra.mxu0 %v324
    %326 = vmatprep.subr.mxu0 0.0
    %v327 = vand.u32 %v313, 4294901760
    %328 = vmatpush1.msra.mxu0 %v327
    %329 = vmatprep.subr.mxu0 0.0
    %v330 = vand.u32 %v312, 4294901760
    %331 = vmatpush1.msra.mxu0 %v330
    %332 = vmatprep.subr.mxu0 0.0
    %v333 = vand.u32 %v311, 4294901760
    %334 = vmatpush1.msra.mxu0 %v333
    %335 = vmatprep.subr.mxu0 0.0
    %v336 = vand.u32 %v310, 4294901760
    %337 = vmatpush1.msra.mxu0 %v336
    %338 = vmatprep.subr.mxu0 0.0
    %v339 = vand.u32 %v309, 4294901760
    %340 = vmatpush1.msra.mxu0 %v339
    %341 = vmatprep.subr.mxu0 0.0
    %v342 = vand.u32 %v308, 4294901760
    %343 = vmatpush1.msra.mxu0 %v342
    %344 = vmatprep.subr.mxu0 0.0
    %v345 = vand.u32 %v307, 4294901760
    %346 = vmatpush1.msra.mxu0 %v345
    %347 = vmatprep.subr.mxu0 0.0
    %v348 = vand.u32 %v306, 4294901760
    %349 = vmatpush1.msra.mxu0 %v348
    %350 = vmatprep.subr.mxu0 0.0
    %v351 = vand.u32 %v305, 4294901760
    %352 = vmatpush1.msra.mxu0 %v351
    %353 = vmatprep.subr.mxu0 0.0
    %v354 = vand.u32 %v304, 4294901760
    %355 = vmatpush1.msra.mxu0 %v354
    %356 = vmatprep.subr.mxu0 0.0
    %v357 = vand.u32 %v303, 4294901760
    %358 = vmatpush1.msra.mxu0 %v357
    %359 = vmatprep.subr.mxu0 0.0
    %v360 = vand.u32 %v302, 4294901760
    %361 = vmatpush1.msra.mxu0 %v360
    %362 = vmatprep.subr.mxu0 0.0
    %v363 = vand.u32 %v301, 4294901760
    %364 = vmatpush1.msra.mxu0 %v363
    %365 = vmatprep.subr.mxu0 0.0
    %v366 = vand.u32 %v300, 4294901760
    %367 = vmatpush1.msra.mxu0 %v366
    %368 = vmatprep.subr.mxu0 0.0
    %369 = vmatpush2.msra.mxu0 0.0
    %370 = vmatprep.subr.mxu0 0.0
    %371 = vmatpush2.msra.mxu0 0.0
    %372 = vmatprep.subr.mxu0 0.0
    %373 = vmatpush2.msra.mxu0 0.0
    %374 = vmatprep.subr.mxu0 0.0
    %375 = vmatpush2.msra.mxu0 0.0
    %376 = vmatprep.subr.mxu0 0.0
    %377 = vmatpush2.msra.mxu0 0.0
    %378 = vmatprep.subr.mxu0 0.0
    %379 = vmatpush2.msra.mxu0 0.0
    %380 = vmatprep.subr.mxu0 0.0
    %381 = vmatpush2.msra.mxu0 0.0
    %382 = vmatprep.subr.mxu0 0.0
    %383 = vmatpush2.msra.mxu0 0.0
    %384 = vmatprep.subr.mxu0 0.0
    %385 = vmatpush2.msra.mxu0 0.0
    %386 = vmatprep.subr.mxu0 0.0
    %387 = vmatpush2.msra.mxu0 0.0
    %388 = vmatprep.subr.mxu0 0.0
    %389 = vmatpush2.msra.mxu0 0.0
    %390 = vmatprep.subr.mxu0 0.0
    %391 = vmatpush2.msra.mxu0 0.0
    %392 = vmatprep.subr.mxu0 0.0
    %393 = vmatpush2.msra.mxu0 0.0
    %394 = vmatprep.subr.mxu0 0.0
    %395 = vmatpush2.msra.mxu0 0.0
    %396 = vmatprep.subr.mxu0 0.0
    %397 = vmatpush2.msra.mxu0 0.0
    %398 = vmatprep.subr.mxu0 0.0
    %399 = vmatpush2.msra.mxu0 0.0
    %400 = vmatprep.mubr.f32.mxu0 0.0
    %v401 = vand.u32 %v316, 4294901760
    %v402 = vsub.f32 %v316, %v401
    %v403 = vand.u32 %v402, 4294901760
    %v404 = vsub.f32 %v402, %v403
    %v405 = vand.u32 %v404, 4294901760
    %406 = vmatmul.mubr.f32.gmra.mxu0 %v405
    %v407 = vpop.f32.mrf.mxu0
    %v408 = vadd.f32 0.0, %v407
    %v409 = vpop.f32.mrf.mxu0
    %410 = vmatprep.mubr.f32.mxu0 0.0
    %v411 = vand.u32 %v317, 4294901760
    %v412 = vsub.f32 %v317, %v411
    %v413 = vand.u32 %v412, 4294901760
    %v414 = vsub.f32 %v412, %v413
    %v415 = vand.u32 %v414, 4294901760
    %416 = vmatmul.mubr.f32.gmra.mxu0 %v415
    %v417 = vpop.f32.mrf.mxu0
    %v418 = vadd.f32 0.0, %v417
    %v419 = vpop.f32.mrf.mxu0
    %420 = vmatprep.mubr.f32.mxu0 0.0
    %v421 = vand.u32 %v318, 4294901760
    %v422 = vsub.f32 %v318, %v421
    %v423 = vand.u32 %v422, 4294901760
    %v424 = vsub.f32 %v422, %v423
    %v425 = vand.u32 %v424, 4294901760
    %426 = vmatmul.mubr.f32.gmra.mxu0 %v425
    %v427 = vpop.f32.mrf.mxu0
    %v428 = vadd.f32 0.0, %v427
    %v429 = vpop.f32.mrf.mxu0
    %430 = vmatprep.mubr.f32.mxu0 0.0
    %v431 = vand.u32 %v319, 4294901760
    %v432 = vsub.f32 %v319, %v431
    %v433 = vand.u32 %v432, 4294901760
    %v434 = vsub.f32 %v432, %v433
    %v435 = vand.u32 %v434, 4294901760
    %436 = vmatmul.mubr.f32.gmra.mxu0 %v435
    %v437 = vpop.f32.mrf.mxu0
    %v438 = vadd.f32 0.0, %v437
    %v439 = vpop.f32.mrf.mxu0
    %440 = vdwg.mxu0
    %441 = vmatprep.subr.mxu0 0.0
    %v442 = vand.u32 %v315, 4294901760
    %v443 = vsub.f32 %v315, %v442
    %v444 = vand.u32 %v443, 4294901760
    %v445 = vsub.f32 %v443, %v444
    %v446 = vand.u32 %v445, 4294901760
    %447 = vmatpush1.msra.mxu0 %v446
    %448 = vmatprep.subr.mxu0 0.0
    %v449 = vand.u32 %v314, 4294901760
    %v450 = vsub.f32 %v314, %v449
    %v451 = vand.u32 %v450, 4294901760
    %v452 = vsub.f32 %v450, %v451
    %v453 = vand.u32 %v452, 4294901760
    %454 = vmatpush1.msra.mxu0 %v453
    %455 = vmatprep.subr.mxu0 0.0
    %v456 = vand.u32 %v313, 4294901760
    %v457 = vsub.f32 %v313, %v456
    %v458 = vand.u32 %v457, 4294901760
    %v459 = vsub.f32 %v457, %v458
    %v460 = vand.u32 %v459, 4294901760
    %461 = vmatpush1.msra.mxu0 %v460
    %462 = vmatprep.subr.mxu0 0.0
    %v463 = vand.u32 %v312, 4294901760
    %v464 = vsub.f32 %v312, %v463
    %v465 = vand.u32 %v464, 4294901760
    %v466 = vsub.f32 %v464, %v465
    %v467 = vand.u32 %v466, 4294901760
    %468 = vmatpush1.msra.mxu0 %v467
    %469 = vmatprep.subr.mxu0 0.0
    %v470 = vand.u32 %v311, 4294901760
    %v471 = vsub.f32 %v311, %v470
    %v472 = vand.u32 %v471, 4294901760
    %v473 = vsub.f32 %v471, %v472
    %v474 = vand.u32 %v473, 4294901760
    %475 = vmatpush1.msra.mxu0 %v474
    %476 = vmatprep.subr.mxu0 0.0
    %v477 = vand.u32 %v310, 4294901760
    %v478 = vsub.f32 %v310, %v477
    %v479 = vand.u32 %v478, 4294901760
    %v480 = vsub.f32 %v478, %v479
    %v481 = vand.u32 %v480, 4294901760
    %482 = vmatpush1.msra.mxu0 %v481
    %483 = vmatprep.subr.mxu0 0.0
    %v484 = vand.u32 %v309, 4294901760
    %v485 = vsub.f32 %v309, %v484
    %v486 = vand.u32 %v485, 4294901760
    %v487 = vsub.f32 %v485, %v486
    %v488 = vand.u32 %v487, 4294901760
    %489 = vmatpush1.msra.mxu0 %v488
    %490 = vmatprep.subr.mxu0 0.0
    %v491 = vand.u32 %v308, 4294901760
    %v492 = vsub.f32 %v308, %v491
    %v493 = vand.u32 %v492, 4294901760
    %v494 = vsub.f32 %v492, %v493
    %v495 = vand.u32 %v494, 4294901760
    %496 = vmatpush1.msra.mxu0 %v495
    %497 = vmatprep.subr.mxu0 0.0
    %v498 = vand.u32 %v307, 4294901760
    %v499 = vsub.f32 %v307, %v498
    %v500 = vand.u32 %v499, 4294901760
    %v501 = vsub.f32 %v499, %v500
    %v502 = vand.u32 %v501, 4294901760
    %503 = vmatpush1.msra.mxu0 %v502
    %504 = vmatprep.subr.mxu0 0.0
    %v505 = vand.u32 %v306, 4294901760
    %v506 = vsub.f32 %v306, %v505
    %v507 = vand.u32 %v506, 4294901760
    %v508 = vsub.f32 %v506, %v507
    %v509 = vand.u32 %v508, 4294901760
    %510 = vmatpush1.msra.mxu0 %v509
    %511 = vmatprep.subr.mxu0 0.0
    %v512 = vand.u32 %v305, 4294901760
    %v513 = vsub.f32 %v305, %v512
    %v514 = vand.u32 %v513, 4294901760
    %v515 = vsub.f32 %v513, %v514
    %v516 = vand.u32 %v515, 4294901760
    %517 = vmatpush1.msra.mxu0 %v516
    %518 = vmatprep.subr.mxu0 0.0
    %v519 = vand.u32 %v304, 4294901760
    %v520 = vsub.f32 %v304, %v519
    %v521 = vand.u32 %v520, 4294901760
    %v522 = vsub.f32 %v520, %v521
    %v523 = vand.u32 %v522, 4294901760
    %524 = vmatpush1.msra.mxu0 %v523
    %525 = vmatprep.subr.mxu0 0.0
    %v526 = vand.u32 %v303, 4294901760
    %v527 = vsub.f32 %v303, %v526
    %v528 = vand.u32 %v527, 4294901760
    %v529 = vsub.f32 %v527, %v528
    %v530 = vand.u32 %v529, 4294901760
    %531 = vmatpush1.msra.mxu0 %v530
    %532 = vmatprep.subr.mxu0 0.0
    %v533 = vand.u32 %v302, 4294901760
    %v534 = vsub.f32 %v302, %v533
    %v535 = vand.u32 %v534, 4294901760
    %v536 = vsub.f32 %v534, %v535
    %v537 = vand.u32 %v536, 4294901760
    %538 = vmatpush1.msra.mxu0 %v537
    %539 = vmatprep.subr.mxu0 0.0
    %v540 = vand.u32 %v301, 4294901760
    %v541 = vsub.f32 %v301, %v540
    %v542 = vand.u32 %v541, 4294901760
    %v543 = vsub.f32 %v541, %v542
    %v544 = vand.u32 %v543, 4294901760
    %545 = vmatpush1.msra.mxu0 %v544
    %546 = vmatprep.subr.mxu0 0.0
    %v547 = vand.u32 %v300, 4294901760
    %v548 = vsub.f32 %v300, %v547
    %v549 = vand.u32 %v548, 4294901760
    %v550 = vsub.f32 %v548, %v549
    %v551 = vand.u32 %v550, 4294901760
    %552 = vmatpush1.msra.mxu0 %v551
    %553 = vmatprep.subr.mxu0 0.0
    %554 = vmatpush2.msra.mxu0 0.0
    %555 = vmatprep.subr.mxu0 0.0
    %556 = vmatpush2.msra.mxu0 0.0
    %557 = vmatprep.subr.mxu0 0.0
    %558 = vmatpush2.msra.mxu0 0.0
    %559 = vmatprep.subr.mxu0 0.0
    %560 = vmatpush2.msra.mxu0 0.0
    %561 = vmatprep.subr.mxu0 0.0
    %562 = vmatpush2.msra.mxu0 0.0
    %563 = vmatprep.subr.mxu0 0.0
    %564 = vmatpush2.msra.mxu0 0.0
    %565 = vmatprep.subr.mxu0 0.0
    %566 = vmatpush2.msra.mxu0 0.0
    %567 = vmatprep.subr.mxu0 0.0
    %568 = vmatpush2.msra.mxu0 0.0
    %569 = vmatprep.subr.mxu0 0.0
    %570 = vmatpush2.msra.mxu0 0.0
    %571 = vmatprep.subr.mxu0 0.0
    %572 = vmatpush2.msra.mxu0 0.0
    %573 = vmatprep.subr.mxu0 0.0
    %574 = vmatpush2.msra.mxu0 0.0
    %575 = vmatprep.subr.mxu0 0.0
    %576 = vmatpush2.msra.mxu0 0.0
    %577 = vmatprep.subr.mxu0 0.0
    %578 = vmatpush2.msra.mxu0 0.0
    %579 = vmatprep.subr.mxu0 0.0
    %580 = vmatpush2.msra.mxu0 0.0
    %581 = vmatprep.subr.mxu0 0.0
    %582 = vmatpush2.msra.mxu0 0.0
    %583 = vmatprep.subr.mxu0 0.0
    %584 = vmatpush2.msra.mxu0 0.0
    %585 = vmatprep.mubr.f32.mxu0 0.0
    %v586 = vand.u32 %v316, 4294901760
    %587 = vmatmul.mubr.f32.gmra.mxu0 %v586
    %v588 = vpop.f32.mrf.mxu0
    %v589 = vadd.f32 %v408, %v588
    %v590 = vpop.f32.mrf.mxu0
    %591 = vmatprep.mubr.f32.mxu0 0.0
    %v592 = vand.u32 %v317, 4294901760
    %593 = vmatmul.mubr.f32.gmra.mxu0 %v592
    %v594 = vpop.f32.mrf.mxu0
    %v595 = vadd.f32 %v418, %v594
    %v596 = vpop.f32.mrf.mxu0
    %597 = vmatprep.mubr.f32.mxu0 0.0
    %v598 = vand.u32 %v318, 4294901760
    %599 = vmatmul.mubr.f32.gmra.mxu0 %v598
    %v600 = vpop.f32.mrf.mxu0
    %v601 = vadd.f32 %v428, %v600
    %v602 = vpop.f32.mrf.mxu0
    %603 = vmatprep.mubr.f32.mxu0 0.0
    %v604 = vand.u32 %v319, 4294901760
    %605 = vmatmul.mubr.f32.gmra.mxu0 %v604
    %v606 = vpop.f32.mrf.mxu0
    %v607 = vadd.f32 %v438, %v606
    %v608 = vpop.f32.mrf.mxu0
    %609 = vdwg.mxu0
    %610 = vmatprep.subr.mxu0 0.0
    %v611 = vand.u32 %v315, 4294901760
    %v612 = vsub.f32 %v315, %v611
    %613 = vmatpush1.msra.mxu0 %v612
    %614 = vmatprep.subr.mxu0 0.0
    %v615 = vand.u32 %v314, 4294901760
    %v616 = vsub.f32 %v314, %v615
    %617 = vmatpush1.msra.mxu0 %v616
    %618 = vmatprep.subr.mxu0 0.0
    %v619 = vand.u32 %v313, 4294901760
    %v620 = vsub.f32 %v313, %v619
    %621 = vmatpush1.msra.mxu0 %v620
    %622 = vmatprep.subr.mxu0 0.0
    %v623 = vand.u32 %v312, 4294901760
    %v624 = vsub.f32 %v312, %v623
    %625 = vmatpush1.msra.mxu0 %v624
    %626 = vmatprep.subr.mxu0 0.0
    %v627 = vand.u32 %v311, 4294901760
    %v628 = vsub.f32 %v311, %v627
    %629 = vmatpush1.msra.mxu0 %v628
    %630 = vmatprep.subr.mxu0 0.0
    %v631 = vand.u32 %v310, 4294901760
    %v632 = vsub.f32 %v310, %v631
    %633 = vmatpush1.msra.mxu0 %v632
    %634 = vmatprep.subr.mxu0 0.0
    %v635 = vand.u32 %v309, 4294901760
    %v636 = vsub.f32 %v309, %v635
    %637 = vmatpush1.msra.mxu0 %v636
    %638 = vmatprep.subr.mxu0 0.0
    %v639 = vand.u32 %v308, 4294901760
    %v640 = vsub.f32 %v308, %v639
    %641 = vmatpush1.msra.mxu0 %v640
    %642 = vmatprep.subr.mxu0 0.0
    %v643 = vand.u32 %v307, 4294901760
    %v644 = vsub.f32 %v307, %v643
    %645 = vmatpush1.msra.mxu0 %v644
    %646 = vmatprep.subr.mxu0 0.0
    %v647 = vand.u32 %v306, 4294901760
    %v648 = vsub.f32 %v306, %v647
    %649 = vmatpush1.msra.mxu0 %v648
    %650 = vmatprep.subr.mxu0 0.0
    %v651 = vand.u32 %v305, 4294901760
    %v652 = vsub.f32 %v305, %v651
    %653 = vmatpush1.msra.mxu0 %v652
    %654 = vmatprep.subr.mxu0 0.0
    %v655 = vand.u32 %v304, 4294901760
    %v656 = vsub.f32 %v304, %v655
    %657 = vmatpush1.msra.mxu0 %v656
    %658 = vmatprep.subr.mxu0 0.0
    %v659 = vand.u32 %v303, 4294901760
    %v660 = vsub.f32 %v303, %v659
    %661 = vmatpush1.msra.mxu0 %v660
    %662 = vmatprep.subr.mxu0 0.0
    %v663 = vand.u32 %v302, 4294901760
    %v664 = vsub.f32 %v302, %v663
    %665 = vmatpush1.msra.mxu0 %v664
    %666 = vmatprep.subr.mxu0 0.0
    %v667 = vand.u32 %v301, 4294901760
    %v668 = vsub.f32 %v301, %v667
    %669 = vmatpush1.msra.mxu0 %v668
    %670 = vmatprep.subr.mxu0 0.0
    %v671 = vand.u32 %v300, 4294901760
    %v672 = vsub.f32 %v300, %v671
    %673 = vmatpush1.msra.mxu0 %v672
    %674 = vmatprep.subr.mxu0 0.0
    %675 = vmatpush2.msra.mxu0 0.0
    %676 = vmatprep.subr.mxu0 0.0
    %677 = vmatpush2.msra.mxu0 0.0
    %678 = vmatprep.subr.mxu0 0.0
    %679 = vmatpush2.msra.mxu0 0.0
    %680 = vmatprep.subr.mxu0 0.0
    %681 = vmatpush2.msra.mxu0 0.0
    %682 = vmatprep.subr.mxu0 0.0
    %683 = vmatpush2.msra.mxu0 0.0
    %684 = vmatprep.subr.mxu0 0.0
    %685 = vmatpush2.msra.mxu0 0.0
    %686 = vmatprep.subr.mxu0 0.0
    %687 = vmatpush2.msra.mxu0 0.0
    %688 = vmatprep.subr.mxu0 0.0
    %689 = vmatpush2.msra.mxu0 0.0
    %690 = vmatprep.subr.mxu0 0.0
    %691 = vmatpush2.msra.mxu0 0.0
    %692 = vmatprep.subr.mxu0 0.0
    %693 = vmatpush2.msra.mxu0 0.0
    %694 = vmatprep.subr.mxu0 0.0
    %695 = vmatpush2.msra.mxu0 0.0
    %696 = vmatprep.subr.mxu0 0.0
    %697 = vmatpush2.msra.mxu0 0.0
    %698 = vmatprep.subr.mxu0 0.0
    %699 = vmatpush2.msra.mxu0 0.0
    %700 = vmatprep.subr.mxu0 0.0
    %701 = vmatpush2.msra.mxu0 0.0
    %702 = vmatprep.subr.mxu0 0.0
    %703 = vmatpush2.msra.mxu0 0.0
    %704 = vmatprep.subr.mxu0 0.0
    %705 = vmatpush2.msra.mxu0 0.0
    %706 = vmatprep.mubr.f32.mxu0 0.0
    %v707 = vand.u32 %v316, 4294901760
    %v708 = vsub.f32 %v316, %v707
    %709 = vmatmul.mubr.f32.gmra.mxu0 %v708
    %v710 = vpop.f32.mrf.mxu0
    %v711 = vadd.f32 %v589, %v710
    %v712 = vpop.f32.mrf.mxu0
    %713 = vmatprep.mubr.f32.mxu0 0.0
    %v714 = vand.u32 %v317, 4294901760
    %v715 = vsub.f32 %v317, %v714
    %716 = vmatmul.mubr.f32.gmra.mxu0 %v715
    %v717 = vpop.f32.mrf.mxu0
    %v718 = vadd.f32 %v595, %v717
    %v719 = vpop.f32.mrf.mxu0
    %720 = vmatprep.mubr.f32.mxu0 0.0
    %v721 = vand.u32 %v318, 4294901760
    %v722 = vsub.f32 %v318, %v721
    %723 = vmatmul.mubr.f32.gmra.mxu0 %v722
    %v724 = vpop.f32.mrf.mxu0
    %v725 = vadd.f32 %v601, %v724
    %v726 = vpop.f32.mrf.mxu0
    %727 = vmatprep.mubr.f32.mxu0 0.0
    %v728 = vand.u32 %v319, 4294901760
    %v729 = vsub.f32 %v319, %v728
    %730 = vmatmul.mubr.f32.gmra.mxu0 %v729
    %v731 = vpop.f32.mrf.mxu0
    %v732 = vadd.f32 %v607, %v731
    %v733 = vpop.f32.mrf.mxu0
    %734 = vdwg.mxu0
    %735 = vmatprep.subr.mxu0 0.0
    %v736 = vand.u32 %v315, 4294901760
    %737 = vmatpush1.msra.mxu0 %v736
    %738 = vmatprep.subr.mxu0 0.0
    %v739 = vand.u32 %v314, 4294901760
    %740 = vmatpush1.msra.mxu0 %v739
    %741 = vmatprep.subr.mxu0 0.0
    %v742 = vand.u32 %v313, 4294901760
    %743 = vmatpush1.msra.mxu0 %v742
    %744 = vmatprep.subr.mxu0 0.0
    %v745 = vand.u32 %v312, 4294901760
    %746 = vmatpush1.msra.mxu0 %v745
    %747 = vmatprep.subr.mxu0 0.0
    %v748 = vand.u32 %v311, 4294901760
    %749 = vmatpush1.msra.mxu0 %v748
    %750 = vmatprep.subr.mxu0 0.0
    %v751 = vand.u32 %v310, 4294901760
    %752 = vmatpush1.msra.mxu0 %v751
    %753 = vmatprep.subr.mxu0 0.0
    %v754 = vand.u32 %v309, 4294901760
    %755 = vmatpush1.msra.mxu0 %v754
    %756 = vmatprep.subr.mxu0 0.0
    %v757 = vand.u32 %v308, 4294901760
    %758 = vmatpush1.msra.mxu0 %v757
    %759 = vmatprep.subr.mxu0 0.0
    %v760 = vand.u32 %v307, 4294901760
    %761 = vmatpush1.msra.mxu0 %v760
    %762 = vmatprep.subr.mxu0 0.0
    %v763 = vand.u32 %v306, 4294901760
    %764 = vmatpush1.msra.mxu0 %v763
    %765 = vmatprep.subr.mxu0 0.0
    %v766 = vand.u32 %v305, 4294901760
    %767 = vmatpush1.msra.mxu0 %v766
    %768 = vmatprep.subr.mxu0 0.0
    %v769 = vand.u32 %v304, 4294901760
    %770 = vmatpush1.msra.mxu0 %v769
    %771 = vmatprep.subr.mxu0 0.0
    %v772 = vand.u32 %v303, 4294901760
    %773 = vmatpush1.msra.mxu0 %v772
    %774 = vmatprep.subr.mxu0 0.0
    %v775 = vand.u32 %v302, 4294901760
    %776 = vmatpush1.msra.mxu0 %v775
    %777 = vmatprep.subr.mxu0 0.0
    %v778 = vand.u32 %v301, 4294901760
    %779 = vmatpush1.msra.mxu0 %v778
    %780 = vmatprep.subr.mxu0 0.0
    %v781 = vand.u32 %v300, 4294901760
    %782 = vmatpush1.msra.mxu0 %v781
    %783 = vmatprep.subr.mxu0 0.0
    %784 = vmatpush2.msra.mxu0 0.0
    %785 = vmatprep.subr.mxu0 0.0
    %786 = vmatpush2.msra.mxu0 0.0
    %787 = vmatprep.subr.mxu0 0.0
    %788 = vmatpush2.msra.mxu0 0.0
    %789 = vmatprep.subr.mxu0 0.0
    %790 = vmatpush2.msra.mxu0 0.0
    %791 = vmatprep.subr.mxu0 0.0
    %792 = vmatpush2.msra.mxu0 0.0
    %793 = vmatprep.subr.mxu0 0.0
    %794 = vmatpush2.msra.mxu0 0.0
    %795 = vmatprep.subr.mxu0 0.0
    %796 = vmatpush2.msra.mxu0 0.0
    %797 = vmatprep.subr.mxu0 0.0
    %798 = vmatpush2.msra.mxu0 0.0
    %799 = vmatprep.subr.mxu0 0.0
    %800 = vmatpush2.msra.mxu0 0.0
    %801 = vmatprep.subr.mxu0 0.0
    %802 = vmatpush2.msra.mxu0 0.0
    %803 = vmatprep.subr.mxu0 0.0
    %804 = vmatpush2.msra.mxu0 0.0
    %805 = vmatprep.subr.mxu0 0.0
    %806 = vmatpush2.msra.mxu0 0.0
    %807 = vmatprep.subr.mxu0 0.0
    %808 = vmatpush2.msra.mxu0 0.0
    %809 = vmatprep.subr.mxu0 0.0
    %810 = vmatpush2.msra.mxu0 0.0
    %811 = vmatprep.subr.mxu0 0.0
    %812 = vmatpush2.msra.mxu0 0.0
    %813 = vmatprep.subr.mxu0 0.0
    %814 = vmatpush2.msra.mxu0 0.0
    %815 = vmatprep.mubr.f32.mxu0 0.0
    %v816 = vand.u32 %v316, 4294901760
    %v817 = vsub.f32 %v316, %v816
    %v818 = vand.u32 %v817, 4294901760
    %819 = vmatmul.mubr.f32.gmra.mxu0 %v818
    %v820 = vpop.f32.mrf.mxu0
    %v821 = vadd.f32 %v711, %v820
    %v822 = vpop.f32.mrf.mxu0
    %823 = vmatprep.mubr.f32.mxu0 0.0
    %v824 = vand.u32 %v317, 4294901760
    %v825 = vsub.f32 %v317, %v824
    %v826 = vand.u32 %v825, 4294901760
    %827 = vmatmul.mubr.f32.gmra.mxu0 %v826
    %v828 = vpop.f32.mrf.mxu0
    %v829 = vadd.f32 %v718, %v828
    %v830 = vpop.f32.mrf.mxu0
    %831 = vmatprep.mubr.f32.mxu0 0.0
    %v832 = vand.u32 %v318, 4294901760
    %v833 = vsub.f32 %v318, %v832
    %v834 = vand.u32 %v833, 4294901760
    %835 = vmatmul.mubr.f32.gmra.mxu0 %v834
    %v836 = vpop.f32.mrf.mxu0
    %v837 = vadd.f32 %v725, %v836
    %v838 = vpop.f32.mrf.mxu0
    %839 = vmatprep.mubr.f32.mxu0 0.0
    %v840 = vand.u32 %v319, 4294901760
    %v841 = vsub.f32 %v319, %v840
    %v842 = vand.u32 %v841, 4294901760
    %843 = vmatmul.mubr.f32.gmra.mxu0 %v842
    %v844 = vpop.f32.mrf.mxu0
    %v845 = vadd.f32 %v732, %v844
    %v846 = vpop.f32.mrf.mxu0
    %847 = vdwg.mxu0
    %848 = vmatprep.subr.mxu0 0.0
    %v849 = vand.u32 %v315, 4294901760
    %v850 = vsub.f32 %v315, %v849
    %v851 = vand.u32 %v850, 4294901760
    %852 = vmatpush1.msra.mxu0 %v851
    %853 = vmatprep.subr.mxu0 0.0
    %v854 = vand.u32 %v314, 4294901760
    %v855 = vsub.f32 %v314, %v854
    %v856 = vand.u32 %v855, 4294901760
    %857 = vmatpush1.msra.mxu0 %v856
    %858 = vmatprep.subr.mxu0 0.0
    %v859 = vand.u32 %v313, 4294901760
    %v860 = vsub.f32 %v313, %v859
    %v861 = vand.u32 %v860, 4294901760
    %862 = vmatpush1.msra.mxu0 %v861
    %863 = vmatprep.subr.mxu0 0.0
    %v864 = vand.u32 %v312, 4294901760
    %v865 = vsub.f32 %v312, %v864
    %v866 = vand.u32 %v865, 4294901760
    %867 = vmatpush1.msra.mxu0 %v866
    %868 = vmatprep.subr.mxu0 0.0
    %v869 = vand.u32 %v311, 4294901760
    %v870 = vsub.f32 %v311, %v869
    %v871 = vand.u32 %v870, 4294901760
    %872 = vmatpush1.msra.mxu0 %v871
    %873 = vmatprep.subr.mxu0 0.0
    %v874 = vand.u32 %v310, 4294901760
    %v875 = vsub.f32 %v310, %v874
    %v876 = vand.u32 %v875, 4294901760
    %877 = vmatpush1.msra.mxu0 %v876
    %878 = vmatprep.subr.mxu0 0.0
    %v879 = vand.u32 %v309, 4294901760
    %v880 = vsub.f32 %v309, %v879
    %v881 = vand.u32 %v880, 4294901760
    %882 = vmatpush1.msra.mxu0 %v881
    %883 = vmatprep.subr.mxu0 0.0
    %v884 = vand.u32 %v308, 4294901760
    %v885 = vsub.f32 %v308, %v884
    %v886 = vand.u32 %v885, 4294901760
    %887 = vmatpush1.msra.mxu0 %v886
    %888 = vmatprep.subr.mxu0 0.0
    %v889 = vand.u32 %v307, 4294901760
    %v890 = vsub.f32 %v307, %v889
    %v891 = vand.u32 %v890, 4294901760
    %892 = vmatpush1.msra.mxu0 %v891
    %893 = vmatprep.subr.mxu0 0.0
    %v894 = vand.u32 %v306, 4294901760
    %v895 = vsub.f32 %v306, %v894
    %v896 = vand.u32 %v895, 4294901760
    %897 = vmatpush1.msra.mxu0 %v896
    %898 = vmatprep.subr.mxu0 0.0
    %v899 = vand.u32 %v305, 4294901760
    %v900 = vsub.f32 %v305, %v899
    %v901 = vand.u32 %v900, 4294901760
    %902 = vmatpush1.msra.mxu0 %v901
    %903 = vmatprep.subr.mxu0 0.0
    %v904 = vand.u32 %v304, 4294901760
    %v905 = vsub.f32 %v304, %v904
    %v906 = vand.u32 %v905, 4294901760
    %907 = vmatpush1.msra.mxu0 %v906
    %908 = vmatprep.subr.mxu0 0.0
    %v909 = vand.u32 %v303, 4294901760
    %v910 = vsub.f32 %v303, %v909
    %v911 = vand.u32 %v910, 4294901760
    %912 = vmatpush1.msra.mxu0 %v911
    %913 = vmatprep.subr.mxu0 0.0
    %v914 = vand.u32 %v302, 4294901760
    %v915 = vsub.f32 %v302, %v914
    %v916 = vand.u32 %v915, 4294901760
    %917 = vmatpush1.msra.mxu0 %v916
    %918 = vmatprep.subr.mxu0 0.0
    %v919 = vand.u32 %v301, 4294901760
    %v920 = vsub.f32 %v301, %v919
    %v921 = vand.u32 %v920, 4294901760
    %922 = vmatpush1.msra.mxu0 %v921
    %923 = vmatprep.subr.mxu0 0.0
    %v924 = vand.u32 %v300, 4294901760
    %v925 = vsub.f32 %v300, %v924
    %v926 = vand.u32 %v925, 4294901760
    %927 = vmatpush1.msra.mxu0 %v926
    %928 = vmatprep.subr.mxu0 0.0
    %929 = vmatpush2.msra.mxu0 0.0
    %930 = vmatprep.subr.mxu0 0.0
    %931 = vmatpush2.msra.mxu0 0.0
    %932 = vmatprep.subr.mxu0 0.0
    %933 = vmatpush2.msra.mxu0 0.0
    %934 = vmatprep.subr.mxu0 0.0
    %935 = vmatpush2.msra.mxu0 0.0
    %936 = vmatprep.subr.mxu0 0.0
    %937 = vmatpush2.msra.mxu0 0.0
    %938 = vmatprep.subr.mxu0 0.0
    %939 = vmatpush2.msra.mxu0 0.0
    %940 = vmatprep.subr.mxu0 0.0
    %941 = vmatpush2.msra.mxu0 0.0
    %942 = vmatprep.subr.mxu0 0.0
    %943 = vmatpush2.msra.mxu0 0.0
    %944 = vmatprep.subr.mxu0 0.0
    %945 = vmatpush2.msra.mxu0 0.0
    %946 = vmatprep.subr.mxu0 0.0
    %947 = vmatpush2.msra.mxu0 0.0
    %948 = vmatprep.subr.mxu0 0.0
    %949 = vmatpush2.msra.mxu0 0.0
    %950 = vmatprep.subr.mxu0 0.0
    %951 = vmatpush2.msra.mxu0 0.0
    %952 = vmatprep.subr.mxu0 0.0
    %953 = vmatpush2.msra.mxu0 0.0
    %954 = vmatprep.subr.mxu0 0.0
    %955 = vmatpush2.msra.mxu0 0.0
    %956 = vmatprep.subr.mxu0 0.0
    %957 = vmatpush2.msra.mxu0 0.0
    %958 = vmatprep.subr.mxu0 0.0
    %959 = vmatpush2.msra.mxu0 0.0
    %960 = vmatprep.mubr.f32.mxu0 0.0
    %v961 = vand.u32 %v316, 4294901760
    %962 = vmatmul.mubr.f32.gmra.mxu0 %v961
    %v963 = vpop.f32.mrf.mxu0
    %v964 = vadd.f32 %v821, %v963
    %v965 = vpop.f32.mrf.mxu0
    %966 = vmatprep.mubr.f32.mxu0 0.0
    %v967 = vand.u32 %v317, 4294901760
    %968 = vmatmul.mubr.f32.gmra.mxu0 %v967
    %v969 = vpop.f32.mrf.mxu0
    %v970 = vadd.f32 %v829, %v969
    %v971 = vpop.f32.mrf.mxu0
    %972 = vmatprep.mubr.f32.mxu0 0.0
    %v973 = vand.u32 %v318, 4294901760
    %974 = vmatmul.mubr.f32.gmra.mxu0 %v973
    %v975 = vpop.f32.mrf.mxu0
    %v976 = vadd.f32 %v837, %v975
    %v977 = vpop.f32.mrf.mxu0
    %978 = vmatprep.mubr.f32.mxu0 0.0
    %v979 = vand.u32 %v319, 4294901760
    %980 = vmatmul.mubr.f32.gmra.mxu0 %v979
    %v981 = vpop.f32.mrf.mxu0
    %v982 = vadd.f32 %v845, %v981
    %v983 = vpop.f32.mrf.mxu0
    %984 = vdwg.mxu0
    %985 = vmatprep.subr.mxu0 0.0
    %v986 = vand.u32 %v315, 4294901760
    %987 = vmatpush1.msra.mxu0 %v986
    %988 = vmatprep.subr.mxu0 0.0
    %v989 = vand.u32 %v314, 4294901760
    %990 = vmatpush1.msra.mxu0 %v989
    %991 = vmatprep.subr.mxu0 0.0
    %v992 = vand.u32 %v313, 4294901760
    %993 = vmatpush1.msra.mxu0 %v992
    %994 = vmatprep.subr.mxu0 0.0
    %v995 = vand.u32 %v312, 4294901760
    %996 = vmatpush1.msra.mxu0 %v995
    %997 = vmatprep.subr.mxu0 0.0
    %v998 = vand.u32 %v311, 4294901760
    %999 = vmatpush1.msra.mxu0 %v998
    %1000 = vmatprep.subr.mxu0 0.0
    %v1001 = vand.u32 %v310, 4294901760
    %1002 = vmatpush1.msra.mxu0 %v1001
    %1003 = vmatprep.subr.mxu0 0.0
    %v1004 = vand.u32 %v309, 4294901760
    %1005 = vmatpush1.msra.mxu0 %v1004
    %1006 = vmatprep.subr.mxu0 0.0
    %v1007 = vand.u32 %v308, 4294901760
    %1008 = vmatpush1.msra.mxu0 %v1007
    %1009 = vmatprep.subr.mxu0 0.0
    %v1010 = vand.u32 %v307, 4294901760
    %1011 = vmatpush1.msra.mxu0 %v1010
    %1012 = vmatprep.subr.mxu0 0.0
    %v1013 = vand.u32 %v306, 4294901760
    %1014 = vmatpush1.msra.mxu0 %v1013
    %1015 = vmatprep.subr.mxu0 0.0
    %v1016 = vand.u32 %v305, 4294901760
    %1017 = vmatpush1.msra.mxu0 %v1016
    %1018 = vmatprep.subr.mxu0 0.0
    %v1019 = vand.u32 %v304, 4294901760
    %1020 = vmatpush1.msra.mxu0 %v1019
    %1021 = vmatprep.subr.mxu0 0.0
    %v1022 = vand.u32 %v303, 4294901760
    %1023 = vmatpush1.msra.mxu0 %v1022
    %1024 = vmatprep.subr.mxu0 0.0
    %v1025 = vand.u32 %v302, 4294901760
    %1026 = vmatpush1.msra.mxu0 %v1025
    %1027 = vmatprep.subr.mxu0 0.0
    %v1028 = vand.u32 %v301, 4294901760
    %1029 = vmatpush1.msra.mxu0 %v1028
    %1030 = vmatprep.subr.mxu0 0.0
    %v1031 = vand.u32 %v300, 4294901760
    %1032 = vmatpush1.msra.mxu0 %v1031
    %1033 = vmatprep.subr.mxu0 0.0
    %1034 = vmatpush2.msra.mxu0 0.0
    %1035 = vmatprep.subr.mxu0 0.0
    %1036 = vmatpush2.msra.mxu0 0.0
    %1037 = vmatprep.subr.mxu0 0.0
    %1038 = vmatpush2.msra.mxu0 0.0
    %1039 = vmatprep.subr.mxu0 0.0
    %1040 = vmatpush2.msra.mxu0 0.0
    %1041 = vmatprep.subr.mxu0 0.0
    %1042 = vmatpush2.msra.mxu0 0.0
    %1043 = vmatprep.subr.mxu0 0.0
    %1044 = vmatpush2.msra.mxu0 0.0
    %1045 = vmatprep.subr.mxu0 0.0
    %1046 = vmatpush2.msra.mxu0 0.0
    %1047 = vmatprep.subr.mxu0 0.0
    %1048 = vmatpush2.msra.mxu0 0.0
    %1049 = vmatprep.subr.mxu0 0.0
    %1050 = vmatpush2.msra.mxu0 0.0
    %1051 = vmatprep.subr.mxu0 0.0
    %1052 = vmatpush2.msra.mxu0 0.0
    %1053 = vmatprep.subr.mxu0 0.0
    %1054 = vmatpush2.msra.mxu0 0.0
    %1055 = vmatprep.subr.mxu0 0.0
    %1056 = vmatpush2.msra.mxu0 0.0
    %1057 = vmatprep.subr.mxu0 0.0
    %1058 = vmatpush2.msra.mxu0 0.0
    %1059 = vmatprep.subr.mxu0 0.0
    %1060 = vmatpush2.msra.mxu0 0.0
    %1061 = vmatprep.subr.mxu0 0.0
    %1062 = vmatpush2.msra.mxu0 0.0
    %1063 = vmatprep.subr.mxu0 0.0
    %1064 = vmatpush2.msra.mxu0 0.0
    %1065 = vmatprep.mubr.f32.mxu0 0.0
    %v1066 = vand.u32 %v316, 4294901760
    %1067 = vmatmul.mubr.f32.gmra.mxu0 %v1066
    %v1068 = vpop.f32.mrf.mxu0
    %v1069 = vadd.f32 %v964, %v1068
    %v1070 = vpop.f32.mrf.mxu0
    %1071 = vmatprep.mubr.f32.mxu0 0.0
    %v1072 = vand.u32 %v317, 4294901760
    %1073 = vmatmul.mubr.f32.gmra.mxu0 %v1072
    %v1074 = vpop.f32.mrf.mxu0
    %v1075 = vadd.f32 %v970, %v1074
    %v1076 = vpop.f32.mrf.mxu0
    %1077 = vmatprep.mubr.f32.mxu0 0.0
    %v1078 = vand.u32 %v318, 4294901760
    %1079 = vmatmul.mubr.f32.gmra.mxu0 %v1078
    %v1080 = vpop.f32.mrf.mxu0
    %v1081 = vadd.f32 %v976, %v1080
    %v1082 = vpop.f32.mrf.mxu0
    %1083 = vmatprep.mubr.f32.mxu0 0.0
    %v1084 = vand.u32 %v319, 4294901760
    %1085 = vmatmul.mubr.f32.gmra.mxu0 %v1084
    %v1086 = vpop.f32.mrf.mxu0
    %v1087 = vadd.f32 %v982, %v1086
    %v1088 = vpop.f32.mrf.mxu0
    %1089 = vdwg.mxu0
    %v1090 = vld [vmem:[%s3] sm:$0xff]
    %v1091 = vld [vmem:[%s3 + $0x8] sm:$0xff]
    %v1092 = vld [vmem:[%s3 + $0x10] sm:$0xff]
    %v1093 = vld [vmem:[%s3 + $0x18] sm:$0xff]
    %v1094 = vld [vmem:[%s3 + $0x20] sm:$0xff]
    %v1095 = vld [vmem:[%s3 + $0x28] sm:$0xff]
    %v1096 = vld [vmem:[%s3 + $0x30] sm:$0xff]
    %v1097 = vld [vmem:[%s3 + $0x38] sm:$0xff]
    %v1098 = vld [vmem:[%s3 + $0x40] sm:$0xff]
    %v1099 = vld [vmem:[%s3 + $0x48] sm:$0xff]
    %v1100 = vld [vmem:[%s3 + $0x50] sm:$0xff]
    %v1101 = vld [vmem:[%s3 + $0x58] sm:$0xff]
    %v1102 = vld [vmem:[%s3 + $0x60] sm:$0xff]
    %v1103 = vld [vmem:[%s3 + $0x68] sm:$0xff]
    %v1104 = vld [vmem:[%s3 + $0x70] sm:$0xff]
    %v1105 = vld [vmem:[%s3 + $0x78] sm:$0xff]
    %vm1106 = vcmask 261120
    %v1108 = vsel %vm1106, %v1090, 0
    %v1111 = vsel %vm1106, %v1091, 0
    %v1114 = vsel %vm1106, %v1092, 0
    %v1117 = vsel %vm1106, %v1093, 0
    %v1120 = vsel %vm1106, %v1094, 0
    %v1123 = vsel %vm1106, %v1095, 0
    %v1126 = vsel %vm1106, %v1096, 0
    %v1129 = vsel %vm1106, %v1097, 0
    %v1132 = vsel %vm1106, %v1098, 0
    %v1135 = vsel %vm1106, %v1099, 0
    %v1138 = vsel %vm1106, %v1100, 0
    %v1141 = vsel %vm1106, %v1101, 0
    %v1144 = vsel %vm1106, %v1102, 0
    %v1147 = vsel %vm1106, %v1103, 0
    %v1150 = vsel %vm1106, %v1104, 0
    %v1153 = vsel %vm1106, %v1105, 0
    %1155 = vmatprep.subr.mxu0 0.0
    %1156 = vmatpush1.msra.mxu0 0.0
    %1157 = vmatprep.subr.mxu0 0.0
    %1158 = vmatpush1.msra.mxu0 0.0
    %1159 = vmatprep.subr.mxu0 0.0
    %1160 = vmatpush1.msra.mxu0 0.0
    %1161 = vmatprep.subr.mxu0 0.0
    %1162 = vmatpush1.msra.mxu0 0.0
    %1163 = vmatprep.subr.mxu0 0.0
    %1164 = vmatpush1.msra.mxu0 0.0
    %1165 = vmatprep.subr.mxu0 0.0
    %1166 = vmatpush1.msra.mxu0 0.0
    %1167 = vmatprep.subr.mxu0 0.0
    %1168 = vmatpush1.msra.mxu0 0.0
    %1169 = vmatprep.subr.mxu0 0.0
    %1170 = vmatpush1.msra.mxu0 0.0
    %1171 = vmatprep.subr.mxu0 0.0
    %1172 = vmatpush1.msra.mxu0 0.0
    %1173 = vmatprep.subr.mxu0 0.0
    %1174 = vmatpush1.msra.mxu0 0.0
    %1175 = vmatprep.subr.mxu0 0.0
    %1176 = vmatpush1.msra.mxu0 0.0
    %1177 = vmatprep.subr.mxu0 0.0
    %1178 = vmatpush1.msra.mxu0 0.0
    %1179 = vmatprep.subr.mxu0 0.0
    %v1180 = vand.u32 %v1087, 4294901760
    %1181 = vmatpush1.msra.mxu0 %v1180
    %1182 = vmatprep.subr.mxu0 0.0
    %v1183 = vand.u32 %v1081, 4294901760
    %1184 = vmatpush1.msra.mxu0 %v1183
    %1185 = vmatprep.subr.mxu0 0.0
    %v1186 = vand.u32 %v1075, 4294901760
    %1187 = vmatpush1.msra.mxu0 %v1186
    %1188 = vmatprep.subr.mxu0 0.0
    %v1189 = vand.u32 %v1069, 4294901760
    %1190 = vmatpush1.msra.mxu0 %v1189
    %1191 = vmatprep.subr.mxu0 0.0
    %1192 = vmatpush2.msra.mxu0 0.0
    %1193 = vmatprep.subr.mxu0 0.0
    %1194 = vmatpush2.msra.mxu0 0.0
    %1195 = vmatprep.subr.mxu0 0.0
    %1196 = vmatpush2.msra.mxu0 0.0
    %1197 = vmatprep.subr.mxu0 0.0
    %1198 = vmatpush2.msra.mxu0 0.0
    %1199 = vmatprep.subr.mxu0 0.0
    %1200 = vmatpush2.msra.mxu0 0.0
    %1201 = vmatprep.subr.mxu0 0.0
    %1202 = vmatpush2.msra.mxu0 0.0
    %1203 = vmatprep.subr.mxu0 0.0
    %1204 = vmatpush2.msra.mxu0 0.0
    %1205 = vmatprep.subr.mxu0 0.0
    %1206 = vmatpush2.msra.mxu0 0.0
    %1207 = vmatprep.subr.mxu0 0.0
    %1208 = vmatpush2.msra.mxu0 0.0
    %1209 = vmatprep.subr.mxu0 0.0
    %1210 = vmatpush2.msra.mxu0 0.0
    %1211 = vmatprep.subr.mxu0 0.0
    %1212 = vmatpush2.msra.mxu0 0.0
    %1213 = vmatprep.subr.mxu0 0.0
    %1214 = vmatpush2.msra.mxu0 0.0
    %1215 = vmatprep.subr.mxu0 0.0
    %1216 = vmatpush2.msra.mxu0 0.0
    %1217 = vmatprep.subr.mxu0 0.0
    %1218 = vmatpush2.msra.mxu0 0.0
    %1219 = vmatprep.subr.mxu0 0.0
    %1220 = vmatpush2.msra.mxu0 0.0
    %1221 = vmatprep.subr.mxu0 0.0
    %1222 = vmatpush2.msra.mxu0 0.0
    %1223 = vmatprep.mubr.f32.mxu0 0.0
    %v1224 = vand.u32 %v1108, 4294901760
    %v1225 = vsub.f32 %v1108, %v1224
    %v1226 = vand.u32 %v1225, 4294901760
    %v1227 = vsub.f32 %v1225, %v1226
    %v1228 = vand.u32 %v1227, 4294901760
    %1229 = vmatmul.mubr.f32.gmra.mxu0 %v1228
    %v1230 = vpop.f32.mrf.mxu0
    %v1231 = vadd.f32 0.0, %v1230
    %v1232 = vpop.f32.mrf.mxu0
    %1233 = vmatprep.mubr.f32.mxu0 0.0
    %v1234 = vand.u32 %v1111, 4294901760
    %v1235 = vsub.f32 %v1111, %v1234
    %v1236 = vand.u32 %v1235, 4294901760
    %v1237 = vsub.f32 %v1235, %v1236
    %v1238 = vand.u32 %v1237, 4294901760
    %1239 = vmatmul.mubr.f32.gmra.mxu0 %v1238
    %v1240 = vpop.f32.mrf.mxu0
    %v1241 = vadd.f32 0.0, %v1240
    %v1242 = vpop.f32.mrf.mxu0
    %1243 = vmatprep.mubr.f32.mxu0 0.0
    %v1244 = vand.u32 %v1114, 4294901760
    %v1245 = vsub.f32 %v1114, %v1244
    %v1246 = vand.u32 %v1245, 4294901760
    %v1247 = vsub.f32 %v1245, %v1246
    %v1248 = vand.u32 %v1247, 4294901760
    %1249 = vmatmul.mubr.f32.gmra.mxu0 %v1248
    %v1250 = vpop.f32.mrf.mxu0
    %v1251 = vadd.f32 0.0, %v1250
    %v1252 = vpop.f32.mrf.mxu0
    %1253 = vmatprep.mubr.f32.mxu0 0.0
    %v1254 = vand.u32 %v1117, 4294901760
    %v1255 = vsub.f32 %v1117, %v1254
    %v1256 = vand.u32 %v1255, 4294901760
    %v1257 = vsub.f32 %v1255, %v1256
    %v1258 = vand.u32 %v1257, 4294901760
    %1259 = vmatmul.mubr.f32.gmra.mxu0 %v1258
    %v1260 = vpop.f32.mrf.mxu0
    %v1261 = vadd.f32 0.0, %v1260
    %v1262 = vpop.f32.mrf.mxu0
    %1263 = vmatprep.mubr.f32.mxu0 0.0
    %v1264 = vand.u32 %v1120, 4294901760
    %v1265 = vsub.f32 %v1120, %v1264
    %v1266 = vand.u32 %v1265, 4294901760
    %v1267 = vsub.f32 %v1265, %v1266
    %v1268 = vand.u32 %v1267, 4294901760
    %1269 = vmatmul.mubr.f32.gmra.mxu0 %v1268
    %v1270 = vpop.f32.mrf.mxu0
    %v1271 = vadd.f32 0.0, %v1270
    %v1272 = vpop.f32.mrf.mxu0
    %1273 = vmatprep.mubr.f32.mxu0 0.0
    %v1274 = vand.u32 %v1123, 4294901760
    %v1275 = vsub.f32 %v1123, %v1274
    %v1276 = vand.u32 %v1275, 4294901760
    %v1277 = vsub.f32 %v1275, %v1276
    %v1278 = vand.u32 %v1277, 4294901760
    %1279 = vmatmul.mubr.f32.gmra.mxu0 %v1278
    %v1280 = vpop.f32.mrf.mxu0
    %v1281 = vadd.f32 0.0, %v1280
    %v1282 = vpop.f32.mrf.mxu0
    %1283 = vmatprep.mubr.f32.mxu0 0.0
    %v1284 = vand.u32 %v1126, 4294901760
    %v1285 = vsub.f32 %v1126, %v1284
    %v1286 = vand.u32 %v1285, 4294901760
    %v1287 = vsub.f32 %v1285, %v1286
    %v1288 = vand.u32 %v1287, 4294901760
    %1289 = vmatmul.mubr.f32.gmra.mxu0 %v1288
    %v1290 = vpop.f32.mrf.mxu0
    %v1291 = vadd.f32 0.0, %v1290
    %v1292 = vpop.f32.mrf.mxu0
    %1293 = vmatprep.mubr.f32.mxu0 0.0
    %v1294 = vand.u32 %v1129, 4294901760
    %v1295 = vsub.f32 %v1129, %v1294
    %v1296 = vand.u32 %v1295, 4294901760
    %v1297 = vsub.f32 %v1295, %v1296
    %v1298 = vand.u32 %v1297, 4294901760
    %1299 = vmatmul.mubr.f32.gmra.mxu0 %v1298
    %v1300 = vpop.f32.mrf.mxu0
    %v1301 = vadd.f32 0.0, %v1300
    %v1302 = vpop.f32.mrf.mxu0
    %1303 = vmatprep.mubr.f32.mxu0 0.0
    %v1304 = vand.u32 %v1132, 4294901760
    %v1305 = vsub.f32 %v1132, %v1304
    %v1306 = vand.u32 %v1305, 4294901760
    %v1307 = vsub.f32 %v1305, %v1306
    %v1308 = vand.u32 %v1307, 4294901760
    %1309 = vmatmul.mubr.f32.gmra.mxu0 %v1308
    %v1310 = vpop.f32.mrf.mxu0
    %v1311 = vadd.f32 0.0, %v1310
    %v1312 = vpop.f32.mrf.mxu0
    %1313 = vmatprep.mubr.f32.mxu0 0.0
    %v1314 = vand.u32 %v1135, 4294901760
    %v1315 = vsub.f32 %v1135, %v1314
    %v1316 = vand.u32 %v1315, 4294901760
    %v1317 = vsub.f32 %v1315, %v1316
    %v1318 = vand.u32 %v1317, 4294901760
    %1319 = vmatmul.mubr.f32.gmra.mxu0 %v1318
    %v1320 = vpop.f32.mrf.mxu0
    %v1321 = vadd.f32 0.0, %v1320
    %v1322 = vpop.f32.mrf.mxu0
    %1323 = vmatprep.mubr.f32.mxu0 0.0
    %v1324 = vand.u32 %v1138, 4294901760
    %v1325 = vsub.f32 %v1138, %v1324
    %v1326 = vand.u32 %v1325, 4294901760
    %v1327 = vsub.f32 %v1325, %v1326
    %v1328 = vand.u32 %v1327, 4294901760
    %1329 = vmatmul.mubr.f32.gmra.mxu0 %v1328
    %v1330 = vpop.f32.mrf.mxu0
    %v1331 = vadd.f32 0.0, %v1330
    %v1332 = vpop.f32.mrf.mxu0
    %1333 = vmatprep.mubr.f32.mxu0 0.0
    %v1334 = vand.u32 %v1141, 4294901760
    %v1335 = vsub.f32 %v1141, %v1334
    %v1336 = vand.u32 %v1335, 4294901760
    %v1337 = vsub.f32 %v1335, %v1336
    %v1338 = vand.u32 %v1337, 4294901760
    %1339 = vmatmul.mubr.f32.gmra.mxu0 %v1338
    %v1340 = vpop.f32.mrf.mxu0
    %v1341 = vadd.f32 0.0, %v1340
    %v1342 = vpop.f32.mrf.mxu0
    %1343 = vmatprep.mubr.f32.mxu0 0.0
    %v1344 = vand.u32 %v1144, 4294901760
    %v1345 = vsub.f32 %v1144, %v1344
    %v1346 = vand.u32 %v1345, 4294901760
    %v1347 = vsub.f32 %v1345, %v1346
    %v1348 = vand.u32 %v1347, 4294901760
    %1349 = vmatmul.mubr.f32.gmra.mxu0 %v1348
    %v1350 = vpop.f32.mrf.mxu0
    %v1351 = vadd.f32 0.0, %v1350
    %v1352 = vpop.f32.mrf.mxu0
    %1353 = vmatprep.mubr.f32.mxu0 0.0
    %v1354 = vand.u32 %v1147, 4294901760
    %v1355 = vsub.f32 %v1147, %v1354
    %v1356 = vand.u32 %v1355, 4294901760
    %v1357 = vsub.f32 %v1355, %v1356
    %v1358 = vand.u32 %v1357, 4294901760
    %1359 = vmatmul.mubr.f32.gmra.mxu0 %v1358
    %v1360 = vpop.f32.mrf.mxu0
    %v1361 = vadd.f32 0.0, %v1360
    %v1362 = vpop.f32.mrf.mxu0
    %1363 = vmatprep.mubr.f32.mxu0 0.0
    %v1364 = vand.u32 %v1150, 4294901760
    %v1365 = vsub.f32 %v1150, %v1364
    %v1366 = vand.u32 %v1365, 4294901760
    %v1367 = vsub.f32 %v1365, %v1366
    %v1368 = vand.u32 %v1367, 4294901760
    %1369 = vmatmul.mubr.f32.gmra.mxu0 %v1368
    %v1370 = vpop.f32.mrf.mxu0
    %v1371 = vadd.f32 0.0, %v1370
    %v1372 = vpop.f32.mrf.mxu0
    %1373 = vmatprep.mubr.f32.mxu0 0.0
    %v1374 = vand.u32 %v1153, 4294901760
    %v1375 = vsub.f32 %v1153, %v1374
    %v1376 = vand.u32 %v1375, 4294901760
    %v1377 = vsub.f32 %v1375, %v1376
    %v1378 = vand.u32 %v1377, 4294901760
    %1379 = vmatmul.mubr.f32.gmra.mxu0 %v1378
    %v1380 = vpop.f32.mrf.mxu0
    %v1381 = vadd.f32 0.0, %v1380
    %v1382 = vpop.f32.mrf.mxu0
    %1383 = vdwg.mxu0
    %1384 = vmatprep.subr.mxu0 0.0
    %1385 = vmatpush1.msra.mxu0 0.0
    %1386 = vmatprep.subr.mxu0 0.0
    %1387 = vmatpush1.msra.mxu0 0.0
    %1388 = vmatprep.subr.mxu0 0.0
    %1389 = vmatpush1.msra.mxu0 0.0
    %1390 = vmatprep.subr.mxu0 0.0
    %1391 = vmatpush1.msra.mxu0 0.0
    %1392 = vmatprep.subr.mxu0 0.0
    %1393 = vmatpush1.msra.mxu0 0.0
    %1394 = vmatprep.subr.mxu0 0.0
    %1395 = vmatpush1.msra.mxu0 0.0
    %1396 = vmatprep.subr.mxu0 0.0
    %1397 = vmatpush1.msra.mxu0 0.0
    %1398 = vmatprep.subr.mxu0 0.0
    %1399 = vmatpush1.msra.mxu0 0.0
    %1400 = vmatprep.subr.mxu0 0.0
    %1401 = vmatpush1.msra.mxu0 0.0
    %1402 = vmatprep.subr.mxu0 0.0
    %1403 = vmatpush1.msra.mxu0 0.0
    %1404 = vmatprep.subr.mxu0 0.0
    %1405 = vmatpush1.msra.mxu0 0.0
    %1406 = vmatprep.subr.mxu0 0.0
    %1407 = vmatpush1.msra.mxu0 0.0
    %1408 = vmatprep.subr.mxu0 0.0
    %v1409 = vand.u32 %v1087, 4294901760
    %v1410 = vsub.f32 %v1087, %v1409
    %v1411 = vand.u32 %v1410, 4294901760
    %v1412 = vsub.f32 %v1410, %v1411
    %v1413 = vand.u32 %v1412, 4294901760
    %1414 = vmatpush1.msra.mxu0 %v1413
    %1415 = vmatprep.subr.mxu0 0.0
    %v1416 = vand.u32 %v1081, 4294901760
    %v1417 = vsub.f32 %v1081, %v1416
    %v1418 = vand.u32 %v1417, 4294901760
    %v1419 = vsub.f32 %v1417, %v1418
    %v1420 = vand.u32 %v1419, 4294901760
    %1421 = vmatpush1.msra.mxu0 %v1420
    %1422 = vmatprep.subr.mxu0 0.0
    %v1423 = vand.u32 %v1075, 4294901760
    %v1424 = vsub.f32 %v1075, %v1423
    %v1425 = vand.u32 %v1424, 4294901760
    %v1426 = vsub.f32 %v1424, %v1425
    %v1427 = vand.u32 %v1426, 4294901760
    %1428 = vmatpush1.msra.mxu0 %v1427
    %1429 = vmatprep.subr.mxu0 0.0
    %v1430 = vand.u32 %v1069, 4294901760
    %v1431 = vsub.f32 %v1069, %v1430
    %v1432 = vand.u32 %v1431, 4294901760
    %v1433 = vsub.f32 %v1431, %v1432
    %v1434 = vand.u32 %v1433, 4294901760
    %1435 = vmatpush1.msra.mxu0 %v1434
    %1436 = vmatprep.subr.mxu0 0.0
    %1437 = vmatpush2.msra.mxu0 0.0
    %1438 = vmatprep.subr.mxu0 0.0
    %1439 = vmatpush2.msra.mxu0 0.0
    %1440 = vmatprep.subr.mxu0 0.0
    %1441 = vmatpush2.msra.mxu0 0.0
    %1442 = vmatprep.subr.mxu0 0.0
    %1443 = vmatpush2.msra.mxu0 0.0
    %1444 = vmatprep.subr.mxu0 0.0
    %1445 = vmatpush2.msra.mxu0 0.0
    %1446 = vmatprep.subr.mxu0 0.0
    %1447 = vmatpush2.msra.mxu0 0.0
    %1448 = vmatprep.subr.mxu0 0.0
    %1449 = vmatpush2.msra.mxu0 0.0
    %1450 = vmatprep.subr.mxu0 0.0
    %1451 = vmatpush2.msra.mxu0 0.0
    %1452 = vmatprep.subr.mxu0 0.0
    %1453 = vmatpush2.msra.mxu0 0.0
    %1454 = vmatprep.subr.mxu0 0.0
    %1455 = vmatpush2.msra.mxu0 0.0
    %1456 = vmatprep.subr.mxu0 0.0
    %1457 = vmatpush2.msra.mxu0 0.0
    %1458 = vmatprep.subr.mxu0 0.0
    %1459 = vmatpush2.msra.mxu0 0.0
    %1460 = vmatprep.subr.mxu0 0.0
    %1461 = vmatpush2.msra.mxu0 0.0
    %1462 = vmatprep.subr.mxu0 0.0
    %1463 = vmatpush2.msra.mxu0 0.0
    %1464 = vmatprep.subr.mxu0 0.0
    %1465 = vmatpush2.msra.mxu0 0.0
    %1466 = vmatprep.subr.mxu0 0.0
    %1467 = vmatpush2.msra.mxu0 0.0
    %1468 = vmatprep.mubr.f32.mxu0 0.0
    %v1469 = vand.u32 %v1108, 4294901760
    %1470 = vmatmul.mubr.f32.gmra.mxu0 %v1469
    %v1471 = vpop.f32.mrf.mxu0
    %v1472 = vadd.f32 %v1231, %v1471
    %v1473 = vpop.f32.mrf.mxu0
    %1474 = vmatprep.mubr.f32.mxu0 0.0
    %v1475 = vand.u32 %v1111, 4294901760
    %1476 = vmatmul.mubr.f32.gmra.mxu0 %v1475
    %v1477 = vpop.f32.mrf.mxu0
    %v1478 = vadd.f32 %v1241, %v1477
    %v1479 = vpop.f32.mrf.mxu0
    %1480 = vmatprep.mubr.f32.mxu0 0.0
    %v1481 = vand.u32 %v1114, 4294901760
    %1482 = vmatmul.mubr.f32.gmra.mxu0 %v1481
    %v1483 = vpop.f32.mrf.mxu0
    %v1484 = vadd.f32 %v1251, %v1483
    %v1485 = vpop.f32.mrf.mxu0
    %1486 = vmatprep.mubr.f32.mxu0 0.0
    %v1487 = vand.u32 %v1117, 4294901760
    %1488 = vmatmul.mubr.f32.gmra.mxu0 %v1487
    %v1489 = vpop.f32.mrf.mxu0
    %v1490 = vadd.f32 %v1261, %v1489
    %v1491 = vpop.f32.mrf.mxu0
    %1492 = vmatprep.mubr.f32.mxu0 0.0
    %v1493 = vand.u32 %v1120, 4294901760
    %1494 = vmatmul.mubr.f32.gmra.mxu0 %v1493
    %v1495 = vpop.f32.mrf.mxu0
    %v1496 = vadd.f32 %v1271, %v1495
    %v1497 = vpop.f32.mrf.mxu0
    %1498 = vmatprep.mubr.f32.mxu0 0.0
    %v1499 = vand.u32 %v1123, 4294901760
    %1500 = vmatmul.mubr.f32.gmra.mxu0 %v1499
    %v1501 = vpop.f32.mrf.mxu0
    %v1502 = vadd.f32 %v1281, %v1501
    %v1503 = vpop.f32.mrf.mxu0
    %1504 = vmatprep.mubr.f32.mxu0 0.0
    %v1505 = vand.u32 %v1126, 4294901760
    %1506 = vmatmul.mubr.f32.gmra.mxu0 %v1505
    %v1507 = vpop.f32.mrf.mxu0
    %v1508 = vadd.f32 %v1291, %v1507
    %v1509 = vpop.f32.mrf.mxu0
    %1510 = vmatprep.mubr.f32.mxu0 0.0
    %v1511 = vand.u32 %v1129, 4294901760
    %1512 = vmatmul.mubr.f32.gmra.mxu0 %v1511
    %v1513 = vpop.f32.mrf.mxu0
    %v1514 = vadd.f32 %v1301, %v1513
    %v1515 = vpop.f32.mrf.mxu0
    %1516 = vmatprep.mubr.f32.mxu0 0.0
    %v1517 = vand.u32 %v1132, 4294901760
    %1518 = vmatmul.mubr.f32.gmra.mxu0 %v1517
    %v1519 = vpop.f32.mrf.mxu0
    %v1520 = vadd.f32 %v1311, %v1519
    %v1521 = vpop.f32.mrf.mxu0
    %1522 = vmatprep.mubr.f32.mxu0 0.0
    %v1523 = vand.u32 %v1135, 4294901760
    %1524 = vmatmul.mubr.f32.gmra.mxu0 %v1523
    %v1525 = vpop.f32.mrf.mxu0
    %v1526 = vadd.f32 %v1321, %v1525
    %v1527 = vpop.f32.mrf.mxu0
    %1528 = vmatprep.mubr.f32.mxu0 0.0
    %v1529 = vand.u32 %v1138, 4294901760
    %1530 = vmatmul.mubr.f32.gmra.mxu0 %v1529
    %v1531 = vpop.f32.mrf.mxu0
    %v1532 = vadd.f32 %v1331, %v1531
    %v1533 = vpop.f32.mrf.mxu0
    %1534 = vmatprep.mubr.f32.mxu0 0.0
    %v1535 = vand.u32 %v1141, 4294901760
    %1536 = vmatmul.mubr.f32.gmra.mxu0 %v1535
    %v1537 = vpop.f32.mrf.mxu0
    %v1538 = vadd.f32 %v1341, %v1537
    %v1539 = vpop.f32.mrf.mxu0
    %1540 = vmatprep.mubr.f32.mxu0 0.0
    %v1541 = vand.u32 %v1144, 4294901760
    %1542 = vmatmul.mubr.f32.gmra.mxu0 %v1541
    %v1543 = vpop.f32.mrf.mxu0
    %v1544 = vadd.f32 %v1351, %v1543
    %v1545 = vpop.f32.mrf.mxu0
    %1546 = vmatprep.mubr.f32.mxu0 0.0
    %v1547 = vand.u32 %v1147, 4294901760
    %1548 = vmatmul.mubr.f32.gmra.mxu0 %v1547
    %v1549 = vpop.f32.mrf.mxu0
    %v1550 = vadd.f32 %v1361, %v1549
    %v1551 = vpop.f32.mrf.mxu0
    %1552 = vmatprep.mubr.f32.mxu0 0.0
    %v1553 = vand.u32 %v1150, 4294901760
    %1554 = vmatmul.mubr.f32.gmra.mxu0 %v1553
    %v1555 = vpop.f32.mrf.mxu0
    %v1556 = vadd.f32 %v1371, %v1555
    %v1557 = vpop.f32.mrf.mxu0
    %1558 = vmatprep.mubr.f32.mxu0 0.0
    %v1559 = vand.u32 %v1153, 4294901760
    %1560 = vmatmul.mubr.f32.gmra.mxu0 %v1559
    %v1561 = vpop.f32.mrf.mxu0
    %v1562 = vadd.f32 %v1381, %v1561
    %v1563 = vpop.f32.mrf.mxu0
    %1564 = vdwg.mxu0
    %1565 = vmatprep.subr.mxu0 0.0
    %1566 = vmatpush1.msra.mxu0 0.0
    %1567 = vmatprep.subr.mxu0 0.0
    %1568 = vmatpush1.msra.mxu0 0.0
    %1569 = vmatprep.subr.mxu0 0.0
    %1570 = vmatpush1.msra.mxu0 0.0
    %1571 = vmatprep.subr.mxu0 0.0
    %1572 = vmatpush1.msra.mxu0 0.0
    %1573 = vmatprep.subr.mxu0 0.0
    %1574 = vmatpush1.msra.mxu0 0.0
    %1575 = vmatprep.subr.mxu0 0.0
    %1576 = vmatpush1.msra.mxu0 0.0
    %1577 = vmatprep.subr.mxu0 0.0
    %1578 = vmatpush1.msra.mxu0 0.0
    %1579 = vmatprep.subr.mxu0 0.0
    %1580 = vmatpush1.msra.mxu0 0.0
    %1581 = vmatprep.subr.mxu0 0.0
    %1582 = vmatpush1.msra.mxu0 0.0
    %1583 = vmatprep.subr.mxu0 0.0
    %1584 = vmatpush1.msra.mxu0 0.0
    %1585 = vmatprep.subr.mxu0 0.0
    %1586 = vmatpush1.msra.mxu0 0.0
    %1587 = vmatprep.subr.mxu0 0.0
    %1588 = vmatpush1.msra.mxu0 0.0
    %1589 = vmatprep.subr.mxu0 0.0
    %v1590 = vand.u32 %v1087, 4294901760
    %v1591 = vsub.f32 %v1087, %v1590
    %1592 = vmatpush1.msra.mxu0 %v1591
    %1593 = vmatprep.subr.mxu0 0.0
    %v1594 = vand.u32 %v1081, 4294901760
    %v1595 = vsub.f32 %v1081, %v1594
    %1596 = vmatpush1.msra.mxu0 %v1595
    %1597 = vmatprep.subr.mxu0 0.0
    %v1598 = vand.u32 %v1075, 4294901760
    %v1599 = vsub.f32 %v1075, %v1598
    %1600 = vmatpush1.msra.mxu0 %v1599
    %1601 = vmatprep.subr.mxu0 0.0
    %v1602 = vand.u32 %v1069, 4294901760
    %v1603 = vsub.f32 %v1069, %v1602
    %1604 = vmatpush1.msra.mxu0 %v1603
    %1605 = vmatprep.subr.mxu0 0.0
    %1606 = vmatpush2.msra.mxu0 0.0
    %1607 = vmatprep.subr.mxu0 0.0
    %1608 = vmatpush2.msra.mxu0 0.0
    %1609 = vmatprep.subr.mxu0 0.0
    %1610 = vmatpush2.msra.mxu0 0.0
    %1611 = vmatprep.subr.mxu0 0.0
    %1612 = vmatpush2.msra.mxu0 0.0
    %1613 = vmatprep.subr.mxu0 0.0
    %1614 = vmatpush2.msra.mxu0 0.0
    %1615 = vmatprep.subr.mxu0 0.0
    %1616 = vmatpush2.msra.mxu0 0.0
    %1617 = vmatprep.subr.mxu0 0.0
    %1618 = vmatpush2.msra.mxu0 0.0
    %1619 = vmatprep.subr.mxu0 0.0
    %1620 = vmatpush2.msra.mxu0 0.0
    %1621 = vmatprep.subr.mxu0 0.0
    %1622 = vmatpush2.msra.mxu0 0.0
    %1623 = vmatprep.subr.mxu0 0.0
    %1624 = vmatpush2.msra.mxu0 0.0
    %1625 = vmatprep.subr.mxu0 0.0
    %1626 = vmatpush2.msra.mxu0 0.0
    %1627 = vmatprep.subr.mxu0 0.0
    %1628 = vmatpush2.msra.mxu0 0.0
    %1629 = vmatprep.subr.mxu0 0.0
    %1630 = vmatpush2.msra.mxu0 0.0
    %1631 = vmatprep.subr.mxu0 0.0
    %1632 = vmatpush2.msra.mxu0 0.0
    %1633 = vmatprep.subr.mxu0 0.0
    %1634 = vmatpush2.msra.mxu0 0.0
    %1635 = vmatprep.subr.mxu0 0.0
    %1636 = vmatpush2.msra.mxu0 0.0
    %1637 = vmatprep.mubr.f32.mxu0 0.0
    %v1638 = vand.u32 %v1108, 4294901760
    %v1639 = vsub.f32 %v1108, %v1638
    %1640 = vmatmul.mubr.f32.gmra.mxu0 %v1639
    %v1641 = vpop.f32.mrf.mxu0
    %v1642 = vadd.f32 %v1472, %v1641
    %v1643 = vpop.f32.mrf.mxu0
    %1644 = vmatprep.mubr.f32.mxu0 0.0
    %v1645 = vand.u32 %v1111, 4294901760
    %v1646 = vsub.f32 %v1111, %v1645
    %1647 = vmatmul.mubr.f32.gmra.mxu0 %v1646
    %v1648 = vpop.f32.mrf.mxu0
    %v1649 = vadd.f32 %v1478, %v1648
    %v1650 = vpop.f32.mrf.mxu0
    %1651 = vmatprep.mubr.f32.mxu0 0.0
    %v1652 = vand.u32 %v1114, 4294901760
    %v1653 = vsub.f32 %v1114, %v1652
    %1654 = vmatmul.mubr.f32.gmra.mxu0 %v1653
    %v1655 = vpop.f32.mrf.mxu0
    %v1656 = vadd.f32 %v1484, %v1655
    %v1657 = vpop.f32.mrf.mxu0
    %1658 = vmatprep.mubr.f32.mxu0 0.0
    %v1659 = vand.u32 %v1117, 4294901760
    %v1660 = vsub.f32 %v1117, %v1659
    %1661 = vmatmul.mubr.f32.gmra.mxu0 %v1660
    %v1662 = vpop.f32.mrf.mxu0
    %v1663 = vadd.f32 %v1490, %v1662
    %v1664 = vpop.f32.mrf.mxu0
    %1665 = vmatprep.mubr.f32.mxu0 0.0
    %v1666 = vand.u32 %v1120, 4294901760
    %v1667 = vsub.f32 %v1120, %v1666
    %1668 = vmatmul.mubr.f32.gmra.mxu0 %v1667
    %v1669 = vpop.f32.mrf.mxu0
    %v1670 = vadd.f32 %v1496, %v1669
    %v1671 = vpop.f32.mrf.mxu0
    %1672 = vmatprep.mubr.f32.mxu0 0.0
    %v1673 = vand.u32 %v1123, 4294901760
    %v1674 = vsub.f32 %v1123, %v1673
    %1675 = vmatmul.mubr.f32.gmra.mxu0 %v1674
    %v1676 = vpop.f32.mrf.mxu0
    %v1677 = vadd.f32 %v1502, %v1676
    %v1678 = vpop.f32.mrf.mxu0
    %1679 = vmatprep.mubr.f32.mxu0 0.0
    %v1680 = vand.u32 %v1126, 4294901760
    %v1681 = vsub.f32 %v1126, %v1680
    %1682 = vmatmul.mubr.f32.gmra.mxu0 %v1681
    %v1683 = vpop.f32.mrf.mxu0
    %v1684 = vadd.f32 %v1508, %v1683
    %v1685 = vpop.f32.mrf.mxu0
    %1686 = vmatprep.mubr.f32.mxu0 0.0
    %v1687 = vand.u32 %v1129, 4294901760
    %v1688 = vsub.f32 %v1129, %v1687
    %1689 = vmatmul.mubr.f32.gmra.mxu0 %v1688
    %v1690 = vpop.f32.mrf.mxu0
    %v1691 = vadd.f32 %v1514, %v1690
    %v1692 = vpop.f32.mrf.mxu0
    %1693 = vmatprep.mubr.f32.mxu0 0.0
    %v1694 = vand.u32 %v1132, 4294901760
    %v1695 = vsub.f32 %v1132, %v1694
    %1696 = vmatmul.mubr.f32.gmra.mxu0 %v1695
    %v1697 = vpop.f32.mrf.mxu0
    %v1698 = vadd.f32 %v1520, %v1697
    %v1699 = vpop.f32.mrf.mxu0
    %1700 = vmatprep.mubr.f32.mxu0 0.0
    %v1701 = vand.u32 %v1135, 4294901760
    %v1702 = vsub.f32 %v1135, %v1701
    %1703 = vmatmul.mubr.f32.gmra.mxu0 %v1702
    %v1704 = vpop.f32.mrf.mxu0
    %v1705 = vadd.f32 %v1526, %v1704
    %v1706 = vpop.f32.mrf.mxu0
    %1707 = vmatprep.mubr.f32.mxu0 0.0
    %v1708 = vand.u32 %v1138, 4294901760
    %v1709 = vsub.f32 %v1138, %v1708
    %1710 = vmatmul.mubr.f32.gmra.mxu0 %v1709
    %v1711 = vpop.f32.mrf.mxu0
    %v1712 = vadd.f32 %v1532, %v1711
    %v1713 = vpop.f32.mrf.mxu0
    %1714 = vmatprep.mubr.f32.mxu0 0.0
    %v1715 = vand.u32 %v1141, 4294901760
    %v1716 = vsub.f32 %v1141, %v1715
    %1717 = vmatmul.mubr.f32.gmra.mxu0 %v1716
    %v1718 = vpop.f32.mrf.mxu0
    %v1719 = vadd.f32 %v1538, %v1718
    %v1720 = vpop.f32.mrf.mxu0
    %1721 = vmatprep.mubr.f32.mxu0 0.0
    %v1722 = vand.u32 %v1144, 4294901760
    %v1723 = vsub.f32 %v1144, %v1722
    %1724 = vmatmul.mubr.f32.gmra.mxu0 %v1723
    %v1725 = vpop.f32.mrf.mxu0
    %v1726 = vadd.f32 %v1544, %v1725
    %v1727 = vpop.f32.mrf.mxu0
    %1728 = vmatprep.mubr.f32.mxu0 0.0
    %v1729 = vand.u32 %v1147, 4294901760
    %v1730 = vsub.f32 %v1147, %v1729
    %1731 = vmatmul.mubr.f32.gmra.mxu0 %v1730
    %v1732 = vpop.f32.mrf.mxu0
    %v1733 = vadd.f32 %v1550, %v1732
    %v1734 = vpop.f32.mrf.mxu0
    %1735 = vmatprep.mubr.f32.mxu0 0.0
    %v1736 = vand.u32 %v1150, 4294901760
    %v1737 = vsub.f32 %v1150, %v1736
    %1738 = vmatmul.mubr.f32.gmra.mxu0 %v1737
    %v1739 = vpop.f32.mrf.mxu0
    %v1740 = vadd.f32 %v1556, %v1739
    %v1741 = vpop.f32.mrf.mxu0
    %1742 = vmatprep.mubr.f32.mxu0 0.0
    %v1743 = vand.u32 %v1153, 4294901760
    %v1744 = vsub.f32 %v1153, %v1743
    %1745 = vmatmul.mubr.f32.gmra.mxu0 %v1744
    %v1746 = vpop.f32.mrf.mxu0
    %v1747 = vadd.f32 %v1562, %v1746
    %v1748 = vpop.f32.mrf.mxu0
    %1749 = vdwg.mxu0
    %1750 = vmatprep.subr.mxu0 0.0
    %1751 = vmatpush1.msra.mxu0 0.0
    %1752 = vmatprep.subr.mxu0 0.0
    %1753 = vmatpush1.msra.mxu0 0.0
    %1754 = vmatprep.subr.mxu0 0.0
    %1755 = vmatpush1.msra.mxu0 0.0
    %1756 = vmatprep.subr.mxu0 0.0
    %1757 = vmatpush1.msra.mxu0 0.0
    %1758 = vmatprep.subr.mxu0 0.0
    %1759 = vmatpush1.msra.mxu0 0.0
    %1760 = vmatprep.subr.mxu0 0.0
    %1761 = vmatpush1.msra.mxu0 0.0
    %1762 = vmatprep.subr.mxu0 0.0
    %1763 = vmatpush1.msra.mxu0 0.0
    %1764 = vmatprep.subr.mxu0 0.0
    %1765 = vmatpush1.msra.mxu0 0.0
    %1766 = vmatprep.subr.mxu0 0.0
    %1767 = vmatpush1.msra.mxu0 0.0
    %1768 = vmatprep.subr.mxu0 0.0
    %1769 = vmatpush1.msra.mxu0 0.0
    %1770 = vmatprep.subr.mxu0 0.0
    %1771 = vmatpush1.msra.mxu0 0.0
    %1772 = vmatprep.subr.mxu0 0.0
    %1773 = vmatpush1.msra.mxu0 0.0
    %1774 = vmatprep.subr.mxu0 0.0
    %v1775 = vand.u32 %v1087, 4294901760
    %1776 = vmatpush1.msra.mxu0 %v1775
    %1777 = vmatprep.subr.mxu0 0.0
    %v1778 = vand.u32 %v1081, 4294901760
    %1779 = vmatpush1.msra.mxu0 %v1778
    %1780 = vmatprep.subr.mxu0 0.0
    %v1781 = vand.u32 %v1075, 4294901760
    %1782 = vmatpush1.msra.mxu0 %v1781
    %1783 = vmatprep.subr.mxu0 0.0
    %v1784 = vand.u32 %v1069, 4294901760
    %1785 = vmatpush1.msra.mxu0 %v1784
    %1786 = vmatprep.subr.mxu0 0.0
    %1787 = vmatpush2.msra.mxu0 0.0
    %1788 = vmatprep.subr.mxu0 0.0
    %1789 = vmatpush2.msra.mxu0 0.0
    %1790 = vmatprep.subr.mxu0 0.0
    %1791 = vmatpush2.msra.mxu0 0.0
    %1792 = vmatprep.subr.mxu0 0.0
    %1793 = vmatpush2.msra.mxu0 0.0
    %1794 = vmatprep.subr.mxu0 0.0
    %1795 = vmatpush2.msra.mxu0 0.0
    %1796 = vmatprep.subr.mxu0 0.0
    %1797 = vmatpush2.msra.mxu0 0.0
    %1798 = vmatprep.subr.mxu0 0.0
    %1799 = vmatpush2.msra.mxu0 0.0
    %1800 = vmatprep.subr.mxu0 0.0
    %1801 = vmatpush2.msra.mxu0 0.0
    %1802 = vmatprep.subr.mxu0 0.0
    %1803 = vmatpush2.msra.mxu0 0.0
    %1804 = vmatprep.subr.mxu0 0.0
    %1805 = vmatpush2.msra.mxu0 0.0
    %1806 = vmatprep.subr.mxu0 0.0
    %1807 = vmatpush2.msra.mxu0 0.0
    %1808 = vmatprep.subr.mxu0 0.0
    %1809 = vmatpush2.msra.mxu0 0.0
    %1810 = vmatprep.subr.mxu0 0.0
    %1811 = vmatpush2.msra.mxu0 0.0
    %1812 = vmatprep.subr.mxu0 0.0
    %1813 = vmatpush2.msra.mxu0 0.0
    %1814 = vmatprep.subr.mxu0 0.0
    %1815 = vmatpush2.msra.mxu0 0.0
    %1816 = vmatprep.subr.mxu0 0.0
    %1817 = vmatpush2.msra.mxu0 0.0
    %1818 = vmatprep.mubr.f32.mxu0 0.0
    %v1819 = vand.u32 %v1108, 4294901760
    %v1820 = vsub.f32 %v1108, %v1819
    %v1821 = vand.u32 %v1820, 4294901760
    %1822 = vmatmul.mubr.f32.gmra.mxu0 %v1821
    %v1823 = vpop.f32.mrf.mxu0
    %v1824 = vadd.f32 %v1642, %v1823
    %v1825 = vpop.f32.mrf.mxu0
    %1826 = vmatprep.mubr.f32.mxu0 0.0
    %v1827 = vand.u32 %v1111, 4294901760
    %v1828 = vsub.f32 %v1111, %v1827
    %v1829 = vand.u32 %v1828, 4294901760
    %1830 = vmatmul.mubr.f32.gmra.mxu0 %v1829
    %v1831 = vpop.f32.mrf.mxu0
    %v1832 = vadd.f32 %v1649, %v1831
    %v1833 = vpop.f32.mrf.mxu0
    %1834 = vmatprep.mubr.f32.mxu0 0.0
    %v1835 = vand.u32 %v1114, 4294901760
    %v1836 = vsub.f32 %v1114, %v1835
    %v1837 = vand.u32 %v1836, 4294901760
    %1838 = vmatmul.mubr.f32.gmra.mxu0 %v1837
    %v1839 = vpop.f32.mrf.mxu0
    %v1840 = vadd.f32 %v1656, %v1839
    %v1841 = vpop.f32.mrf.mxu0
    %1842 = vmatprep.mubr.f32.mxu0 0.0
    %v1843 = vand.u32 %v1117, 4294901760
    %v1844 = vsub.f32 %v1117, %v1843
    %v1845 = vand.u32 %v1844, 4294901760
    %1846 = vmatmul.mubr.f32.gmra.mxu0 %v1845
    %v1847 = vpop.f32.mrf.mxu0
    %v1848 = vadd.f32 %v1663, %v1847
    %v1849 = vpop.f32.mrf.mxu0
    %1850 = vmatprep.mubr.f32.mxu0 0.0
    %v1851 = vand.u32 %v1120, 4294901760
    %v1852 = vsub.f32 %v1120, %v1851
    %v1853 = vand.u32 %v1852, 4294901760
    %1854 = vmatmul.mubr.f32.gmra.mxu0 %v1853
    %v1855 = vpop.f32.mrf.mxu0
    %v1856 = vadd.f32 %v1670, %v1855
    %v1857 = vpop.f32.mrf.mxu0
    %1858 = vmatprep.mubr.f32.mxu0 0.0
    %v1859 = vand.u32 %v1123, 4294901760
    %v1860 = vsub.f32 %v1123, %v1859
    %v1861 = vand.u32 %v1860, 4294901760
    %1862 = vmatmul.mubr.f32.gmra.mxu0 %v1861
    %v1863 = vpop.f32.mrf.mxu0
    %v1864 = vadd.f32 %v1677, %v1863
    %v1865 = vpop.f32.mrf.mxu0
    %1866 = vmatprep.mubr.f32.mxu0 0.0
    %v1867 = vand.u32 %v1126, 4294901760
    %v1868 = vsub.f32 %v1126, %v1867
    %v1869 = vand.u32 %v1868, 4294901760
    %1870 = vmatmul.mubr.f32.gmra.mxu0 %v1869
    %v1871 = vpop.f32.mrf.mxu0
    %v1872 = vadd.f32 %v1684, %v1871
    %v1873 = vpop.f32.mrf.mxu0
    %1874 = vmatprep.mubr.f32.mxu0 0.0
    %v1875 = vand.u32 %v1129, 4294901760
    %v1876 = vsub.f32 %v1129, %v1875
    %v1877 = vand.u32 %v1876, 4294901760
    %1878 = vmatmul.mubr.f32.gmra.mxu0 %v1877
    %v1879 = vpop.f32.mrf.mxu0
    %v1880 = vadd.f32 %v1691, %v1879
    %v1881 = vpop.f32.mrf.mxu0
    %1882 = vmatprep.mubr.f32.mxu0 0.0
    %v1883 = vand.u32 %v1132, 4294901760
    %v1884 = vsub.f32 %v1132, %v1883
    %v1885 = vand.u32 %v1884, 4294901760
    %1886 = vmatmul.mubr.f32.gmra.mxu0 %v1885
    %v1887 = vpop.f32.mrf.mxu0
    %v1888 = vadd.f32 %v1698, %v1887
    %v1889 = vpop.f32.mrf.mxu0
    %1890 = vmatprep.mubr.f32.mxu0 0.0
    %v1891 = vand.u32 %v1135, 4294901760
    %v1892 = vsub.f32 %v1135, %v1891
    %v1893 = vand.u32 %v1892, 4294901760
    %1894 = vmatmul.mubr.f32.gmra.mxu0 %v1893
    %v1895 = vpop.f32.mrf.mxu0
    %v1896 = vadd.f32 %v1705, %v1895
    %v1897 = vpop.f32.mrf.mxu0
    %1898 = vmatprep.mubr.f32.mxu0 0.0
    %v1899 = vand.u32 %v1138, 4294901760
    %v1900 = vsub.f32 %v1138, %v1899
    %v1901 = vand.u32 %v1900, 4294901760
    %1902 = vmatmul.mubr.f32.gmra.mxu0 %v1901
    %v1903 = vpop.f32.mrf.mxu0
    %v1904 = vadd.f32 %v1712, %v1903
    %v1905 = vpop.f32.mrf.mxu0
    %1906 = vmatprep.mubr.f32.mxu0 0.0
    %v1907 = vand.u32 %v1141, 4294901760
    %v1908 = vsub.f32 %v1141, %v1907
    %v1909 = vand.u32 %v1908, 4294901760
    %1910 = vmatmul.mubr.f32.gmra.mxu0 %v1909
    %v1911 = vpop.f32.mrf.mxu0
    %v1912 = vadd.f32 %v1719, %v1911
    %v1913 = vpop.f32.mrf.mxu0
    %1914 = vmatprep.mubr.f32.mxu0 0.0
    %v1915 = vand.u32 %v1144, 4294901760
    %v1916 = vsub.f32 %v1144, %v1915
    %v1917 = vand.u32 %v1916, 4294901760
    %1918 = vmatmul.mubr.f32.gmra.mxu0 %v1917
    %v1919 = vpop.f32.mrf.mxu0
    %v1920 = vadd.f32 %v1726, %v1919
    %v1921 = vpop.f32.mrf.mxu0
    %1922 = vmatprep.mubr.f32.mxu0 0.0
    %v1923 = vand.u32 %v1147, 4294901760
    %v1924 = vsub.f32 %v1147, %v1923
    %v1925 = vand.u32 %v1924, 4294901760
    %1926 = vmatmul.mubr.f32.gmra.mxu0 %v1925
    %v1927 = vpop.f32.mrf.mxu0
    %v1928 = vadd.f32 %v1733, %v1927
    %v1929 = vpop.f32.mrf.mxu0
    %1930 = vmatprep.mubr.f32.mxu0 0.0
    %v1931 = vand.u32 %v1150, 4294901760
    %v1932 = vsub.f32 %v1150, %v1931
    %v1933 = vand.u32 %v1932, 4294901760
    %1934 = vmatmul.mubr.f32.gmra.mxu0 %v1933
    %v1935 = vpop.f32.mrf.mxu0
    %v1936 = vadd.f32 %v1740, %v1935
    %v1937 = vpop.f32.mrf.mxu0
    %1938 = vmatprep.mubr.f32.mxu0 0.0
    %v1939 = vand.u32 %v1153, 4294901760
    %v1940 = vsub.f32 %v1153, %v1939
    %v1941 = vand.u32 %v1940, 4294901760
    %1942 = vmatmul.mubr.f32.gmra.mxu0 %v1941
    %v1943 = vpop.f32.mrf.mxu0
    %v1944 = vadd.f32 %v1747, %v1943
    %v1945 = vpop.f32.mrf.mxu0
    %1946 = vdwg.mxu0
    %1947 = vmatprep.subr.mxu0 0.0
    %1948 = vmatpush1.msra.mxu0 0.0
    %1949 = vmatprep.subr.mxu0 0.0
    %1950 = vmatpush1.msra.mxu0 0.0
    %1951 = vmatprep.subr.mxu0 0.0
    %1952 = vmatpush1.msra.mxu0 0.0
    %1953 = vmatprep.subr.mxu0 0.0
    %1954 = vmatpush1.msra.mxu0 0.0
    %1955 = vmatprep.subr.mxu0 0.0
    %1956 = vmatpush1.msra.mxu0 0.0
    %1957 = vmatprep.subr.mxu0 0.0
    %1958 = vmatpush1.msra.mxu0 0.0
    %1959 = vmatprep.subr.mxu0 0.0
    %1960 = vmatpush1.msra.mxu0 0.0
    %1961 = vmatprep.subr.mxu0 0.0
    %1962 = vmatpush1.msra.mxu0 0.0
    %1963 = vmatprep.subr.mxu0 0.0
    %1964 = vmatpush1.msra.mxu0 0.0
    %1965 = vmatprep.subr.mxu0 0.0
    %1966 = vmatpush1.msra.mxu0 0.0
    %1967 = vmatprep.subr.mxu0 0.0
    %1968 = vmatpush1.msra.mxu0 0.0
    %1969 = vmatprep.subr.mxu0 0.0
    %1970 = vmatpush1.msra.mxu0 0.0
    %1971 = vmatprep.subr.mxu0 0.0
    %v1972 = vand.u32 %v1087, 4294901760
    %v1973 = vsub.f32 %v1087, %v1972
    %v1974 = vand.u32 %v1973, 4294901760
    %1975 = vmatpush1.msra.mxu0 %v1974
    %1976 = vmatprep.subr.mxu0 0.0
    %v1977 = vand.u32 %v1081, 4294901760
    %v1978 = vsub.f32 %v1081, %v1977
    %v1979 = vand.u32 %v1978, 4294901760
    %1980 = vmatpush1.msra.mxu0 %v1979
    %1981 = vmatprep.subr.mxu0 0.0
    %v1982 = vand.u32 %v1075, 4294901760
    %v1983 = vsub.f32 %v1075, %v1982
    %v1984 = vand.u32 %v1983, 4294901760
    %1985 = vmatpush1.msra.mxu0 %v1984
    %1986 = vmatprep.subr.mxu0 0.0
    %v1987 = vand.u32 %v1069, 4294901760
    %v1988 = vsub.f32 %v1069, %v1987
    %v1989 = vand.u32 %v1988, 4294901760
    %1990 = vmatpush1.msra.mxu0 %v1989
    %1991 = vmatprep.subr.mxu0 0.0
    %1992 = vmatpush2.msra.mxu0 0.0
    %1993 = vmatprep.subr.mxu0 0.0
    %1994 = vmatpush2.msra.mxu0 0.0
    %1995 = vmatprep.subr.mxu0 0.0
    %1996 = vmatpush2.msra.mxu0 0.0
    %1997 = vmatprep.subr.mxu0 0.0
    %1998 = vmatpush2.msra.mxu0 0.0
    %1999 = vmatprep.subr.mxu0 0.0
    %2000 = vmatpush2.msra.mxu0 0.0
    %2001 = vmatprep.subr.mxu0 0.0
    %2002 = vmatpush2.msra.mxu0 0.0
    %2003 = vmatprep.subr.mxu0 0.0
    %2004 = vmatpush2.msra.mxu0 0.0
    %2005 = vmatprep.subr.mxu0 0.0
    %2006 = vmatpush2.msra.mxu0 0.0
    %2007 = vmatprep.subr.mxu0 0.0
    %2008 = vmatpush2.msra.mxu0 0.0
    %2009 = vmatprep.subr.mxu0 0.0
    %2010 = vmatpush2.msra.mxu0 0.0
    %2011 = vmatprep.subr.mxu0 0.0
    %2012 = vmatpush2.msra.mxu0 0.0
    %2013 = vmatprep.subr.mxu0 0.0
    %2014 = vmatpush2.msra.mxu0 0.0
    %2015 = vmatprep.subr.mxu0 0.0
    %2016 = vmatpush2.msra.mxu0 0.0
    %2017 = vmatprep.subr.mxu0 0.0
    %2018 = vmatpush2.msra.mxu0 0.0
    %2019 = vmatprep.subr.mxu0 0.0
    %2020 = vmatpush2.msra.mxu0 0.0
    %2021 = vmatprep.subr.mxu0 0.0
    %2022 = vmatpush2.msra.mxu0 0.0
    %2023 = vmatprep.mubr.f32.mxu0 0.0
    %v2024 = vand.u32 %v1108, 4294901760
    %2025 = vmatmul.mubr.f32.gmra.mxu0 %v2024
    %v2026 = vpop.f32.mrf.mxu0
    %v2027 = vadd.f32 %v1824, %v2026
    %v2028 = vpop.f32.mrf.mxu0
    %2029 = vmatprep.mubr.f32.mxu0 0.0
    %v2030 = vand.u32 %v1111, 4294901760
    %2031 = vmatmul.mubr.f32.gmra.mxu0 %v2030
    %v2032 = vpop.f32.mrf.mxu0
    %v2033 = vadd.f32 %v1832, %v2032
    %v2034 = vpop.f32.mrf.mxu0
    %2035 = vmatprep.mubr.f32.mxu0 0.0
    %v2036 = vand.u32 %v1114, 4294901760
    %2037 = vmatmul.mubr.f32.gmra.mxu0 %v2036
    %v2038 = vpop.f32.mrf.mxu0
    %v2039 = vadd.f32 %v1840, %v2038
    %v2040 = vpop.f32.mrf.mxu0
    %2041 = vmatprep.mubr.f32.mxu0 0.0
    %v2042 = vand.u32 %v1117, 4294901760
    %2043 = vmatmul.mubr.f32.gmra.mxu0 %v2042
    %v2044 = vpop.f32.mrf.mxu0
    %v2045 = vadd.f32 %v1848, %v2044
    %v2046 = vpop.f32.mrf.mxu0
    %2047 = vmatprep.mubr.f32.mxu0 0.0
    %v2048 = vand.u32 %v1120, 4294901760
    %2049 = vmatmul.mubr.f32.gmra.mxu0 %v2048
    %v2050 = vpop.f32.mrf.mxu0
    %v2051 = vadd.f32 %v1856, %v2050
    %v2052 = vpop.f32.mrf.mxu0
    %2053 = vmatprep.mubr.f32.mxu0 0.0
    %v2054 = vand.u32 %v1123, 4294901760
    %2055 = vmatmul.mubr.f32.gmra.mxu0 %v2054
    %v2056 = vpop.f32.mrf.mxu0
    %v2057 = vadd.f32 %v1864, %v2056
    %v2058 = vpop.f32.mrf.mxu0
    %2059 = vmatprep.mubr.f32.mxu0 0.0
    %v2060 = vand.u32 %v1126, 4294901760
    %2061 = vmatmul.mubr.f32.gmra.mxu0 %v2060
    %v2062 = vpop.f32.mrf.mxu0
    %v2063 = vadd.f32 %v1872, %v2062
    %v2064 = vpop.f32.mrf.mxu0
    %2065 = vmatprep.mubr.f32.mxu0 0.0
    %v2066 = vand.u32 %v1129, 4294901760
    %2067 = vmatmul.mubr.f32.gmra.mxu0 %v2066
    %v2068 = vpop.f32.mrf.mxu0
    %v2069 = vadd.f32 %v1880, %v2068
    %v2070 = vpop.f32.mrf.mxu0
    %2071 = vmatprep.mubr.f32.mxu0 0.0
    %v2072 = vand.u32 %v1132, 4294901760
    %2073 = vmatmul.mubr.f32.gmra.mxu0 %v2072
    %v2074 = vpop.f32.mrf.mxu0
    %v2075 = vadd.f32 %v1888, %v2074
    %v2076 = vpop.f32.mrf.mxu0
    %2077 = vmatprep.mubr.f32.mxu0 0.0
    %v2078 = vand.u32 %v1135, 4294901760
    %2079 = vmatmul.mubr.f32.gmra.mxu0 %v2078
    %v2080 = vpop.f32.mrf.mxu0
    %v2081 = vadd.f32 %v1896, %v2080
    %v2082 = vpop.f32.mrf.mxu0
    %2083 = vmatprep.mubr.f32.mxu0 0.0
    %v2084 = vand.u32 %v1138, 4294901760
    %2085 = vmatmul.mubr.f32.gmra.mxu0 %v2084
    %v2086 = vpop.f32.mrf.mxu0
    %v2087 = vadd.f32 %v1904, %v2086
    %v2088 = vpop.f32.mrf.mxu0
    %2089 = vmatprep.mubr.f32.mxu0 0.0
    %v2090 = vand.u32 %v1141, 4294901760
    %2091 = vmatmul.mubr.f32.gmra.mxu0 %v2090
    %v2092 = vpop.f32.mrf.mxu0
    %v2093 = vadd.f32 %v1912, %v2092
    %v2094 = vpop.f32.mrf.mxu0
    %2095 = vmatprep.mubr.f32.mxu0 0.0
    %v2096 = vand.u32 %v1144, 4294901760
    %2097 = vmatmul.mubr.f32.gmra.mxu0 %v2096
    %v2098 = vpop.f32.mrf.mxu0
    %v2099 = vadd.f32 %v1920, %v2098
    %v2100 = vpop.f32.mrf.mxu0
    %2101 = vmatprep.mubr.f32.mxu0 0.0
    %v2102 = vand.u32 %v1147, 4294901760
    %2103 = vmatmul.mubr.f32.gmra.mxu0 %v2102
    %v2104 = vpop.f32.mrf.mxu0
    %v2105 = vadd.f32 %v1928, %v2104
    %v2106 = vpop.f32.mrf.mxu0
    %2107 = vmatprep.mubr.f32.mxu0 0.0
    %v2108 = vand.u32 %v1150, 4294901760
    %2109 = vmatmul.mubr.f32.gmra.mxu0 %v2108
    %v2110 = vpop.f32.mrf.mxu0
    %v2111 = vadd.f32 %v1936, %v2110
    %v2112 = vpop.f32.mrf.mxu0
    %2113 = vmatprep.mubr.f32.mxu0 0.0
    %v2114 = vand.u32 %v1153, 4294901760
    %2115 = vmatmul.mubr.f32.gmra.mxu0 %v2114
    %v2116 = vpop.f32.mrf.mxu0
    %v2117 = vadd.f32 %v1944, %v2116
    %v2118 = vpop.f32.mrf.mxu0
    %2119 = vdwg.mxu0
    %2120 = vmatprep.subr.mxu0 0.0
    %2121 = vmatpush1.msra.mxu0 0.0
    %2122 = vmatprep.subr.mxu0 0.0
    %2123 = vmatpush1.msra.mxu0 0.0
    %2124 = vmatprep.subr.mxu0 0.0
    %2125 = vmatpush1.msra.mxu0 0.0
    %2126 = vmatprep.subr.mxu0 0.0
    %2127 = vmatpush1.msra.mxu0 0.0
    %2128 = vmatprep.subr.mxu0 0.0
    %2129 = vmatpush1.msra.mxu0 0.0
    %2130 = vmatprep.subr.mxu0 0.0
    %2131 = vmatpush1.msra.mxu0 0.0
    %2132 = vmatprep.subr.mxu0 0.0
    %2133 = vmatpush1.msra.mxu0 0.0
    %2134 = vmatprep.subr.mxu0 0.0
    %2135 = vmatpush1.msra.mxu0 0.0
    %2136 = vmatprep.subr.mxu0 0.0
    %2137 = vmatpush1.msra.mxu0 0.0
    %2138 = vmatprep.subr.mxu0 0.0
    %2139 = vmatpush1.msra.mxu0 0.0
    %2140 = vmatprep.subr.mxu0 0.0
    %2141 = vmatpush1.msra.mxu0 0.0
    %2142 = vmatprep.subr.mxu0 0.0
    %2143 = vmatpush1.msra.mxu0 0.0
    %2144 = vmatprep.subr.mxu0 0.0
    %v2145 = vand.u32 %v1087, 4294901760
    %2146 = vmatpush1.msra.mxu0 %v2145
    %2147 = vmatprep.subr.mxu0 0.0
    %v2148 = vand.u32 %v1081, 4294901760
    %2149 = vmatpush1.msra.mxu0 %v2148
    %2150 = vmatprep.subr.mxu0 0.0
    %v2151 = vand.u32 %v1075, 4294901760
    %2152 = vmatpush1.msra.mxu0 %v2151
    %2153 = vmatprep.subr.mxu0 0.0
    %v2154 = vand.u32 %v1069, 4294901760
    %2155 = vmatpush1.msra.mxu0 %v2154
    %2156 = vmatprep.subr.mxu0 0.0
    %2157 = vmatpush2.msra.mxu0 0.0
    %2158 = vmatprep.subr.mxu0 0.0
    %2159 = vmatpush2.msra.mxu0 0.0
    %2160 = vmatprep.subr.mxu0 0.0
    %2161 = vmatpush2.msra.mxu0 0.0
    %2162 = vmatprep.subr.mxu0 0.0
    %2163 = vmatpush2.msra.mxu0 0.0
    %2164 = vmatprep.subr.mxu0 0.0
    %2165 = vmatpush2.msra.mxu0 0.0
    %2166 = vmatprep.subr.mxu0 0.0
    %2167 = vmatpush2.msra.mxu0 0.0
    %2168 = vmatprep.subr.mxu0 0.0
    %2169 = vmatpush2.msra.mxu0 0.0
    %2170 = vmatprep.subr.mxu0 0.0
    %2171 = vmatpush2.msra.mxu0 0.0
    %2172 = vmatprep.subr.mxu0 0.0
    %2173 = vmatpush2.msra.mxu0 0.0
    %2174 = vmatprep.subr.mxu0 0.0
    %2175 = vmatpush2.msra.mxu0 0.0
    %2176 = vmatprep.subr.mxu0 0.0
    %2177 = vmatpush2.msra.mxu0 0.0
    %2178 = vmatprep.subr.mxu0 0.0
    %2179 = vmatpush2.msra.mxu0 0.0
    %2180 = vmatprep.subr.mxu0 0.0
    %2181 = vmatpush2.msra.mxu0 0.0
    %2182 = vmatprep.subr.mxu0 0.0
    %2183 = vmatpush2.msra.mxu0 0.0
    %2184 = vmatprep.subr.mxu0 0.0
    %2185 = vmatpush2.msra.mxu0 0.0
    %2186 = vmatprep.subr.mxu0 0.0
    %2187 = vmatpush2.msra.mxu0 0.0
    %2188 = vmatprep.mubr.f32.mxu0 0.0
    %v2189 = vand.u32 %v1108, 4294901760
    %2190 = vmatmul.mubr.f32.gmra.mxu0 %v2189
    %v2191 = vpop.f32.mrf.mxu0
    %v2192 = vadd.f32 %v2027, %v2191
    %v2193 = vpop.f32.mrf.mxu0
    %2194 = vmatprep.mubr.f32.mxu0 0.0
    %v2195 = vand.u32 %v1111, 4294901760
    %2196 = vmatmul.mubr.f32.gmra.mxu0 %v2195
    %v2197 = vpop.f32.mrf.mxu0
    %v2198 = vadd.f32 %v2033, %v2197
    %v2199 = vpop.f32.mrf.mxu0
    %2200 = vmatprep.mubr.f32.mxu0 0.0
    %v2201 = vand.u32 %v1114, 4294901760
    %2202 = vmatmul.mubr.f32.gmra.mxu0 %v2201
    %v2203 = vpop.f32.mrf.mxu0
    %v2204 = vadd.f32 %v2039, %v2203
    %v2205 = vpop.f32.mrf.mxu0
    %2206 = vmatprep.mubr.f32.mxu0 0.0
    %v2207 = vand.u32 %v1117, 4294901760
    %2208 = vmatmul.mubr.f32.gmra.mxu0 %v2207
    %v2209 = vpop.f32.mrf.mxu0
    %v2210 = vadd.f32 %v2045, %v2209
    %v2211 = vpop.f32.mrf.mxu0
    %2212 = vmatprep.mubr.f32.mxu0 0.0
    %v2213 = vand.u32 %v1120, 4294901760
    %2214 = vmatmul.mubr.f32.gmra.mxu0 %v2213
    %v2215 = vpop.f32.mrf.mxu0
    %v2216 = vadd.f32 %v2051, %v2215
    %v2217 = vpop.f32.mrf.mxu0
    %2218 = vmatprep.mubr.f32.mxu0 0.0
    %v2219 = vand.u32 %v1123, 4294901760
    %2220 = vmatmul.mubr.f32.gmra.mxu0 %v2219
    %v2221 = vpop.f32.mrf.mxu0
    %v2222 = vadd.f32 %v2057, %v2221
    %v2223 = vpop.f32.mrf.mxu0
    %2224 = vmatprep.mubr.f32.mxu0 0.0
    %v2225 = vand.u32 %v1126, 4294901760
    %2226 = vmatmul.mubr.f32.gmra.mxu0 %v2225
    %v2227 = vpop.f32.mrf.mxu0
    %v2228 = vadd.f32 %v2063, %v2227
    %v2229 = vpop.f32.mrf.mxu0
    %2230 = vmatprep.mubr.f32.mxu0 0.0
    %v2231 = vand.u32 %v1129, 4294901760
    %2232 = vmatmul.mubr.f32.gmra.mxu0 %v2231
    %v2233 = vpop.f32.mrf.mxu0
    %v2234 = vadd.f32 %v2069, %v2233
    %v2235 = vpop.f32.mrf.mxu0
    %2236 = vmatprep.mubr.f32.mxu0 0.0
    %v2237 = vand.u32 %v1132, 4294901760
    %2238 = vmatmul.mubr.f32.gmra.mxu0 %v2237
    %v2239 = vpop.f32.mrf.mxu0
    %v2240 = vadd.f32 %v2075, %v2239
    %v2241 = vpop.f32.mrf.mxu0
    %2242 = vmatprep.mubr.f32.mxu0 0.0
    %v2243 = vand.u32 %v1135, 4294901760
    %2244 = vmatmul.mubr.f32.gmra.mxu0 %v2243
    %v2245 = vpop.f32.mrf.mxu0
    %v2246 = vadd.f32 %v2081, %v2245
    %v2247 = vpop.f32.mrf.mxu0
    %2248 = vmatprep.mubr.f32.mxu0 0.0
    %v2249 = vand.u32 %v1138, 4294901760
    %2250 = vmatmul.mubr.f32.gmra.mxu0 %v2249
    %v2251 = vpop.f32.mrf.mxu0
    %v2252 = vadd.f32 %v2087, %v2251
    %v2253 = vpop.f32.mrf.mxu0
    %2254 = vmatprep.mubr.f32.mxu0 0.0
    %v2255 = vand.u32 %v1141, 4294901760
    %2256 = vmatmul.mubr.f32.gmra.mxu0 %v2255
    %v2257 = vpop.f32.mrf.mxu0
    %v2258 = vadd.f32 %v2093, %v2257
    %v2259 = vpop.f32.mrf.mxu0
    %2260 = vmatprep.mubr.f32.mxu0 0.0
    %v2261 = vand.u32 %v1144, 4294901760
    %2262 = vmatmul.mubr.f32.gmra.mxu0 %v2261
    %v2263 = vpop.f32.mrf.mxu0
    %v2264 = vadd.f32 %v2099, %v2263
    %v2265 = vpop.f32.mrf.mxu0
    %2266 = vmatprep.mubr.f32.mxu0 0.0
    %v2267 = vand.u32 %v1147, 4294901760
    %2268 = vmatmul.mubr.f32.gmra.mxu0 %v2267
    %v2269 = vpop.f32.mrf.mxu0
    %v2270 = vadd.f32 %v2105, %v2269
    %v2271 = vpop.f32.mrf.mxu0
    %2272 = vmatprep.mubr.f32.mxu0 0.0
    %v2273 = vand.u32 %v1150, 4294901760
    %2274 = vmatmul.mubr.f32.gmra.mxu0 %v2273
    %v2275 = vpop.f32.mrf.mxu0
    %v2276 = vadd.f32 %v2111, %v2275
    %v2277 = vpop.f32.mrf.mxu0
    %2278 = vmatprep.mubr.f32.mxu0 0.0
    %v2279 = vand.u32 %v1153, 4294901760
    %2280 = vmatmul.mubr.f32.gmra.mxu0 %v2279
    %v2281 = vpop.f32.mrf.mxu0
    %v2282 = vadd.f32 %v2117, %v2281
    %v2283 = vpop.f32.mrf.mxu0
    %2284 = vdwg.mxu0
    %v2285 = vld [vmem:[%s4] sm:$0xff]
    %v2286 = vld [vmem:[%s4 + $0x8] sm:$0xff]
    %v2287 = vld [vmem:[%s4 + $0x10] sm:$0xff]
    %v2288 = vld [vmem:[%s4 + $0x18] sm:$0xff]
    %v2289 = vld [vmem:[%s4 + $0x20] sm:$0xff]
    %v2290 = vld [vmem:[%s4 + $0x28] sm:$0xff]
    %v2291 = vld [vmem:[%s4 + $0x30] sm:$0xff]
    %v2292 = vld [vmem:[%s4 + $0x38] sm:$0xff]
    %v2293 = vld [vmem:[%s4 + $0x40] sm:$0xff]
    %v2294 = vld [vmem:[%s4 + $0x48] sm:$0xff]
    %v2295 = vld [vmem:[%s4 + $0x50] sm:$0xff]
    %v2296 = vld [vmem:[%s4 + $0x58] sm:$0xff]
    %v2297 = vld [vmem:[%s4 + $0x60] sm:$0xff]
    %v2298 = vld [vmem:[%s4 + $0x68] sm:$0xff]
    %v2299 = vld [vmem:[%s4 + $0x70] sm:$0xff]
    %v2300 = vld [vmem:[%s4 + $0x78] sm:$0xff]
    %v2302 = vsel %vm1106, %v2285, 0
    %v2305 = vsel %vm1106, %v2286, 0
    %v2308 = vsel %vm1106, %v2287, 0
    %v2311 = vsel %vm1106, %v2288, 0
    %v2314 = vsel %vm1106, %v2289, 0
    %v2317 = vsel %vm1106, %v2290, 0
    %v2320 = vsel %vm1106, %v2291, 0
    %v2323 = vsel %vm1106, %v2292, 0
    %v2326 = vsel %vm1106, %v2293, 0
    %v2329 = vsel %vm1106, %v2294, 0
    %v2332 = vsel %vm1106, %v2295, 0
    %v2335 = vsel %vm1106, %v2296, 0
    %v2338 = vsel %vm1106, %v2297, 0
    %v2341 = vsel %vm1106, %v2298, 0
    %v2344 = vsel %vm1106, %v2299, 0
    %v2347 = vsel %vm1106, %v2300, 0
    %2349 = vmatprep.subr.mxu0 0.0
    %2350 = vmatpush1.msra.mxu0 0.0
    %2351 = vmatprep.subr.mxu0 0.0
    %2352 = vmatpush1.msra.mxu0 0.0
    %2353 = vmatprep.subr.mxu0 0.0
    %2354 = vmatpush1.msra.mxu0 0.0
    %2355 = vmatprep.subr.mxu0 0.0
    %2356 = vmatpush1.msra.mxu0 0.0
    %2357 = vmatprep.subr.mxu0 0.0
    %2358 = vmatpush1.msra.mxu0 0.0
    %2359 = vmatprep.subr.mxu0 0.0
    %2360 = vmatpush1.msra.mxu0 0.0
    %2361 = vmatprep.subr.mxu0 0.0
    %2362 = vmatpush1.msra.mxu0 0.0
    %2363 = vmatprep.subr.mxu0 0.0
    %2364 = vmatpush1.msra.mxu0 0.0
    %2365 = vmatprep.subr.mxu0 0.0
    %2366 = vmatpush1.msra.mxu0 0.0
    %2367 = vmatprep.subr.mxu0 0.0
    %2368 = vmatpush1.msra.mxu0 0.0
    %2369 = vmatprep.subr.mxu0 0.0
    %2370 = vmatpush1.msra.mxu0 0.0
    %2371 = vmatprep.subr.mxu0 0.0
    %2372 = vmatpush1.msra.mxu0 0.0
    %2373 = vmatprep.subr.mxu0 0.0
    %v2374 = vand.u32 %v1087, 4294901760
    %2375 = vmatpush1.msra.mxu0 %v2374
    %2376 = vmatprep.subr.mxu0 0.0
    %v2377 = vand.u32 %v1081, 4294901760
    %2378 = vmatpush1.msra.mxu0 %v2377
    %2379 = vmatprep.subr.mxu0 0.0
    %v2380 = vand.u32 %v1075, 4294901760
    %2381 = vmatpush1.msra.mxu0 %v2380
    %2382 = vmatprep.subr.mxu0 0.0
    %v2383 = vand.u32 %v1069, 4294901760
    %2384 = vmatpush1.msra.mxu0 %v2383
    %2385 = vmatprep.subr.mxu0 0.0
    %2386 = vmatpush2.msra.mxu0 0.0
    %2387 = vmatprep.subr.mxu0 0.0
    %2388 = vmatpush2.msra.mxu0 0.0
    %2389 = vmatprep.subr.mxu0 0.0
    %2390 = vmatpush2.msra.mxu0 0.0
    %2391 = vmatprep.subr.mxu0 0.0
    %2392 = vmatpush2.msra.mxu0 0.0
    %2393 = vmatprep.subr.mxu0 0.0
    %2394 = vmatpush2.msra.mxu0 0.0
    %2395 = vmatprep.subr.mxu0 0.0
    %2396 = vmatpush2.msra.mxu0 0.0
    %2397 = vmatprep.subr.mxu0 0.0
    %2398 = vmatpush2.msra.mxu0 0.0
    %2399 = vmatprep.subr.mxu0 0.0
    %2400 = vmatpush2.msra.mxu0 0.0
    %2401 = vmatprep.subr.mxu0 0.0
    %2402 = vmatpush2.msra.mxu0 0.0
    %2403 = vmatprep.subr.mxu0 0.0
    %2404 = vmatpush2.msra.mxu0 0.0
    %2405 = vmatprep.subr.mxu0 0.0
    %2406 = vmatpush2.msra.mxu0 0.0
    %2407 = vmatprep.subr.mxu0 0.0
    %2408 = vmatpush2.msra.mxu0 0.0
    %2409 = vmatprep.subr.mxu0 0.0
    %2410 = vmatpush2.msra.mxu0 0.0
    %2411 = vmatprep.subr.mxu0 0.0
    %2412 = vmatpush2.msra.mxu0 0.0
    %2413 = vmatprep.subr.mxu0 0.0
    %2414 = vmatpush2.msra.mxu0 0.0
    %2415 = vmatprep.subr.mxu0 0.0
    %2416 = vmatpush2.msra.mxu0 0.0
    %2417 = vmatprep.mubr.f32.mxu0 0.0
    %v2418 = vand.u32 %v2302, 4294901760
    %v2419 = vsub.f32 %v2302, %v2418
    %v2420 = vand.u32 %v2419, 4294901760
    %v2421 = vsub.f32 %v2419, %v2420
    %v2422 = vand.u32 %v2421, 4294901760
    %2423 = vmatmul.mubr.f32.gmra.mxu0 %v2422
    %v2424 = vpop.f32.mrf.mxu0
    %v2425 = vadd.f32 0.0, %v2424
    %v2426 = vpop.f32.mrf.mxu0
    %2427 = vmatprep.mubr.f32.mxu0 0.0
    %v2428 = vand.u32 %v2305, 4294901760
    %v2429 = vsub.f32 %v2305, %v2428
    %v2430 = vand.u32 %v2429, 4294901760
    %v2431 = vsub.f32 %v2429, %v2430
    %v2432 = vand.u32 %v2431, 4294901760
    %2433 = vmatmul.mubr.f32.gmra.mxu0 %v2432
    %v2434 = vpop.f32.mrf.mxu0
    %v2435 = vadd.f32 0.0, %v2434
    %v2436 = vpop.f32.mrf.mxu0
    %2437 = vmatprep.mubr.f32.mxu0 0.0
    %v2438 = vand.u32 %v2308, 4294901760
    %v2439 = vsub.f32 %v2308, %v2438
    %v2440 = vand.u32 %v2439, 4294901760
    %v2441 = vsub.f32 %v2439, %v2440
    %v2442 = vand.u32 %v2441, 4294901760
    %2443 = vmatmul.mubr.f32.gmra.mxu0 %v2442
    %v2444 = vpop.f32.mrf.mxu0
    %v2445 = vadd.f32 0.0, %v2444
    %v2446 = vpop.f32.mrf.mxu0
    %2447 = vmatprep.mubr.f32.mxu0 0.0
    %v2448 = vand.u32 %v2311, 4294901760
    %v2449 = vsub.f32 %v2311, %v2448
    %v2450 = vand.u32 %v2449, 4294901760
    %v2451 = vsub.f32 %v2449, %v2450
    %v2452 = vand.u32 %v2451, 4294901760
    %2453 = vmatmul.mubr.f32.gmra.mxu0 %v2452
    %v2454 = vpop.f32.mrf.mxu0
    %v2455 = vadd.f32 0.0, %v2454
    %v2456 = vpop.f32.mrf.mxu0
    %2457 = vmatprep.mubr.f32.mxu0 0.0
    %v2458 = vand.u32 %v2314, 4294901760
    %v2459 = vsub.f32 %v2314, %v2458
    %v2460 = vand.u32 %v2459, 4294901760
    %v2461 = vsub.f32 %v2459, %v2460
    %v2462 = vand.u32 %v2461, 4294901760
    %2463 = vmatmul.mubr.f32.gmra.mxu0 %v2462
    %v2464 = vpop.f32.mrf.mxu0
    %v2465 = vadd.f32 0.0, %v2464
    %v2466 = vpop.f32.mrf.mxu0
    %2467 = vmatprep.mubr.f32.mxu0 0.0
    %v2468 = vand.u32 %v2317, 4294901760
    %v2469 = vsub.f32 %v2317, %v2468
    %v2470 = vand.u32 %v2469, 4294901760
    %v2471 = vsub.f32 %v2469, %v2470
    %v2472 = vand.u32 %v2471, 4294901760
    %2473 = vmatmul.mubr.f32.gmra.mxu0 %v2472
    %v2474 = vpop.f32.mrf.mxu0
    %v2475 = vadd.f32 0.0, %v2474
    %v2476 = vpop.f32.mrf.mxu0
    %2477 = vmatprep.mubr.f32.mxu0 0.0
    %v2478 = vand.u32 %v2320, 4294901760
    %v2479 = vsub.f32 %v2320, %v2478
    %v2480 = vand.u32 %v2479, 4294901760
    %v2481 = vsub.f32 %v2479, %v2480
    %v2482 = vand.u32 %v2481, 4294901760
    %2483 = vmatmul.mubr.f32.gmra.mxu0 %v2482
    %v2484 = vpop.f32.mrf.mxu0
    %v2485 = vadd.f32 0.0, %v2484
    %v2486 = vpop.f32.mrf.mxu0
    %2487 = vmatprep.mubr.f32.mxu0 0.0
    %v2488 = vand.u32 %v2323, 4294901760
    %v2489 = vsub.f32 %v2323, %v2488
    %v2490 = vand.u32 %v2489, 4294901760
    %v2491 = vsub.f32 %v2489, %v2490
    %v2492 = vand.u32 %v2491, 4294901760
    %2493 = vmatmul.mubr.f32.gmra.mxu0 %v2492
    %v2494 = vpop.f32.mrf.mxu0
    %v2495 = vadd.f32 0.0, %v2494
    %v2496 = vpop.f32.mrf.mxu0
    %2497 = vmatprep.mubr.f32.mxu0 0.0
    %v2498 = vand.u32 %v2326, 4294901760
    %v2499 = vsub.f32 %v2326, %v2498
    %v2500 = vand.u32 %v2499, 4294901760
    %v2501 = vsub.f32 %v2499, %v2500
    %v2502 = vand.u32 %v2501, 4294901760
    %2503 = vmatmul.mubr.f32.gmra.mxu0 %v2502
    %v2504 = vpop.f32.mrf.mxu0
    %v2505 = vadd.f32 0.0, %v2504
    %v2506 = vpop.f32.mrf.mxu0
    %2507 = vmatprep.mubr.f32.mxu0 0.0
    %v2508 = vand.u32 %v2329, 4294901760
    %v2509 = vsub.f32 %v2329, %v2508
    %v2510 = vand.u32 %v2509, 4294901760
    %v2511 = vsub.f32 %v2509, %v2510
    %v2512 = vand.u32 %v2511, 4294901760
    %2513 = vmatmul.mubr.f32.gmra.mxu0 %v2512
    %v2514 = vpop.f32.mrf.mxu0
    %v2515 = vadd.f32 0.0, %v2514
    %v2516 = vpop.f32.mrf.mxu0
    %2517 = vmatprep.mubr.f32.mxu0 0.0
    %v2518 = vand.u32 %v2332, 4294901760
    %v2519 = vsub.f32 %v2332, %v2518
    %v2520 = vand.u32 %v2519, 4294901760
    %v2521 = vsub.f32 %v2519, %v2520
    %v2522 = vand.u32 %v2521, 4294901760
    %2523 = vmatmul.mubr.f32.gmra.mxu0 %v2522
    %v2524 = vpop.f32.mrf.mxu0
    %v2525 = vadd.f32 0.0, %v2524
    %v2526 = vpop.f32.mrf.mxu0
    %2527 = vmatprep.mubr.f32.mxu0 0.0
    %v2528 = vand.u32 %v2335, 4294901760
    %v2529 = vsub.f32 %v2335, %v2528
    %v2530 = vand.u32 %v2529, 4294901760
    %v2531 = vsub.f32 %v2529, %v2530
    %v2532 = vand.u32 %v2531, 4294901760
    %2533 = vmatmul.mubr.f32.gmra.mxu0 %v2532
    %v2534 = vpop.f32.mrf.mxu0
    %v2535 = vadd.f32 0.0, %v2534
    %v2536 = vpop.f32.mrf.mxu0
    %2537 = vmatprep.mubr.f32.mxu0 0.0
    %v2538 = vand.u32 %v2338, 4294901760
    %v2539 = vsub.f32 %v2338, %v2538
    %v2540 = vand.u32 %v2539, 4294901760
    %v2541 = vsub.f32 %v2539, %v2540
    %v2542 = vand.u32 %v2541, 4294901760
    %2543 = vmatmul.mubr.f32.gmra.mxu0 %v2542
    %v2544 = vpop.f32.mrf.mxu0
    %v2545 = vadd.f32 0.0, %v2544
    %v2546 = vpop.f32.mrf.mxu0
    %2547 = vmatprep.mubr.f32.mxu0 0.0
    %v2548 = vand.u32 %v2341, 4294901760
    %v2549 = vsub.f32 %v2341, %v2548
    %v2550 = vand.u32 %v2549, 4294901760
    %v2551 = vsub.f32 %v2549, %v2550
    %v2552 = vand.u32 %v2551, 4294901760
    %2553 = vmatmul.mubr.f32.gmra.mxu0 %v2552
    %v2554 = vpop.f32.mrf.mxu0
    %v2555 = vadd.f32 0.0, %v2554
    %v2556 = vpop.f32.mrf.mxu0
    %2557 = vmatprep.mubr.f32.mxu0 0.0
    %v2558 = vand.u32 %v2344, 4294901760
    %v2559 = vsub.f32 %v2344, %v2558
    %v2560 = vand.u32 %v2559, 4294901760
    %v2561 = vsub.f32 %v2559, %v2560
    %v2562 = vand.u32 %v2561, 4294901760
    %2563 = vmatmul.mubr.f32.gmra.mxu0 %v2562
    %v2564 = vpop.f32.mrf.mxu0
    %v2565 = vadd.f32 0.0, %v2564
    %v2566 = vpop.f32.mrf.mxu0
    %2567 = vmatprep.mubr.f32.mxu0 0.0
    %v2568 = vand.u32 %v2347, 4294901760
    %v2569 = vsub.f32 %v2347, %v2568
    %v2570 = vand.u32 %v2569, 4294901760
    %v2571 = vsub.f32 %v2569, %v2570
    %v2572 = vand.u32 %v2571, 4294901760
    %2573 = vmatmul.mubr.f32.gmra.mxu0 %v2572
    %v2574 = vpop.f32.mrf.mxu0
    %v2575 = vadd.f32 0.0, %v2574
    %v2576 = vpop.f32.mrf.mxu0
    %2577 = vdwg.mxu0
    %2578 = vmatprep.subr.mxu0 0.0
    %2579 = vmatpush1.msra.mxu0 0.0
    %2580 = vmatprep.subr.mxu0 0.0
    %2581 = vmatpush1.msra.mxu0 0.0
    %2582 = vmatprep.subr.mxu0 0.0
    %2583 = vmatpush1.msra.mxu0 0.0
    %2584 = vmatprep.subr.mxu0 0.0
    %2585 = vmatpush1.msra.mxu0 0.0
    %2586 = vmatprep.subr.mxu0 0.0
    %2587 = vmatpush1.msra.mxu0 0.0
    %2588 = vmatprep.subr.mxu0 0.0
    %2589 = vmatpush1.msra.mxu0 0.0
    %2590 = vmatprep.subr.mxu0 0.0
    %2591 = vmatpush1.msra.mxu0 0.0
    %2592 = vmatprep.subr.mxu0 0.0
    %2593 = vmatpush1.msra.mxu0 0.0
    %2594 = vmatprep.subr.mxu0 0.0
    %2595 = vmatpush1.msra.mxu0 0.0
    %2596 = vmatprep.subr.mxu0 0.0
    %2597 = vmatpush1.msra.mxu0 0.0
    %2598 = vmatprep.subr.mxu0 0.0
    %2599 = vmatpush1.msra.mxu0 0.0
    %2600 = vmatprep.subr.mxu0 0.0
    %2601 = vmatpush1.msra.mxu0 0.0
    %2602 = vmatprep.subr.mxu0 0.0
    %v2603 = vand.u32 %v1087, 4294901760
    %v2604 = vsub.f32 %v1087, %v2603
    %v2605 = vand.u32 %v2604, 4294901760
    %v2606 = vsub.f32 %v2604, %v2605
    %v2607 = vand.u32 %v2606, 4294901760
    %2608 = vmatpush1.msra.mxu0 %v2607
    %2609 = vmatprep.subr.mxu0 0.0
    %v2610 = vand.u32 %v1081, 4294901760
    %v2611 = vsub.f32 %v1081, %v2610
    %v2612 = vand.u32 %v2611, 4294901760
    %v2613 = vsub.f32 %v2611, %v2612
    %v2614 = vand.u32 %v2613, 4294901760
    %2615 = vmatpush1.msra.mxu0 %v2614
    %2616 = vmatprep.subr.mxu0 0.0
    %v2617 = vand.u32 %v1075, 4294901760
    %v2618 = vsub.f32 %v1075, %v2617
    %v2619 = vand.u32 %v2618, 4294901760
    %v2620 = vsub.f32 %v2618, %v2619
    %v2621 = vand.u32 %v2620, 4294901760
    %2622 = vmatpush1.msra.mxu0 %v2621
    %2623 = vmatprep.subr.mxu0 0.0
    %v2624 = vand.u32 %v1069, 4294901760
    %v2625 = vsub.f32 %v1069, %v2624
    %v2626 = vand.u32 %v2625, 4294901760
    %v2627 = vsub.f32 %v2625, %v2626
    %v2628 = vand.u32 %v2627, 4294901760
    %2629 = vmatpush1.msra.mxu0 %v2628
    %2630 = vmatprep.subr.mxu0 0.0
    %2631 = vmatpush2.msra.mxu0 0.0
    %2632 = vmatprep.subr.mxu0 0.0
    %2633 = vmatpush2.msra.mxu0 0.0
    %2634 = vmatprep.subr.mxu0 0.0
    %2635 = vmatpush2.msra.mxu0 0.0
    %2636 = vmatprep.subr.mxu0 0.0
    %2637 = vmatpush2.msra.mxu0 0.0
    %2638 = vmatprep.subr.mxu0 0.0
    %2639 = vmatpush2.msra.mxu0 0.0
    %2640 = vmatprep.subr.mxu0 0.0
    %2641 = vmatpush2.msra.mxu0 0.0
    %2642 = vmatprep.subr.mxu0 0.0
    %2643 = vmatpush2.msra.mxu0 0.0
    %2644 = vmatprep.subr.mxu0 0.0
    %2645 = vmatpush2.msra.mxu0 0.0
    %2646 = vmatprep.subr.mxu0 0.0
    %2647 = vmatpush2.msra.mxu0 0.0
    %2648 = vmatprep.subr.mxu0 0.0
    %2649 = vmatpush2.msra.mxu0 0.0
    %2650 = vmatprep.subr.mxu0 0.0
    %2651 = vmatpush2.msra.mxu0 0.0
    %2652 = vmatprep.subr.mxu0 0.0
    %2653 = vmatpush2.msra.mxu0 0.0
    %2654 = vmatprep.subr.mxu0 0.0
    %2655 = vmatpush2.msra.mxu0 0.0
    %2656 = vmatprep.subr.mxu0 0.0
    %2657 = vmatpush2.msra.mxu0 0.0
    %2658 = vmatprep.subr.mxu0 0.0
    %2659 = vmatpush2.msra.mxu0 0.0
    %2660 = vmatprep.subr.mxu0 0.0
    %2661 = vmatpush2.msra.mxu0 0.0
    %2662 = vmatprep.mubr.f32.mxu0 0.0
    %v2663 = vand.u32 %v2302, 4294901760
    %2664 = vmatmul.mubr.f32.gmra.mxu0 %v2663
    %v2665 = vpop.f32.mrf.mxu0
    %v2666 = vadd.f32 %v2425, %v2665
    %v2667 = vpop.f32.mrf.mxu0
    %2668 = vmatprep.mubr.f32.mxu0 0.0
    %v2669 = vand.u32 %v2305, 4294901760
    %2670 = vmatmul.mubr.f32.gmra.mxu0 %v2669
    %v2671 = vpop.f32.mrf.mxu0
    %v2672 = vadd.f32 %v2435, %v2671
    %v2673 = vpop.f32.mrf.mxu0
    %2674 = vmatprep.mubr.f32.mxu0 0.0
    %v2675 = vand.u32 %v2308, 4294901760
    %2676 = vmatmul.mubr.f32.gmra.mxu0 %v2675
    %v2677 = vpop.f32.mrf.mxu0
    %v2678 = vadd.f32 %v2445, %v2677
    %v2679 = vpop.f32.mrf.mxu0
    %2680 = vmatprep.mubr.f32.mxu0 0.0
    %v2681 = vand.u32 %v2311, 4294901760
    %2682 = vmatmul.mubr.f32.gmra.mxu0 %v2681
    %v2683 = vpop.f32.mrf.mxu0
    %v2684 = vadd.f32 %v2455, %v2683
    %v2685 = vpop.f32.mrf.mxu0
    %2686 = vmatprep.mubr.f32.mxu0 0.0
    %v2687 = vand.u32 %v2314, 4294901760
    %2688 = vmatmul.mubr.f32.gmra.mxu0 %v2687
    %v2689 = vpop.f32.mrf.mxu0
    %v2690 = vadd.f32 %v2465, %v2689
    %v2691 = vpop.f32.mrf.mxu0
    %2692 = vmatprep.mubr.f32.mxu0 0.0
    %v2693 = vand.u32 %v2317, 4294901760
    %2694 = vmatmul.mubr.f32.gmra.mxu0 %v2693
    %v2695 = vpop.f32.mrf.mxu0
    %v2696 = vadd.f32 %v2475, %v2695
    %v2697 = vpop.f32.mrf.mxu0
    %2698 = vmatprep.mubr.f32.mxu0 0.0
    %v2699 = vand.u32 %v2320, 4294901760
    %2700 = vmatmul.mubr.f32.gmra.mxu0 %v2699
    %v2701 = vpop.f32.mrf.mxu0
    %v2702 = vadd.f32 %v2485, %v2701
    %v2703 = vpop.f32.mrf.mxu0
    %2704 = vmatprep.mubr.f32.mxu0 0.0
    %v2705 = vand.u32 %v2323, 4294901760
    %2706 = vmatmul.mubr.f32.gmra.mxu0 %v2705
    %v2707 = vpop.f32.mrf.mxu0
    %v2708 = vadd.f32 %v2495, %v2707
    %v2709 = vpop.f32.mrf.mxu0
    %2710 = vmatprep.mubr.f32.mxu0 0.0
    %v2711 = vand.u32 %v2326, 4294901760
    %2712 = vmatmul.mubr.f32.gmra.mxu0 %v2711
    %v2713 = vpop.f32.mrf.mxu0
    %v2714 = vadd.f32 %v2505, %v2713
    %v2715 = vpop.f32.mrf.mxu0
    %2716 = vmatprep.mubr.f32.mxu0 0.0
    %v2717 = vand.u32 %v2329, 4294901760
    %2718 = vmatmul.mubr.f32.gmra.mxu0 %v2717
    %v2719 = vpop.f32.mrf.mxu0
    %v2720 = vadd.f32 %v2515, %v2719
    %v2721 = vpop.f32.mrf.mxu0
    %2722 = vmatprep.mubr.f32.mxu0 0.0
    %v2723 = vand.u32 %v2332, 4294901760
    %2724 = vmatmul.mubr.f32.gmra.mxu0 %v2723
    %v2725 = vpop.f32.mrf.mxu0
    %v2726 = vadd.f32 %v2525, %v2725
    %v2727 = vpop.f32.mrf.mxu0
    %2728 = vmatprep.mubr.f32.mxu0 0.0
    %v2729 = vand.u32 %v2335, 4294901760
    %2730 = vmatmul.mubr.f32.gmra.mxu0 %v2729
    %v2731 = vpop.f32.mrf.mxu0
    %v2732 = vadd.f32 %v2535, %v2731
    %v2733 = vpop.f32.mrf.mxu0
    %2734 = vmatprep.mubr.f32.mxu0 0.0
    %v2735 = vand.u32 %v2338, 4294901760
    %2736 = vmatmul.mubr.f32.gmra.mxu0 %v2735
    %v2737 = vpop.f32.mrf.mxu0
    %v2738 = vadd.f32 %v2545, %v2737
    %v2739 = vpop.f32.mrf.mxu0
    %2740 = vmatprep.mubr.f32.mxu0 0.0
    %v2741 = vand.u32 %v2341, 4294901760
    %2742 = vmatmul.mubr.f32.gmra.mxu0 %v2741
    %v2743 = vpop.f32.mrf.mxu0
    %v2744 = vadd.f32 %v2555, %v2743
    %v2745 = vpop.f32.mrf.mxu0
    %2746 = vmatprep.mubr.f32.mxu0 0.0
    %v2747 = vand.u32 %v2344, 4294901760
    %2748 = vmatmul.mubr.f32.gmra.mxu0 %v2747
    %v2749 = vpop.f32.mrf.mxu0
    %v2750 = vadd.f32 %v2565, %v2749
    %v2751 = vpop.f32.mrf.mxu0
    %2752 = vmatprep.mubr.f32.mxu0 0.0
    %v2753 = vand.u32 %v2347, 4294901760
    %2754 = vmatmul.mubr.f32.gmra.mxu0 %v2753
    %v2755 = vpop.f32.mrf.mxu0
    %v2756 = vadd.f32 %v2575, %v2755
    %v2757 = vpop.f32.mrf.mxu0
    %2758 = vdwg.mxu0
    %2759 = vmatprep.subr.mxu0 0.0
    %2760 = vmatpush1.msra.mxu0 0.0
    %2761 = vmatprep.subr.mxu0 0.0
    %2762 = vmatpush1.msra.mxu0 0.0
    %2763 = vmatprep.subr.mxu0 0.0
    %2764 = vmatpush1.msra.mxu0 0.0
    %2765 = vmatprep.subr.mxu0 0.0
    %2766 = vmatpush1.msra.mxu0 0.0
    %2767 = vmatprep.subr.mxu0 0.0
    %2768 = vmatpush1.msra.mxu0 0.0
    %2769 = vmatprep.subr.mxu0 0.0
    %2770 = vmatpush1.msra.mxu0 0.0
    %2771 = vmatprep.subr.mxu0 0.0
    %2772 = vmatpush1.msra.mxu0 0.0
    %2773 = vmatprep.subr.mxu0 0.0
    %2774 = vmatpush1.msra.mxu0 0.0
    %2775 = vmatprep.subr.mxu0 0.0
    %2776 = vmatpush1.msra.mxu0 0.0
    %2777 = vmatprep.subr.mxu0 0.0
    %2778 = vmatpush1.msra.mxu0 0.0
    %2779 = vmatprep.subr.mxu0 0.0
    %2780 = vmatpush1.msra.mxu0 0.0
    %2781 = vmatprep.subr.mxu0 0.0
    %2782 = vmatpush1.msra.mxu0 0.0
    %2783 = vmatprep.subr.mxu0 0.0
    %v2784 = vand.u32 %v1087, 4294901760
    %v2785 = vsub.f32 %v1087, %v2784
    %2786 = vmatpush1.msra.mxu0 %v2785
    %2787 = vmatprep.subr.mxu0 0.0
    %v2788 = vand.u32 %v1081, 4294901760
    %v2789 = vsub.f32 %v1081, %v2788
    %2790 = vmatpush1.msra.mxu0 %v2789
    %2791 = vmatprep.subr.mxu0 0.0
    %v2792 = vand.u32 %v1075, 4294901760
    %v2793 = vsub.f32 %v1075, %v2792
    %2794 = vmatpush1.msra.mxu0 %v2793
    %2795 = vmatprep.subr.mxu0 0.0
    %v2796 = vand.u32 %v1069, 4294901760
    %v2797 = vsub.f32 %v1069, %v2796
    %2798 = vmatpush1.msra.mxu0 %v2797
    %2799 = vmatprep.subr.mxu0 0.0
    %2800 = vmatpush2.msra.mxu0 0.0
    %2801 = vmatprep.subr.mxu0 0.0
    %2802 = vmatpush2.msra.mxu0 0.0
    %2803 = vmatprep.subr.mxu0 0.0
    %2804 = vmatpush2.msra.mxu0 0.0
    %2805 = vmatprep.subr.mxu0 0.0
    %2806 = vmatpush2.msra.mxu0 0.0
    %2807 = vmatprep.subr.mxu0 0.0
    %2808 = vmatpush2.msra.mxu0 0.0
    %2809 = vmatprep.subr.mxu0 0.0
    %2810 = vmatpush2.msra.mxu0 0.0
    %2811 = vmatprep.subr.mxu0 0.0
    %2812 = vmatpush2.msra.mxu0 0.0
    %2813 = vmatprep.subr.mxu0 0.0
    %2814 = vmatpush2.msra.mxu0 0.0
    %2815 = vmatprep.subr.mxu0 0.0
    %2816 = vmatpush2.msra.mxu0 0.0
    %2817 = vmatprep.subr.mxu0 0.0
    %2818 = vmatpush2.msra.mxu0 0.0
    %2819 = vmatprep.subr.mxu0 0.0
    %2820 = vmatpush2.msra.mxu0 0.0
    %2821 = vmatprep.subr.mxu0 0.0
    %2822 = vmatpush2.msra.mxu0 0.0
    %2823 = vmatprep.subr.mxu0 0.0
    %2824 = vmatpush2.msra.mxu0 0.0
    %2825 = vmatprep.subr.mxu0 0.0
    %2826 = vmatpush2.msra.mxu0 0.0
    %2827 = vmatprep.subr.mxu0 0.0
    %2828 = vmatpush2.msra.mxu0 0.0
    %2829 = vmatprep.subr.mxu0 0.0
    %2830 = vmatpush2.msra.mxu0 0.0
    %2831 = vmatprep.mubr.f32.mxu0 0.0
    %v2832 = vand.u32 %v2302, 4294901760
    %v2833 = vsub.f32 %v2302, %v2832
    %2834 = vmatmul.mubr.f32.gmra.mxu0 %v2833
    %v2835 = vpop.f32.mrf.mxu0
    %v2836 = vadd.f32 %v2666, %v2835
    %v2837 = vpop.f32.mrf.mxu0
    %2838 = vmatprep.mubr.f32.mxu0 0.0
    %v2839 = vand.u32 %v2305, 4294901760
    %v2840 = vsub.f32 %v2305, %v2839
    %2841 = vmatmul.mubr.f32.gmra.mxu0 %v2840
    %v2842 = vpop.f32.mrf.mxu0
    %v2843 = vadd.f32 %v2672, %v2842
    %v2844 = vpop.f32.mrf.mxu0
    %2845 = vmatprep.mubr.f32.mxu0 0.0
    %v2846 = vand.u32 %v2308, 4294901760
    %v2847 = vsub.f32 %v2308, %v2846
    %2848 = vmatmul.mubr.f32.gmra.mxu0 %v2847
    %v2849 = vpop.f32.mrf.mxu0
    %v2850 = vadd.f32 %v2678, %v2849
    %v2851 = vpop.f32.mrf.mxu0
    %2852 = vmatprep.mubr.f32.mxu0 0.0
    %v2853 = vand.u32 %v2311, 4294901760
    %v2854 = vsub.f32 %v2311, %v2853
    %2855 = vmatmul.mubr.f32.gmra.mxu0 %v2854
    %v2856 = vpop.f32.mrf.mxu0
    %v2857 = vadd.f32 %v2684, %v2856
    %v2858 = vpop.f32.mrf.mxu0
    %2859 = vmatprep.mubr.f32.mxu0 0.0
    %v2860 = vand.u32 %v2314, 4294901760
    %v2861 = vsub.f32 %v2314, %v2860
    %2862 = vmatmul.mubr.f32.gmra.mxu0 %v2861
    %v2863 = vpop.f32.mrf.mxu0
    %v2864 = vadd.f32 %v2690, %v2863
    %v2865 = vpop.f32.mrf.mxu0
    %2866 = vmatprep.mubr.f32.mxu0 0.0
    %v2867 = vand.u32 %v2317, 4294901760
    %v2868 = vsub.f32 %v2317, %v2867
    %2869 = vmatmul.mubr.f32.gmra.mxu0 %v2868
    %v2870 = vpop.f32.mrf.mxu0
    %v2871 = vadd.f32 %v2696, %v2870
    %v2872 = vpop.f32.mrf.mxu0
    %2873 = vmatprep.mubr.f32.mxu0 0.0
    %v2874 = vand.u32 %v2320, 4294901760
    %v2875 = vsub.f32 %v2320, %v2874
    %2876 = vmatmul.mubr.f32.gmra.mxu0 %v2875
    %v2877 = vpop.f32.mrf.mxu0
    %v2878 = vadd.f32 %v2702, %v2877
    %v2879 = vpop.f32.mrf.mxu0
    %2880 = vmatprep.mubr.f32.mxu0 0.0
    %v2881 = vand.u32 %v2323, 4294901760
    %v2882 = vsub.f32 %v2323, %v2881
    %2883 = vmatmul.mubr.f32.gmra.mxu0 %v2882
    %v2884 = vpop.f32.mrf.mxu0
    %v2885 = vadd.f32 %v2708, %v2884
    %v2886 = vpop.f32.mrf.mxu0
    %2887 = vmatprep.mubr.f32.mxu0 0.0
    %v2888 = vand.u32 %v2326, 4294901760
    %v2889 = vsub.f32 %v2326, %v2888
    %2890 = vmatmul.mubr.f32.gmra.mxu0 %v2889
    %v2891 = vpop.f32.mrf.mxu0
    %v2892 = vadd.f32 %v2714, %v2891
    %v2893 = vpop.f32.mrf.mxu0
    %2894 = vmatprep.mubr.f32.mxu0 0.0
    %v2895 = vand.u32 %v2329, 4294901760
    %v2896 = vsub.f32 %v2329, %v2895
    %2897 = vmatmul.mubr.f32.gmra.mxu0 %v2896
    %v2898 = vpop.f32.mrf.mxu0
    %v2899 = vadd.f32 %v2720, %v2898
    %v2900 = vpop.f32.mrf.mxu0
    %2901 = vmatprep.mubr.f32.mxu0 0.0
    %v2902 = vand.u32 %v2332, 4294901760
    %v2903 = vsub.f32 %v2332, %v2902
    %2904 = vmatmul.mubr.f32.gmra.mxu0 %v2903
    %v2905 = vpop.f32.mrf.mxu0
    %v2906 = vadd.f32 %v2726, %v2905
    %v2907 = vpop.f32.mrf.mxu0
    %2908 = vmatprep.mubr.f32.mxu0 0.0
    %v2909 = vand.u32 %v2335, 4294901760
    %v2910 = vsub.f32 %v2335, %v2909
    %2911 = vmatmul.mubr.f32.gmra.mxu0 %v2910
    %v2912 = vpop.f32.mrf.mxu0
    %v2913 = vadd.f32 %v2732, %v2912
    %v2914 = vpop.f32.mrf.mxu0
    %2915 = vmatprep.mubr.f32.mxu0 0.0
    %v2916 = vand.u32 %v2338, 4294901760
    %v2917 = vsub.f32 %v2338, %v2916
    %2918 = vmatmul.mubr.f32.gmra.mxu0 %v2917
    %v2919 = vpop.f32.mrf.mxu0
    %v2920 = vadd.f32 %v2738, %v2919
    %v2921 = vpop.f32.mrf.mxu0
    %2922 = vmatprep.mubr.f32.mxu0 0.0
    %v2923 = vand.u32 %v2341, 4294901760
    %v2924 = vsub.f32 %v2341, %v2923
    %2925 = vmatmul.mubr.f32.gmra.mxu0 %v2924
    %v2926 = vpop.f32.mrf.mxu0
    %v2927 = vadd.f32 %v2744, %v2926
    %v2928 = vpop.f32.mrf.mxu0
    %2929 = vmatprep.mubr.f32.mxu0 0.0
    %v2930 = vand.u32 %v2344, 4294901760
    %v2931 = vsub.f32 %v2344, %v2930
    %2932 = vmatmul.mubr.f32.gmra.mxu0 %v2931
    %v2933 = vpop.f32.mrf.mxu0
    %v2934 = vadd.f32 %v2750, %v2933
    %v2935 = vpop.f32.mrf.mxu0
    %2936 = vmatprep.mubr.f32.mxu0 0.0
    %v2937 = vand.u32 %v2347, 4294901760
    %v2938 = vsub.f32 %v2347, %v2937
    %2939 = vmatmul.mubr.f32.gmra.mxu0 %v2938
    %v2940 = vpop.f32.mrf.mxu0
    %v2941 = vadd.f32 %v2756, %v2940
    %v2942 = vpop.f32.mrf.mxu0
    %2943 = vdwg.mxu0
    %2944 = vmatprep.subr.mxu0 0.0
    %2945 = vmatpush1.msra.mxu0 0.0
    %2946 = vmatprep.subr.mxu0 0.0
    %2947 = vmatpush1.msra.mxu0 0.0
    %2948 = vmatprep.subr.mxu0 0.0
    %2949 = vmatpush1.msra.mxu0 0.0
    %2950 = vmatprep.subr.mxu0 0.0
    %2951 = vmatpush1.msra.mxu0 0.0
    %2952 = vmatprep.subr.mxu0 0.0
    %2953 = vmatpush1.msra.mxu0 0.0
    %2954 = vmatprep.subr.mxu0 0.0
    %2955 = vmatpush1.msra.mxu0 0.0
    %2956 = vmatprep.subr.mxu0 0.0
    %2957 = vmatpush1.msra.mxu0 0.0
    %2958 = vmatprep.subr.mxu0 0.0
    %2959 = vmatpush1.msra.mxu0 0.0
    %2960 = vmatprep.subr.mxu0 0.0
    %2961 = vmatpush1.msra.mxu0 0.0
    %2962 = vmatprep.subr.mxu0 0.0
    %2963 = vmatpush1.msra.mxu0 0.0
    %2964 = vmatprep.subr.mxu0 0.0
    %2965 = vmatpush1.msra.mxu0 0.0
    %2966 = vmatprep.subr.mxu0 0.0
    %2967 = vmatpush1.msra.mxu0 0.0
    %2968 = vmatprep.subr.mxu0 0.0
    %v2969 = vand.u32 %v1087, 4294901760
    %2970 = vmatpush1.msra.mxu0 %v2969
    %2971 = vmatprep.subr.mxu0 0.0
    %v2972 = vand.u32 %v1081, 4294901760
    %2973 = vmatpush1.msra.mxu0 %v2972
    %2974 = vmatprep.subr.mxu0 0.0
    %v2975 = vand.u32 %v1075, 4294901760
    %2976 = vmatpush1.msra.mxu0 %v2975
    %2977 = vmatprep.subr.mxu0 0.0
    %v2978 = vand.u32 %v1069, 4294901760
    %2979 = vmatpush1.msra.mxu0 %v2978
    %2980 = vmatprep.subr.mxu0 0.0
    %2981 = vmatpush2.msra.mxu0 0.0
    %2982 = vmatprep.subr.mxu0 0.0
    %2983 = vmatpush2.msra.mxu0 0.0
    %2984 = vmatprep.subr.mxu0 0.0
    %2985 = vmatpush2.msra.mxu0 0.0
    %2986 = vmatprep.subr.mxu0 0.0
    %2987 = vmatpush2.msra.mxu0 0.0
    %2988 = vmatprep.subr.mxu0 0.0
    %2989 = vmatpush2.msra.mxu0 0.0
    %2990 = vmatprep.subr.mxu0 0.0
    %2991 = vmatpush2.msra.mxu0 0.0
    %2992 = vmatprep.subr.mxu0 0.0
    %2993 = vmatpush2.msra.mxu0 0.0
    %2994 = vmatprep.subr.mxu0 0.0
    %2995 = vmatpush2.msra.mxu0 0.0
    %2996 = vmatprep.subr.mxu0 0.0
    %2997 = vmatpush2.msra.mxu0 0.0
    %2998 = vmatprep.subr.mxu0 0.0
    %2999 = vmatpush2.msra.mxu0 0.0
    %3000 = vmatprep.subr.mxu0 0.0
    %3001 = vmatpush2.msra.mxu0 0.0
    %3002 = vmatprep.subr.mxu0 0.0
    %3003 = vmatpush2.msra.mxu0 0.0
    %3004 = vmatprep.subr.mxu0 0.0
    %3005 = vmatpush2.msra.mxu0 0.0
    %3006 = vmatprep.subr.mxu0 0.0
    %3007 = vmatpush2.msra.mxu0 0.0
    %3008 = vmatprep.subr.mxu0 0.0
    %3009 = vmatpush2.msra.mxu0 0.0
    %3010 = vmatprep.subr.mxu0 0.0
    %3011 = vmatpush2.msra.mxu0 0.0
    %3012 = vmatprep.mubr.f32.mxu0 0.0
    %v3013 = vand.u32 %v2302, 4294901760
    %v3014 = vsub.f32 %v2302, %v3013
    %v3015 = vand.u32 %v3014, 4294901760
    %3016 = vmatmul.mubr.f32.gmra.mxu0 %v3015
    %v3017 = vpop.f32.mrf.mxu0
    %v3018 = vadd.f32 %v2836, %v3017
    %v3019 = vpop.f32.mrf.mxu0
    %3020 = vmatprep.mubr.f32.mxu0 0.0
    %v3021 = vand.u32 %v2305, 4294901760
    %v3022 = vsub.f32 %v2305, %v3021
    %v3023 = vand.u32 %v3022, 4294901760
    %3024 = vmatmul.mubr.f32.gmra.mxu0 %v3023
    %v3025 = vpop.f32.mrf.mxu0
    %v3026 = vadd.f32 %v2843, %v3025
    %v3027 = vpop.f32.mrf.mxu0
    %3028 = vmatprep.mubr.f32.mxu0 0.0
    %v3029 = vand.u32 %v2308, 4294901760
    %v3030 = vsub.f32 %v2308, %v3029
    %v3031 = vand.u32 %v3030, 4294901760
    %3032 = vmatmul.mubr.f32.gmra.mxu0 %v3031
    %v3033 = vpop.f32.mrf.mxu0
    %v3034 = vadd.f32 %v2850, %v3033
    %v3035 = vpop.f32.mrf.mxu0
    %3036 = vmatprep.mubr.f32.mxu0 0.0
    %v3037 = vand.u32 %v2311, 4294901760
    %v3038 = vsub.f32 %v2311, %v3037
    %v3039 = vand.u32 %v3038, 4294901760
    %3040 = vmatmul.mubr.f32.gmra.mxu0 %v3039
    %v3041 = vpop.f32.mrf.mxu0
    %v3042 = vadd.f32 %v2857, %v3041
    %v3043 = vpop.f32.mrf.mxu0
    %3044 = vmatprep.mubr.f32.mxu0 0.0
    %v3045 = vand.u32 %v2314, 4294901760
    %v3046 = vsub.f32 %v2314, %v3045
    %v3047 = vand.u32 %v3046, 4294901760
    %3048 = vmatmul.mubr.f32.gmra.mxu0 %v3047
    %v3049 = vpop.f32.mrf.mxu0
    %v3050 = vadd.f32 %v2864, %v3049
    %v3051 = vpop.f32.mrf.mxu0
    %3052 = vmatprep.mubr.f32.mxu0 0.0
    %v3053 = vand.u32 %v2317, 4294901760
    %v3054 = vsub.f32 %v2317, %v3053
    %v3055 = vand.u32 %v3054, 4294901760
    %3056 = vmatmul.mubr.f32.gmra.mxu0 %v3055
    %v3057 = vpop.f32.mrf.mxu0
    %v3058 = vadd.f32 %v2871, %v3057
    %v3059 = vpop.f32.mrf.mxu0
    %3060 = vmatprep.mubr.f32.mxu0 0.0
    %v3061 = vand.u32 %v2320, 4294901760
    %v3062 = vsub.f32 %v2320, %v3061
    %v3063 = vand.u32 %v3062, 4294901760
    %3064 = vmatmul.mubr.f32.gmra.mxu0 %v3063
    %v3065 = vpop.f32.mrf.mxu0
    %v3066 = vadd.f32 %v2878, %v3065
    %v3067 = vpop.f32.mrf.mxu0
    %3068 = vmatprep.mubr.f32.mxu0 0.0
    %v3069 = vand.u32 %v2323, 4294901760
    %v3070 = vsub.f32 %v2323, %v3069
    %v3071 = vand.u32 %v3070, 4294901760
    %3072 = vmatmul.mubr.f32.gmra.mxu0 %v3071
    %v3073 = vpop.f32.mrf.mxu0
    %v3074 = vadd.f32 %v2885, %v3073
    %v3075 = vpop.f32.mrf.mxu0
    %3076 = vmatprep.mubr.f32.mxu0 0.0
    %v3077 = vand.u32 %v2326, 4294901760
    %v3078 = vsub.f32 %v2326, %v3077
    %v3079 = vand.u32 %v3078, 4294901760
    %3080 = vmatmul.mubr.f32.gmra.mxu0 %v3079
    %v3081 = vpop.f32.mrf.mxu0
    %v3082 = vadd.f32 %v2892, %v3081
    %v3083 = vpop.f32.mrf.mxu0
    %3084 = vmatprep.mubr.f32.mxu0 0.0
    %v3085 = vand.u32 %v2329, 4294901760
    %v3086 = vsub.f32 %v2329, %v3085
    %v3087 = vand.u32 %v3086, 4294901760
    %3088 = vmatmul.mubr.f32.gmra.mxu0 %v3087
    %v3089 = vpop.f32.mrf.mxu0
    %v3090 = vadd.f32 %v2899, %v3089
    %v3091 = vpop.f32.mrf.mxu0
    %3092 = vmatprep.mubr.f32.mxu0 0.0
    %v3093 = vand.u32 %v2332, 4294901760
    %v3094 = vsub.f32 %v2332, %v3093
    %v3095 = vand.u32 %v3094, 4294901760
    %3096 = vmatmul.mubr.f32.gmra.mxu0 %v3095
    %v3097 = vpop.f32.mrf.mxu0
    %v3098 = vadd.f32 %v2906, %v3097
    %v3099 = vpop.f32.mrf.mxu0
    %3100 = vmatprep.mubr.f32.mxu0 0.0
    %v3101 = vand.u32 %v2335, 4294901760
    %v3102 = vsub.f32 %v2335, %v3101
    %v3103 = vand.u32 %v3102, 4294901760
    %3104 = vmatmul.mubr.f32.gmra.mxu0 %v3103
    %v3105 = vpop.f32.mrf.mxu0
    %v3106 = vadd.f32 %v2913, %v3105
    %v3107 = vpop.f32.mrf.mxu0
    %3108 = vmatprep.mubr.f32.mxu0 0.0
    %v3109 = vand.u32 %v2338, 4294901760
    %v3110 = vsub.f32 %v2338, %v3109
    %v3111 = vand.u32 %v3110, 4294901760
    %3112 = vmatmul.mubr.f32.gmra.mxu0 %v3111
    %v3113 = vpop.f32.mrf.mxu0
    %v3114 = vadd.f32 %v2920, %v3113
    %v3115 = vpop.f32.mrf.mxu0
    %3116 = vmatprep.mubr.f32.mxu0 0.0
    %v3117 = vand.u32 %v2341, 4294901760
    %v3118 = vsub.f32 %v2341, %v3117
    %v3119 = vand.u32 %v3118, 4294901760
    %3120 = vmatmul.mubr.f32.gmra.mxu0 %v3119
    %v3121 = vpop.f32.mrf.mxu0
    %v3122 = vadd.f32 %v2927, %v3121
    %v3123 = vpop.f32.mrf.mxu0
    %3124 = vmatprep.mubr.f32.mxu0 0.0
    %v3125 = vand.u32 %v2344, 4294901760
    %v3126 = vsub.f32 %v2344, %v3125
    %v3127 = vand.u32 %v3126, 4294901760
    %3128 = vmatmul.mubr.f32.gmra.mxu0 %v3127
    %v3129 = vpop.f32.mrf.mxu0
    %v3130 = vadd.f32 %v2934, %v3129
    %v3131 = vpop.f32.mrf.mxu0
    %3132 = vmatprep.mubr.f32.mxu0 0.0
    %v3133 = vand.u32 %v2347, 4294901760
    %v3134 = vsub.f32 %v2347, %v3133
    %v3135 = vand.u32 %v3134, 4294901760
    %3136 = vmatmul.mubr.f32.gmra.mxu0 %v3135
    %v3137 = vpop.f32.mrf.mxu0
    %v3138 = vadd.f32 %v2941, %v3137
    %v3139 = vpop.f32.mrf.mxu0
    %3140 = vdwg.mxu0
    %3141 = vmatprep.subr.mxu0 0.0
    %3142 = vmatpush1.msra.mxu0 0.0
    %3143 = vmatprep.subr.mxu0 0.0
    %3144 = vmatpush1.msra.mxu0 0.0
    %3145 = vmatprep.subr.mxu0 0.0
    %3146 = vmatpush1.msra.mxu0 0.0
    %3147 = vmatprep.subr.mxu0 0.0
    %3148 = vmatpush1.msra.mxu0 0.0
    %3149 = vmatprep.subr.mxu0 0.0
    %3150 = vmatpush1.msra.mxu0 0.0
    %3151 = vmatprep.subr.mxu0 0.0
    %3152 = vmatpush1.msra.mxu0 0.0
    %3153 = vmatprep.subr.mxu0 0.0
    %3154 = vmatpush1.msra.mxu0 0.0
    %3155 = vmatprep.subr.mxu0 0.0
    %3156 = vmatpush1.msra.mxu0 0.0
    %3157 = vmatprep.subr.mxu0 0.0
    %3158 = vmatpush1.msra.mxu0 0.0
    %3159 = vmatprep.subr.mxu0 0.0
    %3160 = vmatpush1.msra.mxu0 0.0
    %3161 = vmatprep.subr.mxu0 0.0
    %3162 = vmatpush1.msra.mxu0 0.0
    %3163 = vmatprep.subr.mxu0 0.0
    %3164 = vmatpush1.msra.mxu0 0.0
    %3165 = vmatprep.subr.mxu0 0.0
    %v3166 = vand.u32 %v1087, 4294901760
    %v3167 = vsub.f32 %v1087, %v3166
    %v3168 = vand.u32 %v3167, 4294901760
    %3169 = vmatpush1.msra.mxu0 %v3168
    %3170 = vmatprep.subr.mxu0 0.0
    %v3171 = vand.u32 %v1081, 4294901760
    %v3172 = vsub.f32 %v1081, %v3171
    %v3173 = vand.u32 %v3172, 4294901760
    %3174 = vmatpush1.msra.mxu0 %v3173
    %3175 = vmatprep.subr.mxu0 0.0
    %v3176 = vand.u32 %v1075, 4294901760
    %v3177 = vsub.f32 %v1075, %v3176
    %v3178 = vand.u32 %v3177, 4294901760
    %3179 = vmatpush1.msra.mxu0 %v3178
    %3180 = vmatprep.subr.mxu0 0.0
    %v3181 = vand.u32 %v1069, 4294901760
    %v3182 = vsub.f32 %v1069, %v3181
    %v3183 = vand.u32 %v3182, 4294901760
    %3184 = vmatpush1.msra.mxu0 %v3183
    %3185 = vmatprep.subr.mxu0 0.0
    %3186 = vmatpush2.msra.mxu0 0.0
    %3187 = vmatprep.subr.mxu0 0.0
    %3188 = vmatpush2.msra.mxu0 0.0
    %3189 = vmatprep.subr.mxu0 0.0
    %3190 = vmatpush2.msra.mxu0 0.0
    %3191 = vmatprep.subr.mxu0 0.0
    %3192 = vmatpush2.msra.mxu0 0.0
    %3193 = vmatprep.subr.mxu0 0.0
    %3194 = vmatpush2.msra.mxu0 0.0
    %3195 = vmatprep.subr.mxu0 0.0
    %3196 = vmatpush2.msra.mxu0 0.0
    %3197 = vmatprep.subr.mxu0 0.0
    %3198 = vmatpush2.msra.mxu0 0.0
    %3199 = vmatprep.subr.mxu0 0.0
    %3200 = vmatpush2.msra.mxu0 0.0
    %3201 = vmatprep.subr.mxu0 0.0
    %3202 = vmatpush2.msra.mxu0 0.0
    %3203 = vmatprep.subr.mxu0 0.0
    %3204 = vmatpush2.msra.mxu0 0.0
    %3205 = vmatprep.subr.mxu0 0.0
    %3206 = vmatpush2.msra.mxu0 0.0
    %3207 = vmatprep.subr.mxu0 0.0
    %3208 = vmatpush2.msra.mxu0 0.0
    %3209 = vmatprep.subr.mxu0 0.0
    %3210 = vmatpush2.msra.mxu0 0.0
    %3211 = vmatprep.subr.mxu0 0.0
    %3212 = vmatpush2.msra.mxu0 0.0
    %3213 = vmatprep.subr.mxu0 0.0
    %3214 = vmatpush2.msra.mxu0 0.0
    %3215 = vmatprep.subr.mxu0 0.0
    %3216 = vmatpush2.msra.mxu0 0.0
    %3217 = vmatprep.mubr.f32.mxu0 0.0
    %v3218 = vand.u32 %v2302, 4294901760
    %3219 = vmatmul.mubr.f32.gmra.mxu0 %v3218
    %v3220 = vpop.f32.mrf.mxu0
    %v3221 = vadd.f32 %v3018, %v3220
    %v3222 = vpop.f32.mrf.mxu0
    %3223 = vmatprep.mubr.f32.mxu0 0.0
    %v3224 = vand.u32 %v2305, 4294901760
    %3225 = vmatmul.mubr.f32.gmra.mxu0 %v3224
    %v3226 = vpop.f32.mrf.mxu0
    %v3227 = vadd.f32 %v3026, %v3226
    %v3228 = vpop.f32.mrf.mxu0
    %3229 = vmatprep.mubr.f32.mxu0 0.0
    %v3230 = vand.u32 %v2308, 4294901760
    %3231 = vmatmul.mubr.f32.gmra.mxu0 %v3230
    %v3232 = vpop.f32.mrf.mxu0
    %v3233 = vadd.f32 %v3034, %v3232
    %v3234 = vpop.f32.mrf.mxu0
    %3235 = vmatprep.mubr.f32.mxu0 0.0
    %v3236 = vand.u32 %v2311, 4294901760
    %3237 = vmatmul.mubr.f32.gmra.mxu0 %v3236
    %v3238 = vpop.f32.mrf.mxu0
    %v3239 = vadd.f32 %v3042, %v3238
    %v3240 = vpop.f32.mrf.mxu0
    %3241 = vmatprep.mubr.f32.mxu0 0.0
    %v3242 = vand.u32 %v2314, 4294901760
    %3243 = vmatmul.mubr.f32.gmra.mxu0 %v3242
    %v3244 = vpop.f32.mrf.mxu0
    %v3245 = vadd.f32 %v3050, %v3244
    %v3246 = vpop.f32.mrf.mxu0
    %3247 = vmatprep.mubr.f32.mxu0 0.0
    %v3248 = vand.u32 %v2317, 4294901760
    %3249 = vmatmul.mubr.f32.gmra.mxu0 %v3248
    %v3250 = vpop.f32.mrf.mxu0
    %v3251 = vadd.f32 %v3058, %v3250
    %v3252 = vpop.f32.mrf.mxu0
    %3253 = vmatprep.mubr.f32.mxu0 0.0
    %v3254 = vand.u32 %v2320, 4294901760
    %3255 = vmatmul.mubr.f32.gmra.mxu0 %v3254
    %v3256 = vpop.f32.mrf.mxu0
    %v3257 = vadd.f32 %v3066, %v3256
    %v3258 = vpop.f32.mrf.mxu0
    %3259 = vmatprep.mubr.f32.mxu0 0.0
    %v3260 = vand.u32 %v2323, 4294901760
    %3261 = vmatmul.mubr.f32.gmra.mxu0 %v3260
    %v3262 = vpop.f32.mrf.mxu0
    %v3263 = vadd.f32 %v3074, %v3262
    %v3264 = vpop.f32.mrf.mxu0
    %3265 = vmatprep.mubr.f32.mxu0 0.0
    %v3266 = vand.u32 %v2326, 4294901760
    %3267 = vmatmul.mubr.f32.gmra.mxu0 %v3266
    %v3268 = vpop.f32.mrf.mxu0
    %v3269 = vadd.f32 %v3082, %v3268
    %v3270 = vpop.f32.mrf.mxu0
    %3271 = vmatprep.mubr.f32.mxu0 0.0
    %v3272 = vand.u32 %v2329, 4294901760
    %3273 = vmatmul.mubr.f32.gmra.mxu0 %v3272
    %v3274 = vpop.f32.mrf.mxu0
    %v3275 = vadd.f32 %v3090, %v3274
    %v3276 = vpop.f32.mrf.mxu0
    %3277 = vmatprep.mubr.f32.mxu0 0.0
    %v3278 = vand.u32 %v2332, 4294901760
    %3279 = vmatmul.mubr.f32.gmra.mxu0 %v3278
    %v3280 = vpop.f32.mrf.mxu0
    %v3281 = vadd.f32 %v3098, %v3280
    %v3282 = vpop.f32.mrf.mxu0
    %3283 = vmatprep.mubr.f32.mxu0 0.0
    %v3284 = vand.u32 %v2335, 4294901760
    %3285 = vmatmul.mubr.f32.gmra.mxu0 %v3284
    %v3286 = vpop.f32.mrf.mxu0
    %v3287 = vadd.f32 %v3106, %v3286
    %v3288 = vpop.f32.mrf.mxu0
    %3289 = vmatprep.mubr.f32.mxu0 0.0
    %v3290 = vand.u32 %v2338, 4294901760
    %3291 = vmatmul.mubr.f32.gmra.mxu0 %v3290
    %v3292 = vpop.f32.mrf.mxu0
    %v3293 = vadd.f32 %v3114, %v3292
    %v3294 = vpop.f32.mrf.mxu0
    %3295 = vmatprep.mubr.f32.mxu0 0.0
    %v3296 = vand.u32 %v2341, 4294901760
    %3297 = vmatmul.mubr.f32.gmra.mxu0 %v3296
    %v3298 = vpop.f32.mrf.mxu0
    %v3299 = vadd.f32 %v3122, %v3298
    %v3300 = vpop.f32.mrf.mxu0
    %3301 = vmatprep.mubr.f32.mxu0 0.0
    %v3302 = vand.u32 %v2344, 4294901760
    %3303 = vmatmul.mubr.f32.gmra.mxu0 %v3302
    %v3304 = vpop.f32.mrf.mxu0
    %v3305 = vadd.f32 %v3130, %v3304
    %v3306 = vpop.f32.mrf.mxu0
    %3307 = vmatprep.mubr.f32.mxu0 0.0
    %v3308 = vand.u32 %v2347, 4294901760
    %3309 = vmatmul.mubr.f32.gmra.mxu0 %v3308
    %v3310 = vpop.f32.mrf.mxu0
    %v3311 = vadd.f32 %v3138, %v3310
    %v3312 = vpop.f32.mrf.mxu0
    %3313 = vdwg.mxu0
    %3314 = vmatprep.subr.mxu0 0.0
    %3315 = vmatpush1.msra.mxu0 0.0
    %3316 = vmatprep.subr.mxu0 0.0
    %3317 = vmatpush1.msra.mxu0 0.0
    %3318 = vmatprep.subr.mxu0 0.0
    %3319 = vmatpush1.msra.mxu0 0.0
    %3320 = vmatprep.subr.mxu0 0.0
    %3321 = vmatpush1.msra.mxu0 0.0
    %3322 = vmatprep.subr.mxu0 0.0
    %3323 = vmatpush1.msra.mxu0 0.0
    %3324 = vmatprep.subr.mxu0 0.0
    %3325 = vmatpush1.msra.mxu0 0.0
    %3326 = vmatprep.subr.mxu0 0.0
    %3327 = vmatpush1.msra.mxu0 0.0
    %3328 = vmatprep.subr.mxu0 0.0
    %3329 = vmatpush1.msra.mxu0 0.0
    %3330 = vmatprep.subr.mxu0 0.0
    %3331 = vmatpush1.msra.mxu0 0.0
    %3332 = vmatprep.subr.mxu0 0.0
    %3333 = vmatpush1.msra.mxu0 0.0
    %3334 = vmatprep.subr.mxu0 0.0
    %3335 = vmatpush1.msra.mxu0 0.0
    %3336 = vmatprep.subr.mxu0 0.0
    %3337 = vmatpush1.msra.mxu0 0.0
    %3338 = vmatprep.subr.mxu0 0.0
    %v3339 = vand.u32 %v1087, 4294901760
    %3340 = vmatpush1.msra.mxu0 %v3339
    %3341 = vmatprep.subr.mxu0 0.0
    %v3342 = vand.u32 %v1081, 4294901760
    %3343 = vmatpush1.msra.mxu0 %v3342
    %3344 = vmatprep.subr.mxu0 0.0
    %v3345 = vand.u32 %v1075, 4294901760
    %3346 = vmatpush1.msra.mxu0 %v3345
    %3347 = vmatprep.subr.mxu0 0.0
    %v3348 = vand.u32 %v1069, 4294901760
    %3349 = vmatpush1.msra.mxu0 %v3348
    %3350 = vmatprep.subr.mxu0 0.0
    %3351 = vmatpush2.msra.mxu0 0.0
    %3352 = vmatprep.subr.mxu0 0.0
    %3353 = vmatpush2.msra.mxu0 0.0
    %3354 = vmatprep.subr.mxu0 0.0
    %3355 = vmatpush2.msra.mxu0 0.0
    %3356 = vmatprep.subr.mxu0 0.0
    %3357 = vmatpush2.msra.mxu0 0.0
    %3358 = vmatprep.subr.mxu0 0.0
    %3359 = vmatpush2.msra.mxu0 0.0
    %3360 = vmatprep.subr.mxu0 0.0
    %3361 = vmatpush2.msra.mxu0 0.0
    %3362 = vmatprep.subr.mxu0 0.0
    %3363 = vmatpush2.msra.mxu0 0.0
    %3364 = vmatprep.subr.mxu0 0.0
    %3365 = vmatpush2.msra.mxu0 0.0
    %3366 = vmatprep.subr.mxu0 0.0
    %3367 = vmatpush2.msra.mxu0 0.0
    %3368 = vmatprep.subr.mxu0 0.0
    %3369 = vmatpush2.msra.mxu0 0.0
    %3370 = vmatprep.subr.mxu0 0.0
    %3371 = vmatpush2.msra.mxu0 0.0
    %3372 = vmatprep.subr.mxu0 0.0
    %3373 = vmatpush2.msra.mxu0 0.0
    %3374 = vmatprep.subr.mxu0 0.0
    %3375 = vmatpush2.msra.mxu0 0.0
    %3376 = vmatprep.subr.mxu0 0.0
    %3377 = vmatpush2.msra.mxu0 0.0
    %3378 = vmatprep.subr.mxu0 0.0
    %3379 = vmatpush2.msra.mxu0 0.0
    %3380 = vmatprep.subr.mxu0 0.0
    %3381 = vmatpush2.msra.mxu0 0.0
    %3382 = vmatprep.mubr.f32.mxu0 0.0
    %v3383 = vand.u32 %v2302, 4294901760
    %3384 = vmatmul.mubr.f32.gmra.mxu0 %v3383
    %v3385 = vpop.f32.mrf.mxu0
    %v3386 = vadd.f32 %v3221, %v3385
    %v3387 = vpop.f32.mrf.mxu0
    %3388 = vmatprep.mubr.f32.mxu0 0.0
    %v3389 = vand.u32 %v2305, 4294901760
    %3390 = vmatmul.mubr.f32.gmra.mxu0 %v3389
    %v3391 = vpop.f32.mrf.mxu0
    %v3392 = vadd.f32 %v3227, %v3391
    %v3393 = vpop.f32.mrf.mxu0
    %3394 = vmatprep.mubr.f32.mxu0 0.0
    %v3395 = vand.u32 %v2308, 4294901760
    %3396 = vmatmul.mubr.f32.gmra.mxu0 %v3395
    %v3397 = vpop.f32.mrf.mxu0
    %v3398 = vadd.f32 %v3233, %v3397
    %v3399 = vpop.f32.mrf.mxu0
    %3400 = vmatprep.mubr.f32.mxu0 0.0
    %v3401 = vand.u32 %v2311, 4294901760
    %3402 = vmatmul.mubr.f32.gmra.mxu0 %v3401
    %v3403 = vpop.f32.mrf.mxu0
    %v3404 = vadd.f32 %v3239, %v3403
    %v3405 = vpop.f32.mrf.mxu0
    %3406 = vmatprep.mubr.f32.mxu0 0.0
    %v3407 = vand.u32 %v2314, 4294901760
    %3408 = vmatmul.mubr.f32.gmra.mxu0 %v3407
    %v3409 = vpop.f32.mrf.mxu0
    %v3410 = vadd.f32 %v3245, %v3409
    %v3411 = vpop.f32.mrf.mxu0
    %3412 = vmatprep.mubr.f32.mxu0 0.0
    %v3413 = vand.u32 %v2317, 4294901760
    %3414 = vmatmul.mubr.f32.gmra.mxu0 %v3413
    %v3415 = vpop.f32.mrf.mxu0
    %v3416 = vadd.f32 %v3251, %v3415
    %v3417 = vpop.f32.mrf.mxu0
    %3418 = vmatprep.mubr.f32.mxu0 0.0
    %v3419 = vand.u32 %v2320, 4294901760
    %3420 = vmatmul.mubr.f32.gmra.mxu0 %v3419
    %v3421 = vpop.f32.mrf.mxu0
    %v3422 = vadd.f32 %v3257, %v3421
    %v3423 = vpop.f32.mrf.mxu0
    %3424 = vmatprep.mubr.f32.mxu0 0.0
    %v3425 = vand.u32 %v2323, 4294901760
    %3426 = vmatmul.mubr.f32.gmra.mxu0 %v3425
    %v3427 = vpop.f32.mrf.mxu0
    %v3428 = vadd.f32 %v3263, %v3427
    %v3429 = vpop.f32.mrf.mxu0
    %3430 = vmatprep.mubr.f32.mxu0 0.0
    %v3431 = vand.u32 %v2326, 4294901760
    %3432 = vmatmul.mubr.f32.gmra.mxu0 %v3431
    %v3433 = vpop.f32.mrf.mxu0
    %v3434 = vadd.f32 %v3269, %v3433
    %v3435 = vpop.f32.mrf.mxu0
    %3436 = vmatprep.mubr.f32.mxu0 0.0
    %v3437 = vand.u32 %v2329, 4294901760
    %3438 = vmatmul.mubr.f32.gmra.mxu0 %v3437
    %v3439 = vpop.f32.mrf.mxu0
    %v3440 = vadd.f32 %v3275, %v3439
    %v3441 = vpop.f32.mrf.mxu0
    %3442 = vmatprep.mubr.f32.mxu0 0.0
    %v3443 = vand.u32 %v2332, 4294901760
    %3444 = vmatmul.mubr.f32.gmra.mxu0 %v3443
    %v3445 = vpop.f32.mrf.mxu0
    %v3446 = vadd.f32 %v3281, %v3445
    %v3447 = vpop.f32.mrf.mxu0
    %3448 = vmatprep.mubr.f32.mxu0 0.0
    %v3449 = vand.u32 %v2335, 4294901760
    %3450 = vmatmul.mubr.f32.gmra.mxu0 %v3449
    %v3451 = vpop.f32.mrf.mxu0
    %v3452 = vadd.f32 %v3287, %v3451
    %v3453 = vpop.f32.mrf.mxu0
    %3454 = vmatprep.mubr.f32.mxu0 0.0
    %v3455 = vand.u32 %v2338, 4294901760
    %3456 = vmatmul.mubr.f32.gmra.mxu0 %v3455
    %v3457 = vpop.f32.mrf.mxu0
    %v3458 = vadd.f32 %v3293, %v3457
    %v3459 = vpop.f32.mrf.mxu0
    %3460 = vmatprep.mubr.f32.mxu0 0.0
    %v3461 = vand.u32 %v2341, 4294901760
    %3462 = vmatmul.mubr.f32.gmra.mxu0 %v3461
    %v3463 = vpop.f32.mrf.mxu0
    %v3464 = vadd.f32 %v3299, %v3463
    %v3465 = vpop.f32.mrf.mxu0
    %3466 = vmatprep.mubr.f32.mxu0 0.0
    %v3467 = vand.u32 %v2344, 4294901760
    %3468 = vmatmul.mubr.f32.gmra.mxu0 %v3467
    %v3469 = vpop.f32.mrf.mxu0
    %v3470 = vadd.f32 %v3305, %v3469
    %v3471 = vpop.f32.mrf.mxu0
    %3472 = vmatprep.mubr.f32.mxu0 0.0
    %v3473 = vand.u32 %v2347, 4294901760
    %3474 = vmatmul.mubr.f32.gmra.mxu0 %v3473
    %v3475 = vpop.f32.mrf.mxu0
    %v3476 = vadd.f32 %v3311, %v3475
    %v3477 = vpop.f32.mrf.mxu0
    %3478 = vdwg.mxu0
    %v3479 = vlaneseq
    %v3480 = vshrl.u32 %v3479, 7
    %v3481 = vsub.s32 0, %v3480
    %v3482 = vrot.slane %v41, %v3481
    %vm3483 = vcmp.eq.s32.totalorder %v25, %v3482
    %vm3484 = vcmp.eq.s32.totalorder %v26, %v3482
    %vm3485 = vcmp.eq.s32.totalorder %v27, %v3482
    %vm3486 = vcmp.eq.s32.totalorder %v28, %v3482
    %vm3487 = vcmp.eq.s32.totalorder %v29, %v3482
    %vm3488 = vcmp.eq.s32.totalorder %v30, %v3482
    %vm3489 = vcmp.eq.s32.totalorder %v31, %v3482
    %vm3490 = vcmp.eq.s32.totalorder %v32, %v3482
    %vm3491 = vcmp.eq.s32.totalorder %v33, %v3482
    %vm3492 = vcmp.eq.s32.totalorder %v34, %v3482
    %vm3493 = vcmp.eq.s32.totalorder %v35, %v3482
    %vm3494 = vcmp.eq.s32.totalorder %v36, %v3482
    %vm3495 = vcmp.eq.s32.totalorder %v37, %v3482
    %vm3496 = vcmp.eq.s32.totalorder %v38, %v3482
    %vm3497 = vcmp.eq.s32.totalorder %v39, %v3482
    %vm3498 = vcmp.eq.s32.totalorder %v40, %v3482
    %v3499 = vsel %vm3483, 1, 0
    %v3500 = vsel %vm3484, 1, 0
    %v3501 = vsel %vm3485, 1, 0
    %v3502 = vsel %vm3486, 1, 0
    %v3503 = vsel %vm3487, 1, 0
    %v3504 = vsel %vm3488, 1, 0
    %v3505 = vsel %vm3489, 1, 0
    %v3506 = vsel %vm3490, 1, 0
    %v3507 = vsel %vm3491, 1, 0
    %v3508 = vsel %vm3492, 1, 0
    %v3509 = vsel %vm3493, 1, 0
    %v3510 = vsel %vm3494, 1, 0
    %v3511 = vsel %vm3495, 1, 0
    %v3512 = vsel %vm3496, 1, 0
    %v3513 = vsel %vm3497, 1, 0
    %v3514 = vsel %vm3498, 1, 0
    %v3515 = vcvt.s32.f32 %v3499
    %v3516 = vcvt.s32.f32 %v3500
    %v3517 = vcvt.s32.f32 %v3501
    %v3518 = vcvt.s32.f32 %v3502
    %v3519 = vcvt.s32.f32 %v3503
    %v3520 = vcvt.s32.f32 %v3504
    %v3521 = vcvt.s32.f32 %v3505
    %v3522 = vcvt.s32.f32 %v3506
    %v3523 = vcvt.s32.f32 %v3507
    %v3524 = vcvt.s32.f32 %v3508
    %v3525 = vcvt.s32.f32 %v3509
    %v3526 = vcvt.s32.f32 %v3510
    %v3527 = vcvt.s32.f32 %v3511
    %v3528 = vcvt.s32.f32 %v3512
    %v3529 = vcvt.s32.f32 %v3513
    %v3530 = vcvt.s32.f32 %v3514
    %v3531 = vmul.f32 %v2192, %v3515
    %v3532 = vmul.f32 %v2198, %v3516
    %v3533 = vmul.f32 %v2204, %v3517
    %v3534 = vmul.f32 %v2210, %v3518
    %v3535 = vmul.f32 %v2216, %v3519
    %v3536 = vmul.f32 %v2222, %v3520
    %v3537 = vmul.f32 %v2228, %v3521
    %v3538 = vmul.f32 %v2234, %v3522
    %v3539 = vmul.f32 %v2240, %v3523
    %v3540 = vmul.f32 %v2246, %v3524
    %v3541 = vmul.f32 %v2252, %v3525
    %v3542 = vmul.f32 %v2258, %v3526
    %v3543 = vmul.f32 %v2264, %v3527
    %v3544 = vmul.f32 %v2270, %v3528
    %v3545 = vmul.f32 %v2276, %v3529
    %v3546 = vmul.f32 %v2282, %v3530
    %v3547 = vadd.f32 %v3531, %v3532
    %v3548 = vadd.f32 %v3547, %v3533
    %v3549 = vadd.f32 %v3548, %v3534
    %v3550 = vadd.f32 %v3549, %v3535
    %v3551 = vadd.f32 %v3550, %v3536
    %v3552 = vadd.f32 %v3551, %v3537
    %v3553 = vadd.f32 %v3552, %v3538
    %v3554 = vadd.f32 %v3553, %v3539
    %v3555 = vadd.f32 %v3554, %v3540
    %v3556 = vadd.f32 %v3555, %v3541
    %v3557 = vadd.f32 %v3556, %v3542
    %v3558 = vadd.f32 %v3557, %v3543
    %v3559 = vadd.f32 %v3558, %v3544
    %v3560 = vadd.f32 %v3559, %v3545
    %v3561 = vadd.f32 %v3560, %v3546
    %v3562 = vrot.slane %v3561, 4
    %v3563 = vadd.f32 %v3561, %v3562
    %v3564 = vrot.slane %v3563, 2
    %v3565 = vadd.f32 %v3563, %v3564
    %v3566 = vrot.slane %v3565, 1
    %v3567 = vadd.f32 %v3565, %v3566
    %v3568 = vlaneseq
    %v3569 = vshrl.u32 %v3568, 7
    %v3570 = vsub.s32 0, %v3569
    %v3571 = vrot.slane %v43, %v3570
    %vm3572 = vcmp.eq.s32.totalorder %v25, %v3571
    %vm3573 = vcmp.eq.s32.totalorder %v26, %v3571
    %vm3574 = vcmp.eq.s32.totalorder %v27, %v3571
    %vm3575 = vcmp.eq.s32.totalorder %v28, %v3571
    %vm3576 = vcmp.eq.s32.totalorder %v29, %v3571
    %vm3577 = vcmp.eq.s32.totalorder %v30, %v3571
    %vm3578 = vcmp.eq.s32.totalorder %v31, %v3571
    %vm3579 = vcmp.eq.s32.totalorder %v32, %v3571
    %vm3580 = vcmp.eq.s32.totalorder %v33, %v3571
    %vm3581 = vcmp.eq.s32.totalorder %v34, %v3571
    %vm3582 = vcmp.eq.s32.totalorder %v35, %v3571
    %vm3583 = vcmp.eq.s32.totalorder %v36, %v3571
    %vm3584 = vcmp.eq.s32.totalorder %v37, %v3571
    %vm3585 = vcmp.eq.s32.totalorder %v38, %v3571
    %vm3586 = vcmp.eq.s32.totalorder %v39, %v3571
    %vm3587 = vcmp.eq.s32.totalorder %v40, %v3571
    %v3588 = vsel %vm3572, 1, 0
    %v3589 = vsel %vm3573, 1, 0
    %v3590 = vsel %vm3574, 1, 0
    %v3591 = vsel %vm3575, 1, 0
    %v3592 = vsel %vm3576, 1, 0
    %v3593 = vsel %vm3577, 1, 0
    %v3594 = vsel %vm3578, 1, 0
    %v3595 = vsel %vm3579, 1, 0
    %v3596 = vsel %vm3580, 1, 0
    %v3597 = vsel %vm3581, 1, 0
    %v3598 = vsel %vm3582, 1, 0
    %v3599 = vsel %vm3583, 1, 0
    %v3600 = vsel %vm3584, 1, 0
    %v3601 = vsel %vm3585, 1, 0
    %v3602 = vsel %vm3586, 1, 0
    %v3603 = vsel %vm3587, 1, 0
    %v3604 = vcvt.s32.f32 %v3588
    %v3605 = vcvt.s32.f32 %v3589
    %v3606 = vcvt.s32.f32 %v3590
    %v3607 = vcvt.s32.f32 %v3591
    %v3608 = vcvt.s32.f32 %v3592
    %v3609 = vcvt.s32.f32 %v3593
    %v3610 = vcvt.s32.f32 %v3594
    %v3611 = vcvt.s32.f32 %v3595
    %v3612 = vcvt.s32.f32 %v3596
    %v3613 = vcvt.s32.f32 %v3597
    %v3614 = vcvt.s32.f32 %v3598
    %v3615 = vcvt.s32.f32 %v3599
    %v3616 = vcvt.s32.f32 %v3600
    %v3617 = vcvt.s32.f32 %v3601
    %v3618 = vcvt.s32.f32 %v3602
    %v3619 = vcvt.s32.f32 %v3603
    %v3620 = vmul.f32 %v3386, %v3604
    %v3621 = vmul.f32 %v3392, %v3605
    %v3622 = vmul.f32 %v3398, %v3606
    %v3623 = vmul.f32 %v3404, %v3607
    %v3624 = vmul.f32 %v3410, %v3608
    %v3625 = vmul.f32 %v3416, %v3609
    %v3626 = vmul.f32 %v3422, %v3610
    %v3627 = vmul.f32 %v3428, %v3611
    %v3628 = vmul.f32 %v3434, %v3612
    %v3629 = vmul.f32 %v3440, %v3613
    %v3630 = vmul.f32 %v3446, %v3614
    %v3631 = vmul.f32 %v3452, %v3615
    %v3632 = vmul.f32 %v3458, %v3616
    %v3633 = vmul.f32 %v3464, %v3617
    %v3634 = vmul.f32 %v3470, %v3618
    %v3635 = vmul.f32 %v3476, %v3619
    %v3636 = vadd.f32 %v3620, %v3621
    %v3637 = vadd.f32 %v3636, %v3622
    %v3638 = vadd.f32 %v3637, %v3623
    %v3639 = vadd.f32 %v3638, %v3624
    %v3640 = vadd.f32 %v3639, %v3625
    %v3641 = vadd.f32 %v3640, %v3626
    %v3642 = vadd.f32 %v3641, %v3627
    %v3643 = vadd.f32 %v3642, %v3628
    %v3644 = vadd.f32 %v3643, %v3629
    %v3645 = vadd.f32 %v3644, %v3630
    %v3646 = vadd.f32 %v3645, %v3631
    %v3647 = vadd.f32 %v3646, %v3632
    %v3648 = vadd.f32 %v3647, %v3633
    %v3649 = vadd.f32 %v3648, %v3634
    %v3650 = vadd.f32 %v3649, %v3635
    %v3651 = vrot.slane %v3650, 4
    %v3652 = vadd.f32 %v3650, %v3651
    %v3653 = vrot.slane %v3652, 2
    %v3654 = vadd.f32 %v3652, %v3653
    %v3655 = vrot.slane %v3654, 1
    %v3656 = vadd.f32 %v3654, %v3655
    %v3657 = vsub.f32 0.0, %v3656
    %v3658 = vlaneseq
    %v3659 = vshrl.u32 %v3658, 7
    %v3660 = vsub.s32 1, %v3659
    %v3661 = vrot.slane %v43, %v3660
    %vm3662 = vcmp.eq.s32.totalorder %v25, %v3661
    %vm3663 = vcmp.eq.s32.totalorder %v26, %v3661
    %vm3664 = vcmp.eq.s32.totalorder %v27, %v3661
    %vm3665 = vcmp.eq.s32.totalorder %v28, %v3661
    %vm3666 = vcmp.eq.s32.totalorder %v29, %v3661
    %vm3667 = vcmp.eq.s32.totalorder %v30, %v3661
    %vm3668 = vcmp.eq.s32.totalorder %v31, %v3661
    %vm3669 = vcmp.eq.s32.totalorder %v32, %v3661
    %vm3670 = vcmp.eq.s32.totalorder %v33, %v3661
    %vm3671 = vcmp.eq.s32.totalorder %v34, %v3661
    %vm3672 = vcmp.eq.s32.totalorder %v35, %v3661
    %vm3673 = vcmp.eq.s32.totalorder %v36, %v3661
    %vm3674 = vcmp.eq.s32.totalorder %v37, %v3661
    %vm3675 = vcmp.eq.s32.totalorder %v38, %v3661
    %vm3676 = vcmp.eq.s32.totalorder %v39, %v3661
    %vm3677 = vcmp.eq.s32.totalorder %v40, %v3661
    %v3678 = vsel %vm3662, 1, 0
    %v3679 = vsel %vm3663, 1, 0
    %v3680 = vsel %vm3664, 1, 0
    %v3681 = vsel %vm3665, 1, 0
    %v3682 = vsel %vm3666, 1, 0
    %v3683 = vsel %vm3667, 1, 0
    %v3684 = vsel %vm3668, 1, 0
    %v3685 = vsel %vm3669, 1, 0
    %v3686 = vsel %vm3670, 1, 0
    %v3687 = vsel %vm3671, 1, 0
    %v3688 = vsel %vm3672, 1, 0
    %v3689 = vsel %vm3673, 1, 0
    %v3690 = vsel %vm3674, 1, 0
    %v3691 = vsel %vm3675, 1, 0
    %v3692 = vsel %vm3676, 1, 0
    %v3693 = vsel %vm3677, 1, 0
    %v3694 = vcvt.s32.f32 %v3678
    %v3695 = vcvt.s32.f32 %v3679
    %v3696 = vcvt.s32.f32 %v3680
    %v3697 = vcvt.s32.f32 %v3681
    %v3698 = vcvt.s32.f32 %v3682
    %v3699 = vcvt.s32.f32 %v3683
    %v3700 = vcvt.s32.f32 %v3684
    %v3701 = vcvt.s32.f32 %v3685
    %v3702 = vcvt.s32.f32 %v3686
    %v3703 = vcvt.s32.f32 %v3687
    %v3704 = vcvt.s32.f32 %v3688
    %v3705 = vcvt.s32.f32 %v3689
    %v3706 = vcvt.s32.f32 %v3690
    %v3707 = vcvt.s32.f32 %v3691
    %v3708 = vcvt.s32.f32 %v3692
    %v3709 = vcvt.s32.f32 %v3693
    %v3710 = vmul.f32 %v3386, %v3694
    %v3711 = vmul.f32 %v3392, %v3695
    %v3712 = vmul.f32 %v3398, %v3696
    %v3713 = vmul.f32 %v3404, %v3697
    %v3714 = vmul.f32 %v3410, %v3698
    %v3715 = vmul.f32 %v3416, %v3699
    %v3716 = vmul.f32 %v3422, %v3700
    %v3717 = vmul.f32 %v3428, %v3701
    %v3718 = vmul.f32 %v3434, %v3702
    %v3719 = vmul.f32 %v3440, %v3703
    %v3720 = vmul.f32 %v3446, %v3704
    %v3721 = vmul.f32 %v3452, %v3705
    %v3722 = vmul.f32 %v3458, %v3706
    %v3723 = vmul.f32 %v3464, %v3707
    %v3724 = vmul.f32 %v3470, %v3708
    %v3725 = vmul.f32 %v3476, %v3709
    %v3726 = vadd.f32 %v3710, %v3711
    %v3727 = vadd.f32 %v3726, %v3712
    %v3728 = vadd.f32 %v3727, %v3713
    %v3729 = vadd.f32 %v3728, %v3714
    %v3730 = vadd.f32 %v3729, %v3715
    %v3731 = vadd.f32 %v3730, %v3716
    %v3732 = vadd.f32 %v3731, %v3717
    %v3733 = vadd.f32 %v3732, %v3718
    %v3734 = vadd.f32 %v3733, %v3719
    %v3735 = vadd.f32 %v3734, %v3720
    %v3736 = vadd.f32 %v3735, %v3721
    %v3737 = vadd.f32 %v3736, %v3722
    %v3738 = vadd.f32 %v3737, %v3723
    %v3739 = vadd.f32 %v3738, %v3724
    %v3740 = vadd.f32 %v3739, %v3725
    %v3741 = vrot.slane %v3740, 4
    %v3742 = vadd.f32 %v3740, %v3741
    %v3743 = vrot.slane %v3742, 2
    %v3744 = vadd.f32 %v3742, %v3743
    %v3745 = vrot.slane %v3744, 1
    %v3746 = vadd.f32 %v3744, %v3745
    %v3747 = vsub.f32 0.0, %v3746
    %v3748 = vlaneseq
    %v3749 = vshrl.u32 %v3748, 7
    %v3750 = vsub.s32 2, %v3749
    %v3751 = vrot.slane %v43, %v3750
    %vm3752 = vcmp.eq.s32.totalorder %v25, %v3751
    %vm3753 = vcmp.eq.s32.totalorder %v26, %v3751
    %vm3754 = vcmp.eq.s32.totalorder %v27, %v3751
    %vm3755 = vcmp.eq.s32.totalorder %v28, %v3751
    %vm3756 = vcmp.eq.s32.totalorder %v29, %v3751
    %vm3757 = vcmp.eq.s32.totalorder %v30, %v3751
    %vm3758 = vcmp.eq.s32.totalorder %v31, %v3751
    %vm3759 = vcmp.eq.s32.totalorder %v32, %v3751
    %vm3760 = vcmp.eq.s32.totalorder %v33, %v3751
    %vm3761 = vcmp.eq.s32.totalorder %v34, %v3751
    %vm3762 = vcmp.eq.s32.totalorder %v35, %v3751
    %vm3763 = vcmp.eq.s32.totalorder %v36, %v3751
    %vm3764 = vcmp.eq.s32.totalorder %v37, %v3751
    %vm3765 = vcmp.eq.s32.totalorder %v38, %v3751
    %vm3766 = vcmp.eq.s32.totalorder %v39, %v3751
    %vm3767 = vcmp.eq.s32.totalorder %v40, %v3751
    %v3768 = vsel %vm3752, 1, 0
    %v3769 = vsel %vm3753, 1, 0
    %v3770 = vsel %vm3754, 1, 0
    %v3771 = vsel %vm3755, 1, 0
    %v3772 = vsel %vm3756, 1, 0
    %v3773 = vsel %vm3757, 1, 0
    %v3774 = vsel %vm3758, 1, 0
    %v3775 = vsel %vm3759, 1, 0
    %v3776 = vsel %vm3760, 1, 0
    %v3777 = vsel %vm3761, 1, 0
    %v3778 = vsel %vm3762, 1, 0
    %v3779 = vsel %vm3763, 1, 0
    %v3780 = vsel %vm3764, 1, 0
    %v3781 = vsel %vm3765, 1, 0
    %v3782 = vsel %vm3766, 1, 0
    %v3783 = vsel %vm3767, 1, 0
    %v3784 = vcvt.s32.f32 %v3768
    %v3785 = vcvt.s32.f32 %v3769
    %v3786 = vcvt.s32.f32 %v3770
    %v3787 = vcvt.s32.f32 %v3771
    %v3788 = vcvt.s32.f32 %v3772
    %v3789 = vcvt.s32.f32 %v3773
    %v3790 = vcvt.s32.f32 %v3774
    %v3791 = vcvt.s32.f32 %v3775
    %v3792 = vcvt.s32.f32 %v3776
    %v3793 = vcvt.s32.f32 %v3777
    %v3794 = vcvt.s32.f32 %v3778
    %v3795 = vcvt.s32.f32 %v3779
    %v3796 = vcvt.s32.f32 %v3780
    %v3797 = vcvt.s32.f32 %v3781
    %v3798 = vcvt.s32.f32 %v3782
    %v3799 = vcvt.s32.f32 %v3783
    %v3800 = vmul.f32 %v3386, %v3784
    %v3801 = vmul.f32 %v3392, %v3785
    %v3802 = vmul.f32 %v3398, %v3786
    %v3803 = vmul.f32 %v3404, %v3787
    %v3804 = vmul.f32 %v3410, %v3788
    %v3805 = vmul.f32 %v3416, %v3789
    %v3806 = vmul.f32 %v3422, %v3790
    %v3807 = vmul.f32 %v3428, %v3791
    %v3808 = vmul.f32 %v3434, %v3792
    %v3809 = vmul.f32 %v3440, %v3793
    %v3810 = vmul.f32 %v3446, %v3794
    %v3811 = vmul.f32 %v3452, %v3795
    %v3812 = vmul.f32 %v3458, %v3796
    %v3813 = vmul.f32 %v3464, %v3797
    %v3814 = vmul.f32 %v3470, %v3798
    %v3815 = vmul.f32 %v3476, %v3799
    %v3816 = vadd.f32 %v3800, %v3801
    %v3817 = vadd.f32 %v3816, %v3802
    %v3818 = vadd.f32 %v3817, %v3803
    %v3819 = vadd.f32 %v3818, %v3804
    %v3820 = vadd.f32 %v3819, %v3805
    %v3821 = vadd.f32 %v3820, %v3806
    %v3822 = vadd.f32 %v3821, %v3807
    %v3823 = vadd.f32 %v3822, %v3808
    %v3824 = vadd.f32 %v3823, %v3809
    %v3825 = vadd.f32 %v3824, %v3810
    %v3826 = vadd.f32 %v3825, %v3811
    %v3827 = vadd.f32 %v3826, %v3812
    %v3828 = vadd.f32 %v3827, %v3813
    %v3829 = vadd.f32 %v3828, %v3814
    %v3830 = vadd.f32 %v3829, %v3815
    %v3831 = vrot.slane %v3830, 4
    %v3832 = vadd.f32 %v3830, %v3831
    %v3833 = vrot.slane %v3832, 2
    %v3834 = vadd.f32 %v3832, %v3833
    %v3835 = vrot.slane %v3834, 1
    %v3836 = vadd.f32 %v3834, %v3835
    %v3837 = vsub.f32 0.0, %v3836
    %v3838 = vlaneseq
    %v3839 = vshrl.u32 %v3838, 7
    %v3840 = vsub.s32 3, %v3839
    %v3841 = vrot.slane %v43, %v3840
    %vm3842 = vcmp.eq.s32.totalorder %v25, %v3841
    %vm3843 = vcmp.eq.s32.totalorder %v26, %v3841
    %vm3844 = vcmp.eq.s32.totalorder %v27, %v3841
    %vm3845 = vcmp.eq.s32.totalorder %v28, %v3841
    %vm3846 = vcmp.eq.s32.totalorder %v29, %v3841
    %vm3847 = vcmp.eq.s32.totalorder %v30, %v3841
    %vm3848 = vcmp.eq.s32.totalorder %v31, %v3841
    %vm3849 = vcmp.eq.s32.totalorder %v32, %v3841
    %vm3850 = vcmp.eq.s32.totalorder %v33, %v3841
    %vm3851 = vcmp.eq.s32.totalorder %v34, %v3841
    %vm3852 = vcmp.eq.s32.totalorder %v35, %v3841
    %vm3853 = vcmp.eq.s32.totalorder %v36, %v3841
    %vm3854 = vcmp.eq.s32.totalorder %v37, %v3841
    %vm3855 = vcmp.eq.s32.totalorder %v38, %v3841
    %vm3856 = vcmp.eq.s32.totalorder %v39, %v3841
    %vm3857 = vcmp.eq.s32.totalorder %v40, %v3841
    %v3858 = vsel %vm3842, 1, 0
    %v3859 = vsel %vm3843, 1, 0
    %v3860 = vsel %vm3844, 1, 0
    %v3861 = vsel %vm3845, 1, 0
    %v3862 = vsel %vm3846, 1, 0
    %v3863 = vsel %vm3847, 1, 0
    %v3864 = vsel %vm3848, 1, 0
    %v3865 = vsel %vm3849, 1, 0
    %v3866 = vsel %vm3850, 1, 0
    %v3867 = vsel %vm3851, 1, 0
    %v3868 = vsel %vm3852, 1, 0
    %v3869 = vsel %vm3853, 1, 0
    %v3870 = vsel %vm3854, 1, 0
    %v3871 = vsel %vm3855, 1, 0
    %v3872 = vsel %vm3856, 1, 0
    %v3873 = vsel %vm3857, 1, 0
    %v3874 = vcvt.s32.f32 %v3858
    %v3875 = vcvt.s32.f32 %v3859
    %v3876 = vcvt.s32.f32 %v3860
    %v3877 = vcvt.s32.f32 %v3861
    %v3878 = vcvt.s32.f32 %v3862
    %v3879 = vcvt.s32.f32 %v3863
    %v3880 = vcvt.s32.f32 %v3864
    %v3881 = vcvt.s32.f32 %v3865
    %v3882 = vcvt.s32.f32 %v3866
    %v3883 = vcvt.s32.f32 %v3867
    %v3884 = vcvt.s32.f32 %v3868
    %v3885 = vcvt.s32.f32 %v3869
    %v3886 = vcvt.s32.f32 %v3870
    %v3887 = vcvt.s32.f32 %v3871
    %v3888 = vcvt.s32.f32 %v3872
    %v3889 = vcvt.s32.f32 %v3873
    %v3890 = vmul.f32 %v3386, %v3874
    %v3891 = vmul.f32 %v3392, %v3875
    %v3892 = vmul.f32 %v3398, %v3876
    %v3893 = vmul.f32 %v3404, %v3877
    %v3894 = vmul.f32 %v3410, %v3878
    %v3895 = vmul.f32 %v3416, %v3879
    %v3896 = vmul.f32 %v3422, %v3880
    %v3897 = vmul.f32 %v3428, %v3881
    %v3898 = vmul.f32 %v3434, %v3882
    %v3899 = vmul.f32 %v3440, %v3883
    %v3900 = vmul.f32 %v3446, %v3884
    %v3901 = vmul.f32 %v3452, %v3885
    %v3902 = vmul.f32 %v3458, %v3886
    %v3903 = vmul.f32 %v3464, %v3887
    %v3904 = vmul.f32 %v3470, %v3888
    %v3905 = vmul.f32 %v3476, %v3889
    %v3906 = vadd.f32 %v3890, %v3891
    %v3907 = vadd.f32 %v3906, %v3892
    %v3908 = vadd.f32 %v3907, %v3893
    %v3909 = vadd.f32 %v3908, %v3894
    %v3910 = vadd.f32 %v3909, %v3895
    %v3911 = vadd.f32 %v3910, %v3896
    %v3912 = vadd.f32 %v3911, %v3897
    %v3913 = vadd.f32 %v3912, %v3898
    %v3914 = vadd.f32 %v3913, %v3899
    %v3915 = vadd.f32 %v3914, %v3900
    %v3916 = vadd.f32 %v3915, %v3901
    %v3917 = vadd.f32 %v3916, %v3902
    %v3918 = vadd.f32 %v3917, %v3903
    %v3919 = vadd.f32 %v3918, %v3904
    %v3920 = vadd.f32 %v3919, %v3905
    %v3921 = vrot.slane %v3920, 4
    %v3922 = vadd.f32 %v3920, %v3921
    %v3923 = vrot.slane %v3922, 2
    %v3924 = vadd.f32 %v3922, %v3923
    %v3925 = vrot.slane %v3924, 1
    %v3926 = vadd.f32 %v3924, %v3925
    %v3927 = vsub.f32 0.0, %v3926
    %v3928 = vlaneseq
    %v3929 = vshrl.u32 %v3928, 7
    %v3930 = vsub.s32 4, %v3929
    %v3931 = vrot.slane %v43, %v3930
    %vm3932 = vcmp.eq.s32.totalorder %v25, %v3931
    %vm3933 = vcmp.eq.s32.totalorder %v26, %v3931
    %vm3934 = vcmp.eq.s32.totalorder %v27, %v3931
    %vm3935 = vcmp.eq.s32.totalorder %v28, %v3931
    %vm3936 = vcmp.eq.s32.totalorder %v29, %v3931
    %vm3937 = vcmp.eq.s32.totalorder %v30, %v3931
    %vm3938 = vcmp.eq.s32.totalorder %v31, %v3931
    %vm3939 = vcmp.eq.s32.totalorder %v32, %v3931
    %vm3940 = vcmp.eq.s32.totalorder %v33, %v3931
    %vm3941 = vcmp.eq.s32.totalorder %v34, %v3931
    %vm3942 = vcmp.eq.s32.totalorder %v35, %v3931
    %vm3943 = vcmp.eq.s32.totalorder %v36, %v3931
    %vm3944 = vcmp.eq.s32.totalorder %v37, %v3931
    %vm3945 = vcmp.eq.s32.totalorder %v38, %v3931
    %vm3946 = vcmp.eq.s32.totalorder %v39, %v3931
    %vm3947 = vcmp.eq.s32.totalorder %v40, %v3931
    %v3948 = vsel %vm3932, 1, 0
    %v3949 = vsel %vm3933, 1, 0
    %v3950 = vsel %vm3934, 1, 0
    %v3951 = vsel %vm3935, 1, 0
    %v3952 = vsel %vm3936, 1, 0
    %v3953 = vsel %vm3937, 1, 0
    %v3954 = vsel %vm3938, 1, 0
    %v3955 = vsel %vm3939, 1, 0
    %v3956 = vsel %vm3940, 1, 0
    %v3957 = vsel %vm3941, 1, 0
    %v3958 = vsel %vm3942, 1, 0
    %v3959 = vsel %vm3943, 1, 0
    %v3960 = vsel %vm3944, 1, 0
    %v3961 = vsel %vm3945, 1, 0
    %v3962 = vsel %vm3946, 1, 0
    %v3963 = vsel %vm3947, 1, 0
    %v3964 = vcvt.s32.f32 %v3948
    %v3965 = vcvt.s32.f32 %v3949
    %v3966 = vcvt.s32.f32 %v3950
    %v3967 = vcvt.s32.f32 %v3951
    %v3968 = vcvt.s32.f32 %v3952
    %v3969 = vcvt.s32.f32 %v3953
    %v3970 = vcvt.s32.f32 %v3954
    %v3971 = vcvt.s32.f32 %v3955
    %v3972 = vcvt.s32.f32 %v3956
    %v3973 = vcvt.s32.f32 %v3957
    %v3974 = vcvt.s32.f32 %v3958
    %v3975 = vcvt.s32.f32 %v3959
    %v3976 = vcvt.s32.f32 %v3960
    %v3977 = vcvt.s32.f32 %v3961
    %v3978 = vcvt.s32.f32 %v3962
    %v3979 = vcvt.s32.f32 %v3963
    %v3980 = vmul.f32 %v3386, %v3964
    %v3981 = vmul.f32 %v3392, %v3965
    %v3982 = vmul.f32 %v3398, %v3966
    %v3983 = vmul.f32 %v3404, %v3967
    %v3984 = vmul.f32 %v3410, %v3968
    %v3985 = vmul.f32 %v3416, %v3969
    %v3986 = vmul.f32 %v3422, %v3970
    %v3987 = vmul.f32 %v3428, %v3971
    %v3988 = vmul.f32 %v3434, %v3972
    %v3989 = vmul.f32 %v3440, %v3973
    %v3990 = vmul.f32 %v3446, %v3974
    %v3991 = vmul.f32 %v3452, %v3975
    %v3992 = vmul.f32 %v3458, %v3976
    %v3993 = vmul.f32 %v3464, %v3977
    %v3994 = vmul.f32 %v3470, %v3978
    %v3995 = vmul.f32 %v3476, %v3979
    %v3996 = vadd.f32 %v3980, %v3981
    %v3997 = vadd.f32 %v3996, %v3982
    %v3998 = vadd.f32 %v3997, %v3983
    %v3999 = vadd.f32 %v3998, %v3984
    %v4000 = vadd.f32 %v3999, %v3985
    %v4001 = vadd.f32 %v4000, %v3986
    %v4002 = vadd.f32 %v4001, %v3987
    %v4003 = vadd.f32 %v4002, %v3988
    %v4004 = vadd.f32 %v4003, %v3989
    %v4005 = vadd.f32 %v4004, %v3990
    %v4006 = vadd.f32 %v4005, %v3991
    %v4007 = vadd.f32 %v4006, %v3992
    %v4008 = vadd.f32 %v4007, %v3993
    %v4009 = vadd.f32 %v4008, %v3994
    %v4010 = vadd.f32 %v4009, %v3995
    %v4011 = vrot.slane %v4010, 4
    %v4012 = vadd.f32 %v4010, %v4011
    %v4013 = vrot.slane %v4012, 2
    %v4014 = vadd.f32 %v4012, %v4013
    %v4015 = vrot.slane %v4014, 1
    %v4016 = vadd.f32 %v4014, %v4015
    %v4017 = vsub.f32 0.0, %v4016
    %vm4018 = vcmask 1040384
    %v4019 = vsel %vm4018, %v3567, %v3657
    %vm4020 = vcmask 1041408
    %v4021 = vsel %vm4020, %v4019, %v3747
    %vm4022 = vcmask 1042432
    %v4023 = vsel %vm4022, %v4021, %v3837
    %vm4024 = vcmask 1043456
    %v4025 = vsel %vm4024, %v4023, %v3927
    %vm4026 = vcmask 1044480
    %v4027 = vsel %vm4026, %v4025, %v4017
    %v4028 = vmin.f32 %v4027, 0.0
    %v4029 = vand.u32 2147483647, %v4027
    %v4030 = vsub.f32 0.0, %v4029
    %v4031 = vmul.f32 %v4030, 1.442695
    %v4032 = vpow.pop %v4031
    %v4033 = vadd.f32 %v4032, 1.0
    %v4034 = vlog2.pop %v4033
    %v4035 = vmul.f32 %v4034, 0.6931472
    %v4036 = vmul.f32 -0.5, %v4032
    %v4037 = vadd.f32 %v4036, 1.0
    %v4038 = vmul.f32 %v4037, %v4032
    %v4039 = vand.u32 2147483647, %v4032
    %vm4040 = vcmp.lt.f32.partialorder %v4039, 0.0004427343
    %v4041 = vsel %vm4040, %v4038, %v4035
    %v4042 = vsub.f32 %v4028, %v4041
    %vm4043 = vcmask 1045504
    %v4044 = vsel %vm4043, %v4042, 0.0
    %v4045 = vrot.slane %v4044, 4
    %v4046 = vadd.f32 %v4044, %v4045
    %v4047 = vrot.slane %v4046, 2
    %v4048 = vadd.f32 %v4046, %v4047
    %v4049 = vrot.slane %v4048, 1
    %v4050 = vadd.f32 %v4048, %v4049
    %v4051 = vsub.f32 0.0, %v4050
    %4052 = vst [vmem:[#allocation2] sm:$0x1] %v4051
    // Predicated region
    $region26: #{tpu_custom_call.1} parent=1 // pred_check
      _
    $region27: #{tpu_custom_call.1} parent=1 // pred_check_branch
      %4054 = sbr.rel (0) target = $region29
    $region28: #{tpu_custom_call.1} parent=1 // pred_region
      %s4056 = ssub.s32 16, 16
      %4057 = vsyncadd [#allocation3], %s4056
      %s4059 = sshll.u32 [#allocation2], 4
      %s4060 = int_to_ptr.vmem [resolvable:$true] %s4059
      %4062 = dma.vmem_to_hbm [thread:$0]  %s4060, 16, %s6, [#allocation3]
    $region29: #{tpu_custom_call.1} parent=1 // pred_fallthru
      _
    // Predicated region
    $region30: #{tpu_custom_call.1} parent=1 // pred_check
      _
    $region31: #{tpu_custom_call.1} parent=1 // pred_check_branch
      %4064 = sbr.rel (0) target = $region33
    $region32: #{tpu_custom_call.1} parent=1 // pred_region
      %4065 = dma.done [#allocation3], 16
    $region33: #{tpu_custom_call.1} parent=1 // pred_fallthru
      _
    %4066 = vsyncpa [#allocation3], 1

</llo_original>
